<compile_context>
chip_gen: v7x
topology: tpu7x:2x2x1
jax: 0.10.0
libtpu: 0.0.40
codegen_flags: <defaults>
</compile_context>

<pallas_src>
import math

import jax
import jax.numpy as jnp
import numpy as np
from jax.experimental import pallas as pl

HIDDEN = 32
HEADS = 4
PER_HEAD = HIDDEN // HEADS
SEQ = 8
BATCH = 2


def _mha_kernel(x_ref, mask_ref, w_qkv_ref, b_qkv_ref, wo_ref, bo_ref, out_ref):
    """Single-invocation MHA forward.

    x_ref:     (3*heads*batch, S, H)  query/key/value stacked & replicated per head
    mask_ref:  (heads*batch, S, S)    additive mask
    w_qkv_ref: (3*heads*batch, H, d)  per-(tensor, head) projection weights
                                      (1/sqrt(d) score scale folded into the Q block)
    b_qkv_ref: (3*heads*batch, 1, d)
    wo_ref:    (heads*batch, d, H)    per-head output-projection slabs (unshape folded in)
    bo_ref:    (1, 1, H)
    out_ref:   (batch, S, H)
    """
    batch = out_ref.shape[0]
    nhb = mask_ref.shape[0]            # heads * batch
    heads = nhb // batch

    # Fused Q/K/V projections: one batched MXU sequence over (tensor, head, batch).
    proj = jnp.einsum("nsi,nid->nsd", x_ref[...], w_qkv_ref[...],
                      preferred_element_type=jnp.float32) + b_qkv_ref[...]
    q = proj[0 * nhb:1 * nhb]          # (heads*batch, S, d); scale already folded in
    k = proj[1 * nhb:2 * nhb]
    v = proj[2 * nhb:3 * nhb]

    # Scores + additive mask, batched over (head, batch); contracting on d avoids
    # any explicit transpose.
    scores = jnp.einsum("nqd,nkd->nqk", q, k, preferred_element_type=jnp.float32)
    scores = scores + mask_ref[...]

    # Numerically stable softmax; denominator reciprocal on the EUP.
    scores = scores - jnp.max(scores, axis=-1, keepdims=True)
    probs = jnp.exp(scores)
    probs = probs * pl.reciprocal(jnp.sum(probs, axis=-1, keepdims=True), approx=True)
    # TODO(synk): training-mode dropout on the attention probs is not implemented
    #             (eval / p-effective-0 semantics only).

    ctx = jnp.einsum("nqk,nkd->nqd", probs, v, preferred_element_type=jnp.float32)

    # Output projection with the head-unshape folded into per-head weight slabs,
    # then reduce over heads (static loop of `heads` adds of (batch, S, H) slabs).
    ctx_proj = jnp.einsum("nsd,ndj->nsj", ctx, wo_ref[...],
                          preferred_element_type=jnp.float32)   # (heads*batch, S, H)
    acc = ctx_proj[0:batch]
    for h in range(1, heads):
        acc = acc + ctx_proj[h * batch:(h + 1) * batch]
    out_ref[...] = (acc + bo_ref[...]).astype(out_ref.dtype)


def prepare_params(params, batch):
    """One-time weight prep (hoisted out of the per-call path).

    PyTorch nn.Linear weights are [out, in]; pre-transpose, split per head, fold
    the 1/sqrt(d) score scale into the Q projection, and replicate across
    (head, batch) so the kernel only needs leading-dim batched einsums — no
    in-kernel transposes or lane-dim reshapes. The replication costs a few KB of
    redundant (fully resident) VMEM at these toy sizes.
    """
    hdn, d = HIDDEN, PER_HEAD
    scale = 1.0 / math.sqrt(float(d))

    def split_heads(w, b, s):
        w_h = (w.T * s).reshape(hdn, HEADS, d).transpose(1, 0, 2)   # (HEADS, H, d)
        b_h = (b * s).reshape(HEADS, d)                             # (HEADS, d)
        return w_h, b_h

    wq_h, bq_h = split_heads(params["wq"], params["bq"], scale)     # scale folded into Q
    wk_h, bk_h = split_heads(params["wk"], params["bk"], 1.0)
    wv_h, bv_h = split_heads(params["wv"], params["bv"], 1.0)

    w_heads = jnp.stack([wq_h, wk_h, wv_h])          # (3, HEADS, H, d)
    b_heads = jnp.stack([bq_h, bk_h, bv_h])          # (3, HEADS, d)

    w_qkv = jnp.broadcast_to(w_heads[:, :, None],
                             (3, HEADS, batch, hdn, d)).reshape(3 * HEADS * batch, hdn, d)
    b_qkv = jnp.broadcast_to(b_heads[:, :, None],
                             (3, HEADS, batch, d)).reshape(3 * HEADS * batch, 1, d)

    wo_h = params["wo"].T.reshape(HEADS, d, hdn)     # (HEADS, d, H): unshape folded in
    wo = jnp.broadcast_to(wo_h[:, None],
                          (HEADS, batch, d, hdn)).reshape(HEADS * batch, d, hdn)
    bo = params["bo"].reshape(1, 1, hdn)
    return {"w_qkv": w_qkv, "b_qkv": b_qkv, "wo": wo, "bo": bo}


@jax.jit
def multi_headed_attention(key, value, query, mask, prep):
    """key/value/query: [B, S, H]; mask: [B, 1, S, S] (additive); prep: prepare_params()."""
    b, s, hdn = key.shape

    # Glue (fused by jit): stack q/k/v, replicate per head, flatten the mask to
    # (heads*batch, S, S) matching the kernel's (head-major, batch-minor) ordering.
    x = jnp.stack([query, key, value])                                   # (3, B, S, H)
    x_rep = jnp.broadcast_to(x[:, None],
                             (3, HEADS, b, s, hdn)).reshape(3 * HEADS * b, s, hdn)
    mask_rep = jnp.broadcast_to(mask.reshape(1, b, s, s),
                                (HEADS, b, s, s)).reshape(HEADS * b, s, s)

    # Single invocation (no grid): the whole problem fits comfortably in VMEM, so
    # every operand is one resident block and there is no per-step pipeline overhead.
    return pl.pallas_call(
        _mha_kernel,
        out_shape=jax.ShapeDtypeStruct((b, s, hdn), query.dtype),
    )(x_rep, mask_rep, prep["w_qkv"], prep["b_qkv"], prep["wo"], prep["bo"])


def _reference(key, value, query, mask, params):
    """Pure-JAX reference mirroring the PyTorch forward (dropout = identity)."""
    B, S, H = key.shape

    def linear(x, w, b):
        return x @ w.T + b

    q = linear(query, params["wq"], params["bq"]).reshape(B, S, HEADS, PER_HEAD).transpose(0, 2, 1, 3)
    k = linear(key, params["wk"], params["bk"]).reshape(B, S, HEADS, PER_HEAD).transpose(0, 2, 1, 3)
    v = linear(value, params["wv"], params["bv"]).reshape(B, S, HEADS, PER_HEAD).transpose(0, 2, 1, 3)

    scores = jnp.einsum("bhqd,bhkd->bhqk", q, k) / math.sqrt(float(PER_HEAD))
    scores = scores + mask
    probs = jax.nn.softmax(scores, axis=-1)
    out = jnp.einsum("bhqk,bhkd->bhqd", probs, v)
    out = out.transpose(0, 2, 1, 3).reshape(B, S, H)
    return linear(out, params["wo"], params["bo"])


if __name__ == "__main__":
    rng = jax.random.PRNGKey(0)
    keys = jax.random.split(rng, 12)

    def winit(k, shape, fan_in):
        bound = 1.0 / math.sqrt(fan_in)
        return jax.random.uniform(k, shape, jnp.float32, -bound, bound)

    params = {
        "wq": winit(keys[0], (HIDDEN, HIDDEN), HIDDEN),
        "bq": winit(keys[1], (HIDDEN,), HIDDEN),
        "wk": winit(keys[2], (HIDDEN, HIDDEN), HIDDEN),
        "bk": winit(keys[3], (HIDDEN,), HIDDEN),
        "wv": winit(keys[4], (HIDDEN, HIDDEN), HIDDEN),
        "bv": winit(keys[5], (HIDDEN,), HIDDEN),
        "wo": winit(keys[6], (HIDDEN, HIDDEN), HIDDEN),
        "bo": winit(keys[7], (HIDDEN,), HIDDEN),
    }

    key_in = jax.random.normal(keys[8], (BATCH, SEQ, HIDDEN), jnp.float32)
    value_in = jax.random.normal(keys[9], (BATCH, SEQ, HIDDEN), jnp.float32)
    query_in = jax.random.normal(keys[10], (BATCH, SEQ, HIDDEN), jnp.float32)
    # additive attention mask: 0 for visible, -10000 for masked positions
    mask_bits = jax.random.bernoulli(keys[11], 0.9, (BATCH, 1, SEQ, SEQ))
    mask = jnp.where(mask_bits, 0.0, -10000.0).astype(jnp.float32)

    prep = prepare_params(params, BATCH)   # hoisted one-time weight prep

    out = multi_headed_attention(key_in, value_in, query_in, mask, prep)
    out = jax.block_until_ready(out)

    ref = _reference(key_in, value_in, query_in, mask, params)
    # Tolerance covers the EUP approximate reciprocal used for the softmax denominator.
    np.testing.assert_allclose(np.asarray(out), np.asarray(ref), rtol=2e-3, atol=2e-3)

    print("KERNEL_OK")
</pallas_src>

<mosaic_0001>
module attributes {stable_mosaic.version = 11 : i64} {
  func.func @_mha_kernel(%arg0: memref<24x8x32xf32, #tpu.memory_space<vmem>>, %arg1: memref<8x8x8xf32, #tpu.memory_space<vmem>>, %arg2: memref<24x32x8xf32, #tpu.memory_space<vmem>>, %arg3: memref<24x1x8xf32, #tpu.memory_space<vmem>>, %arg4: memref<8x8x32xf32, #tpu.memory_space<vmem>>, %arg5: memref<1x1x32xf32, #tpu.memory_space<vmem>>, %arg6: memref<2x8x32xf32, #tpu.memory_space<vmem>>) attributes {dimension_semantics = [], scalar_prefetch = 0 : i64, scratch_operands = 0 : i64, tpu.core_type = #tpu.core_type<tc>} {
    %c0 = arith.constant 0 : index
    %c0_0 = arith.constant 0 : index
    %c0_1 = arith.constant 0 : index
    %0 = vector.load %arg0[%c0, %c0_0, %c0_1] : memref<24x8x32xf32, #tpu.memory_space<vmem>>, vector<24x8x32xf32>
    %c0_2 = arith.constant 0 : index
    %c0_3 = arith.constant 0 : index
    %c0_4 = arith.constant 0 : index
    %1 = vector.load %arg2[%c0_2, %c0_3, %c0_4] : memref<24x32x8xf32, #tpu.memory_space<vmem>>, vector<24x32x8xf32>
    "tpu.trace_start"() <{level = 10 : i32, message = "nsi,nid->nsd"}> : () -> ()
    %cst = arith.constant dense<0.000000e+00> : vector<24x8x8xf32>
    %2 = tpu.matmul %0, %1, %cst {dimension_numbers = #tpu.dot_dimension_numbers<[2], [1], [1], [2], [0, 0, 0, 1, 1, 2], [0], [0]>} : vector<24x8x32xf32>, vector<24x32x8xf32>, vector<24x8x8xf32> -> vector<24x8x8xf32>
    "tpu.trace_stop"() : () -> ()
    %c0_5 = arith.constant 0 : index
    %c0_6 = arith.constant 0 : index
    %c0_7 = arith.constant 0 : index
    %3 = vector.load %arg3[%c0_5, %c0_6, %c0_7] : memref<24x1x8xf32, #tpu.memory_space<vmem>>, vector<24x1x8xf32>
    %4 = vector.broadcast %3 : vector<24x1x8xf32> to vector<24x8x8xf32>
    %5 = arith.addf %2, %4 : vector<24x8x8xf32>
    %6 = vector.extract_strided_slice %5 {offsets = [0, 0, 0], sizes = [8, 8, 8], strides = [1, 1, 1]} : vector<24x8x8xf32> to vector<8x8x8xf32>
    %7 = vector.extract_strided_slice %5 {offsets = [8, 0, 0], sizes = [8, 8, 8], strides = [1, 1, 1]} : vector<24x8x8xf32> to vector<8x8x8xf32>
    %8 = vector.extract_strided_slice %5 {offsets = [16, 0, 0], sizes = [8, 8, 8], strides = [1, 1, 1]} : vector<24x8x8xf32> to vector<8x8x8xf32>
    "tpu.trace_start"() <{level = 10 : i32, message = "nqd,nkd->nqk"}> : () -> ()
    %cst_8 = arith.constant dense<0.000000e+00> : vector<8x8x8xf32>
    %9 = tpu.matmul %6, %7, %cst_8 {dimension_numbers = #tpu.dot_dimension_numbers<[2], [2], [1], [1], [0, 0, 0, 1, 1, 1], [0], [0]>} : vector<8x8x8xf32>, vector<8x8x8xf32>, vector<8x8x8xf32> -> vector<8x8x8xf32>
    "tpu.trace_stop"() : () -> ()
    %c0_9 = arith.constant 0 : index
    %c0_10 = arith.constant 0 : index
    %c0_11 = arith.constant 0 : index
    %10 = vector.load %arg1[%c0_9, %c0_10, %c0_11] : memref<8x8x8xf32, #tpu.memory_space<vmem>>, vector<8x8x8xf32>
    %11 = arith.addf %9, %10 : vector<8x8x8xf32>
    %cst_12 = arith.constant dense<0xFF800000> : vector<8x8xf32>
    %12 = vector.multi_reduction <maximumf>, %11, %cst_12 [2] : vector<8x8x8xf32> to vector<8x8xf32>
    %13 = vector.shape_cast %12 : vector<8x8xf32> to vector<8x8x1xf32>
    %14 = vector.broadcast %13 : vector<8x8x1xf32> to vector<8x8x8xf32>
    %15 = arith.subf %11, %14 : vector<8x8x8xf32>
    %16 = math.exp %15 : vector<8x8x8xf32>
    %cst_13 = arith.constant dense<0.000000e+00> : vector<8x8xf32>
    %17 = vector.multi_reduction <add>, %16, %cst_13 [2] : vector<8x8x8xf32> to vector<8x8xf32>
    %18 = vector.shape_cast %17 : vector<8x8xf32> to vector<8x8x1xf32>
    %19 = tpu.reciprocal %18 {approx = true} : vector<8x8x1xf32> -> vector<8x8x1xf32>
    %20 = vector.broadcast %19 : vector<8x8x1xf32> to vector<8x8x8xf32>
    %21 = arith.mulf %16, %20 : vector<8x8x8xf32>
    "tpu.trace_start"() <{level = 10 : i32, message = "nqk,nkd->nqd"}> : () -> ()
    %cst_14 = arith.constant dense<0.000000e+00> : vector<8x8x8xf32>
    %22 = tpu.matmul %21, %8, %cst_14 {dimension_numbers = #tpu.dot_dimension_numbers<[2], [1], [1], [2], [0, 0, 0, 1, 1, 2], [0], [0]>} : vector<8x8x8xf32>, vector<8x8x8xf32>, vector<8x8x8xf32> -> vector<8x8x8xf32>
    "tpu.trace_stop"() : () -> ()
    %c0_15 = arith.constant 0 : index
    %c0_16 = arith.constant 0 : index
    %c0_17 = arith.constant 0 : index
    %23 = vector.load %arg4[%c0_15, %c0_16, %c0_17] : memref<8x8x32xf32, #tpu.memory_space<vmem>>, vector<8x8x32xf32>
    "tpu.trace_start"() <{level = 10 : i32, message = "nsd,ndj->nsj"}> : () -> ()
    %cst_18 = arith.constant dense<0.000000e+00> : vector<8x8x32xf32>
    %24 = tpu.matmul %22, %23, %cst_18 {dimension_numbers = #tpu.dot_dimension_numbers<[2], [1], [1], [2], [0, 0, 0, 1, 1, 2], [0], [0]>} : vector<8x8x8xf32>, vector<8x8x32xf32>, vector<8x8x32xf32> -> vector<8x8x32xf32>
    "tpu.trace_stop"() : () -> ()
    %25 = vector.extract_strided_slice %24 {offsets = [0, 0, 0], sizes = [2, 8, 32], strides = [1, 1, 1]} : vector<8x8x32xf32> to vector<2x8x32xf32>
    %26 = vector.extract_strided_slice %24 {offsets = [2, 0, 0], sizes = [2, 8, 32], strides = [1, 1, 1]} : vector<8x8x32xf32> to vector<2x8x32xf32>
    %27 = arith.addf %25, %26 : vector<2x8x32xf32>
    %28 = vector.extract_strided_slice %24 {offsets = [4, 0, 0], sizes = [2, 8, 32], strides = [1, 1, 1]} : vector<8x8x32xf32> to vector<2x8x32xf32>
    %29 = arith.addf %27, %28 : vector<2x8x32xf32>
    %30 = vector.extract_strided_slice %24 {offsets = [6, 0, 0], sizes = [2, 8, 32], strides = [1, 1, 1]} : vector<8x8x32xf32> to vector<2x8x32xf32>
    %31 = arith.addf %29, %30 : vector<2x8x32xf32>
    %c0_19 = arith.constant 0 : index
    %c0_20 = arith.constant 0 : index
    %c0_21 = arith.constant 0 : index
    %32 = vector.load %arg5[%c0_19, %c0_20, %c0_21] : memref<1x1x32xf32, #tpu.memory_space<vmem>>, vector<1x1x32xf32>
    %33 = vector.broadcast %32 : vector<1x1x32xf32> to vector<2x8x32xf32>
    %34 = arith.addf %31, %33 : vector<2x8x32xf32>
    %c0_22 = arith.constant 0 : index
    %c0_23 = arith.constant 0 : index
    %c0_24 = arith.constant 0 : index
    %35 = vector.load %arg6[%c0_22, %c0_23, %c0_24] : memref<2x8x32xf32, #tpu.memory_space<vmem>>, vector<2x8x32xf32>
    tpu.vector_store %arg6[%c0_22, %c0_23, %c0_24], %34 {strides = array<i32>} : memref<2x8x32xf32, #tpu.memory_space<vmem>>, vector<2x8x32xf32>,
    return
  }
}

</mosaic_0001>

<llo_original>
// kernel: multi_headed_attention.1
$region0: #{multi_headed_attention.1}
  #allocation0 [shape = 'u32[]', space=smem, size = 0x4, offset = 0x4, fixed_abs, tag = 'smem constant byte address 0x4 - core index']
  #allocation1 [shape = 'u32[144,128]{1,0:T(1,128)}', space=vmem, size = 0x12000, scoped, tag = 'internal scratch']
  %s0 = inlined_call_operand.vmem [shape: f32[24,8,32], index: 0, kind: input, shape index: {}]
  %s1 = inlined_call_operand.vmem [shape: f32[8,8,8], index: 1, kind: input, shape index: {}]
  %s2 = inlined_call_operand.vmem [shape: f32[24,32,8], index: 2, kind: input, shape index: {}]
  %s3 = inlined_call_operand.vmem [shape: f32[24,1,8], index: 3, kind: input, shape index: {}]
  %s4 = inlined_call_operand.vmem [shape: f32[8,8,32], index: 4, kind: input, shape index: {}]
  %s5 = inlined_call_operand.vmem [shape: f32[1,1,32], index: 5, kind: input, shape index: {}]
  %s6 = inlined_call_operand.hbm [shape: f32[2,8,32], index: 6, kind: output, shape index: {}]
  %s7 = sld [smem:[#allocation0]]
  $region34: #{multi_headed_attention.1} parent=0
    _
  %s9 = ssub.s32 1, %s7
  %s10 = scalar_select 0, %s9, %s7
  $region1: #{multi_headed_attention.1} parent=0
    #allocation2 [shape = 'u8[8192]{0}', space=vmem, size = 0x2000, scoped, tag = 'output window, operand 0, single buffered']
    #allocation3 [shape = 's32[1]{0}', space=sflag, size = 0x4, scoped, tag = 'scoped memory for multi_headed_attention.1']
    %11 = vsyncpa [#allocation3], 0
    // Predicated region
    $region2: #{multi_headed_attention.1} parent=1 // pred_check
      _
    $region3: #{multi_headed_attention.1} parent=1 // pred_check_branch
      %13 = sbr.rel (0) target = $region5
    $region4: #{multi_headed_attention.1} parent=1 // pred_region
      _
    $region5: #{multi_headed_attention.1} parent=1 // pred_fallthru
      _
    // Predicated region
    $region6: #{multi_headed_attention.1} parent=1 // pred_check
      _
    $region7: #{multi_headed_attention.1} parent=1 // pred_check_branch
      %15 = sbr.rel (0) target = $region9
    $region8: #{multi_headed_attention.1} parent=1 // pred_region
      _
    $region9: #{multi_headed_attention.1} parent=1 // pred_fallthru
      _
    // Predicated region
    $region10: #{multi_headed_attention.1} parent=1 // pred_check
      _
    $region11: #{multi_headed_attention.1} parent=1 // pred_check_branch
      %17 = sbr.rel (0) target = $region13
    $region12: #{multi_headed_attention.1} parent=1 // pred_region
      _
    $region13: #{multi_headed_attention.1} parent=1 // pred_fallthru
      _
    // Predicated region
    $region14: #{multi_headed_attention.1} parent=1 // pred_check
      _
    $region15: #{multi_headed_attention.1} parent=1 // pred_check_branch
      %19 = sbr.rel (0) target = $region17
    $region16: #{multi_headed_attention.1} parent=1 // pred_region
      _
    $region17: #{multi_headed_attention.1} parent=1 // pred_fallthru
      _
    // Predicated region
    $region18: #{multi_headed_attention.1} parent=1 // pred_check
      _
    $region19: #{multi_headed_attention.1} parent=1 // pred_check_branch
      %21 = sbr.rel (0) target = $region21
    $region20: #{multi_headed_attention.1} parent=1 // pred_region
      _
    $region21: #{multi_headed_attention.1} parent=1 // pred_fallthru
      _
    // Predicated region
    $region22: #{multi_headed_attention.1} parent=1 // pred_check
      _
    $region23: #{multi_headed_attention.1} parent=1 // pred_check_branch
      %23 = sbr.rel (0) target = $region25
    $region24: #{multi_headed_attention.1} parent=1 // pred_region
      _
    $region25: #{multi_headed_attention.1} parent=1 // pred_fallthru
      _
    %v24 = vld [vmem:[%s0] sm:$0xff]
    %v25 = vld [vmem:[%s0 + $0x8] sm:$0xff]
    %v26 = vld [vmem:[%s0 + $0x10] sm:$0xff]
    %v27 = vld [vmem:[%s0 + $0x18] sm:$0xff]
    %v28 = vld [vmem:[%s0 + $0x20] sm:$0xff]
    %v29 = vld [vmem:[%s0 + $0x28] sm:$0xff]
    %v30 = vld [vmem:[%s0 + $0x30] sm:$0xff]
    %v31 = vld [vmem:[%s0 + $0x38] sm:$0xff]
    %v32 = vld [vmem:[%s0 + $0x40] sm:$0xff]
    %v33 = vld [vmem:[%s0 + $0x48] sm:$0xff]
    %v34 = vld [vmem:[%s0 + $0x50] sm:$0xff]
    %v35 = vld [vmem:[%s0 + $0x58] sm:$0xff]
    %v36 = vld [vmem:[%s0 + $0x60] sm:$0xff]
    %v37 = vld [vmem:[%s0 + $0x68] sm:$0xff]
    %v38 = vld [vmem:[%s0 + $0x70] sm:$0xff]
    %v39 = vld [vmem:[%s0 + $0x78] sm:$0xff]
    %v40 = vld [vmem:[%s0 + $0x80] sm:$0xff]
    %v41 = vld [vmem:[%s0 + $0x88] sm:$0xff]
    %v42 = vld [vmem:[%s0 + $0x90] sm:$0xff]
    %v43 = vld [vmem:[%s0 + $0x98] sm:$0xff]
    %v44 = vld [vmem:[%s0 + $0xa0] sm:$0xff]
    %v45 = vld [vmem:[%s0 + $0xa8] sm:$0xff]
    %v46 = vld [vmem:[%s0 + $0xb0] sm:$0xff]
    %v47 = vld [vmem:[%s0 + $0xb8] sm:$0xff]
    %v48 = vld [vmem:[%s2] sm:$0xff]
    %v49 = vld [vmem:[%s2 + $0x8] sm:$0xff]
    %v50 = vld [vmem:[%s2 + $0x10] sm:$0xff]
    %v51 = vld [vmem:[%s2 + $0x18] sm:$0xff]
    %v52 = vld [vmem:[%s2 + $0x20] sm:$0xff]
    %v53 = vld [vmem:[%s2 + $0x28] sm:$0xff]
    %v54 = vld [vmem:[%s2 + $0x30] sm:$0xff]
    %v55 = vld [vmem:[%s2 + $0x38] sm:$0xff]
    %v56 = vld [vmem:[%s2 + $0x40] sm:$0xff]
    %v57 = vld [vmem:[%s2 + $0x48] sm:$0xff]
    %v58 = vld [vmem:[%s2 + $0x50] sm:$0xff]
    %v59 = vld [vmem:[%s2 + $0x58] sm:$0xff]
    %v60 = vld [vmem:[%s2 + $0x60] sm:$0xff]
    %v61 = vld [vmem:[%s2 + $0x68] sm:$0xff]
    %v62 = vld [vmem:[%s2 + $0x70] sm:$0xff]
    %v63 = vld [vmem:[%s2 + $0x78] sm:$0xff]
    %v64 = vld [vmem:[%s2 + $0x80] sm:$0xff]
    %v65 = vld [vmem:[%s2 + $0x88] sm:$0xff]
    %v66 = vld [vmem:[%s2 + $0x90] sm:$0xff]
    %v67 = vld [vmem:[%s2 + $0x98] sm:$0xff]
    %v68 = vld [vmem:[%s2 + $0xa0] sm:$0xff]
    %v69 = vld [vmem:[%s2 + $0xa8] sm:$0xff]
    %v70 = vld [vmem:[%s2 + $0xb0] sm:$0xff]
    %v71 = vld [vmem:[%s2 + $0xb8] sm:$0xff]
    %v72 = vld [vmem:[%s2 + $0xc0] sm:$0xff]
    %v73 = vld [vmem:[%s2 + $0xc8] sm:$0xff]
    %v74 = vld [vmem:[%s2 + $0xd0] sm:$0xff]
    %v75 = vld [vmem:[%s2 + $0xd8] sm:$0xff]
    %v76 = vld [vmem:[%s2 + $0xe0] sm:$0xff]
    %v77 = vld [vmem:[%s2 + $0xe8] sm:$0xff]
    %v78 = vld [vmem:[%s2 + $0xf0] sm:$0xff]
    %v79 = vld [vmem:[%s2 + $0xf8] sm:$0xff]
    %v80 = vld [vmem:[%s2 + $0x100] sm:$0xff]
    %v81 = vld [vmem:[%s2 + $0x108] sm:$0xff]
    %v82 = vld [vmem:[%s2 + $0x110] sm:$0xff]
    %v83 = vld [vmem:[%s2 + $0x118] sm:$0xff]
    %v84 = vld [vmem:[%s2 + $0x120] sm:$0xff]
    %v85 = vld [vmem:[%s2 + $0x128] sm:$0xff]
    %v86 = vld [vmem:[%s2 + $0x130] sm:$0xff]
    %v87 = vld [vmem:[%s2 + $0x138] sm:$0xff]
    %v88 = vld [vmem:[%s2 + $0x140] sm:$0xff]
    %v89 = vld [vmem:[%s2 + $0x148] sm:$0xff]
    %v90 = vld [vmem:[%s2 + $0x150] sm:$0xff]
    %v91 = vld [vmem:[%s2 + $0x158] sm:$0xff]
    %v92 = vld [vmem:[%s2 + $0x160] sm:$0xff]
    %v93 = vld [vmem:[%s2 + $0x168] sm:$0xff]
    %v94 = vld [vmem:[%s2 + $0x170] sm:$0xff]
    %v95 = vld [vmem:[%s2 + $0x178] sm:$0xff]
    %v96 = vld [vmem:[%s2 + $0x180] sm:$0xff]
    %v97 = vld [vmem:[%s2 + $0x188] sm:$0xff]
    %v98 = vld [vmem:[%s2 + $0x190] sm:$0xff]
    %v99 = vld [vmem:[%s2 + $0x198] sm:$0xff]
    %v100 = vld [vmem:[%s2 + $0x1a0] sm:$0xff]
    %v101 = vld [vmem:[%s2 + $0x1a8] sm:$0xff]
    %v102 = vld [vmem:[%s2 + $0x1b0] sm:$0xff]
    %v103 = vld [vmem:[%s2 + $0x1b8] sm:$0xff]
    %v104 = vld [vmem:[%s2 + $0x1c0] sm:$0xff]
    %v105 = vld [vmem:[%s2 + $0x1c8] sm:$0xff]
    %v106 = vld [vmem:[%s2 + $0x1d0] sm:$0xff]
    %v107 = vld [vmem:[%s2 + $0x1d8] sm:$0xff]
    %v108 = vld [vmem:[%s2 + $0x1e0] sm:$0xff]
    %v109 = vld [vmem:[%s2 + $0x1e8] sm:$0xff]
    %v110 = vld [vmem:[%s2 + $0x1f0] sm:$0xff]
    %v111 = vld [vmem:[%s2 + $0x1f8] sm:$0xff]
    %v112 = vld [vmem:[%s2 + $0x200] sm:$0xff]
    %v113 = vld [vmem:[%s2 + $0x208] sm:$0xff]
    %v114 = vld [vmem:[%s2 + $0x210] sm:$0xff]
    %v115 = vld [vmem:[%s2 + $0x218] sm:$0xff]
    %v116 = vld [vmem:[%s2 + $0x220] sm:$0xff]
    %v117 = vld [vmem:[%s2 + $0x228] sm:$0xff]
    %v118 = vld [vmem:[%s2 + $0x230] sm:$0xff]
    %v119 = vld [vmem:[%s2 + $0x238] sm:$0xff]
    %v120 = vld [vmem:[%s2 + $0x240] sm:$0xff]
    %v121 = vld [vmem:[%s2 + $0x248] sm:$0xff]
    %v122 = vld [vmem:[%s2 + $0x250] sm:$0xff]
    %v123 = vld [vmem:[%s2 + $0x258] sm:$0xff]
    %v124 = vld [vmem:[%s2 + $0x260] sm:$0xff]
    %v125 = vld [vmem:[%s2 + $0x268] sm:$0xff]
    %v126 = vld [vmem:[%s2 + $0x270] sm:$0xff]
    %v127 = vld [vmem:[%s2 + $0x278] sm:$0xff]
    %v128 = vld [vmem:[%s2 + $0x280] sm:$0xff]
    %v129 = vld [vmem:[%s2 + $0x288] sm:$0xff]
    %v130 = vld [vmem:[%s2 + $0x290] sm:$0xff]
    %v131 = vld [vmem:[%s2 + $0x298] sm:$0xff]
    %v132 = vld [vmem:[%s2 + $0x2a0] sm:$0xff]
    %v133 = vld [vmem:[%s2 + $0x2a8] sm:$0xff]
    %v134 = vld [vmem:[%s2 + $0x2b0] sm:$0xff]
    %v135 = vld [vmem:[%s2 + $0x2b8] sm:$0xff]
    %v136 = vld [vmem:[%s2 + $0x2c0] sm:$0xff]
    %v137 = vld [vmem:[%s2 + $0x2c8] sm:$0xff]
    %v138 = vld [vmem:[%s2 + $0x2d0] sm:$0xff]
    %v139 = vld [vmem:[%s2 + $0x2d8] sm:$0xff]
    %v140 = vld [vmem:[%s2 + $0x2e0] sm:$0xff]
    %v141 = vld [vmem:[%s2 + $0x2e8] sm:$0xff]
    %v142 = vld [vmem:[%s2 + $0x2f0] sm:$0xff]
    %v143 = vld [vmem:[%s2 + $0x2f8] sm:$0xff]
    %v144 = vld [vmem:[%s3] sm:$0x1]
    %v145 = vld [vmem:[%s3 + $0x1] sm:$0x1]
    %v146 = vld [vmem:[%s3 + $0x2] sm:$0x1]
    %v147 = vld [vmem:[%s3 + $0x3] sm:$0x1]
    %v148 = vld [vmem:[%s3 + $0x4] sm:$0x1]
    %v149 = vld [vmem:[%s3 + $0x5] sm:$0x1]
    %v150 = vld [vmem:[%s3 + $0x6] sm:$0x1]
    %v151 = vld [vmem:[%s3 + $0x7] sm:$0x1]
    %v152 = vld [vmem:[%s3 + $0x8] sm:$0x1]
    %v153 = vld [vmem:[%s3 + $0x9] sm:$0x1]
    %v154 = vld [vmem:[%s3 + $0xa] sm:$0x1]
    %v155 = vld [vmem:[%s3 + $0xb] sm:$0x1]
    %v156 = vld [vmem:[%s3 + $0xc] sm:$0x1]
    %v157 = vld [vmem:[%s3 + $0xd] sm:$0x1]
    %v158 = vld [vmem:[%s3 + $0xe] sm:$0x1]
    %v159 = vld [vmem:[%s3 + $0xf] sm:$0x1]
    %v160 = vld [vmem:[%s3 + $0x10] sm:$0x1]
    %v161 = vld [vmem:[%s3 + $0x11] sm:$0x1]
    %v162 = vld [vmem:[%s3 + $0x12] sm:$0x1]
    %v163 = vld [vmem:[%s3 + $0x13] sm:$0x1]
    %v164 = vld [vmem:[%s3 + $0x14] sm:$0x1]
    %v165 = vld [vmem:[%s3 + $0x15] sm:$0x1]
    %v166 = vld [vmem:[%s3 + $0x16] sm:$0x1]
    %v167 = vld [vmem:[%s3 + $0x17] sm:$0x1]
    %v192 = vlaneseq
    %v193 = vshrl.u32 %v192, 7
    %v194 = vsub.s32 0, %v193
    %v195 = vrot.slane %v144, %v194
    %v196 = vlaneseq
    %v197 = vshrl.u32 %v196, 7
    %v198 = vsub.s32 0, %v197
    %v199 = vrot.slane %v145, %v198
    %v200 = vlaneseq
    %v201 = vshrl.u32 %v200, 7
    %v202 = vsub.s32 0, %v201
    %v203 = vrot.slane %v146, %v202
    %v204 = vlaneseq
    %v205 = vshrl.u32 %v204, 7
    %v206 = vsub.s32 0, %v205
    %v207 = vrot.slane %v147, %v206
    %v208 = vlaneseq
    %v209 = vshrl.u32 %v208, 7
    %v210 = vsub.s32 0, %v209
    %v211 = vrot.slane %v148, %v210
    %v212 = vlaneseq
    %v213 = vshrl.u32 %v212, 7
    %v214 = vsub.s32 0, %v213
    %v215 = vrot.slane %v149, %v214
    %v216 = vlaneseq
    %v217 = vshrl.u32 %v216, 7
    %v218 = vsub.s32 0, %v217
    %v219 = vrot.slane %v150, %v218
    %v220 = vlaneseq
    %v221 = vshrl.u32 %v220, 7
    %v222 = vsub.s32 0, %v221
    %v223 = vrot.slane %v151, %v222
    %v224 = vlaneseq
    %v225 = vshrl.u32 %v224, 7
    %v226 = vsub.s32 0, %v225
    %v227 = vrot.slane %v152, %v226
    %v228 = vlaneseq
    %v229 = vshrl.u32 %v228, 7
    %v230 = vsub.s32 0, %v229
    %v231 = vrot.slane %v153, %v230
    %v232 = vlaneseq
    %v233 = vshrl.u32 %v232, 7
    %v234 = vsub.s32 0, %v233
    %v235 = vrot.slane %v154, %v234
    %v236 = vlaneseq
    %v237 = vshrl.u32 %v236, 7
    %v238 = vsub.s32 0, %v237
    %v239 = vrot.slane %v155, %v238
    %v240 = vlaneseq
    %v241 = vshrl.u32 %v240, 7
    %v242 = vsub.s32 0, %v241
    %v243 = vrot.slane %v156, %v242
    %v244 = vlaneseq
    %v245 = vshrl.u32 %v244, 7
    %v246 = vsub.s32 0, %v245
    %v247 = vrot.slane %v157, %v246
    %v248 = vlaneseq
    %v249 = vshrl.u32 %v248, 7
    %v250 = vsub.s32 0, %v249
    %v251 = vrot.slane %v158, %v250
    %v252 = vlaneseq
    %v253 = vshrl.u32 %v252, 7
    %v254 = vsub.s32 0, %v253
    %v255 = vrot.slane %v159, %v254
    %v256 = vlaneseq
    %v257 = vshrl.u32 %v256, 7
    %v258 = vsub.s32 0, %v257
    %v259 = vrot.slane %v160, %v258
    %v260 = vlaneseq
    %v261 = vshrl.u32 %v260, 7
    %v262 = vsub.s32 0, %v261
    %v263 = vrot.slane %v161, %v262
    %v264 = vlaneseq
    %v265 = vshrl.u32 %v264, 7
    %v266 = vsub.s32 0, %v265
    %v267 = vrot.slane %v162, %v266
    %v268 = vlaneseq
    %v269 = vshrl.u32 %v268, 7
    %v270 = vsub.s32 0, %v269
    %v271 = vrot.slane %v163, %v270
    %v272 = vlaneseq
    %v273 = vshrl.u32 %v272, 7
    %v274 = vsub.s32 0, %v273
    %v275 = vrot.slane %v164, %v274
    %v276 = vlaneseq
    %v277 = vshrl.u32 %v276, 7
    %v278 = vsub.s32 0, %v277
    %v279 = vrot.slane %v165, %v278
    %v280 = vlaneseq
    %v281 = vshrl.u32 %v280, 7
    %v282 = vsub.s32 0, %v281
    %v283 = vrot.slane %v166, %v282
    %v284 = vlaneseq
    %v285 = vshrl.u32 %v284, 7
    %v286 = vsub.s32 0, %v285
    %v287 = vrot.slane %v167, %v286
    %vm312 = vcmask 261120
    %v314 = vsel %vm312, %v24, 0
    %316 = vmatprep.subr.mxu0 0.0
    %317 = vmatpush1.msra.mxu0 %v48
    %318 = vmatprep.subr.mxu0 0.0
    %319 = vmatpush1.msra.mxu0 %v49
    %320 = vmatprep.subr.mxu0 0.0
    %321 = vmatpush1.msra.mxu0 %v50
    %322 = vmatprep.subr.mxu0 0.0
    %323 = vmatpush1.msra.mxu0 %v51
    %324 = vmatprep.subr.mxu0 0.0
    %325 = vmatpush1.msra.mxu0 0.0
    %326 = vmatprep.subr.mxu0 0.0
    %327 = vmatpush1.msra.mxu0 0.0
    %328 = vmatprep.subr.mxu0 0.0
    %329 = vmatpush1.msra.mxu0 0.0
    %330 = vmatprep.subr.mxu0 0.0
    %331 = vmatpush1.msra.mxu0 0.0
    %332 = vmatprep.subr.mxu0 0.0
    %333 = vmatpush1.msra.mxu0 0.0
    %334 = vmatprep.subr.mxu0 0.0
    %335 = vmatpush1.msra.mxu0 0.0
    %336 = vmatprep.subr.mxu0 0.0
    %337 = vmatpush1.msra.mxu0 0.0
    %338 = vmatprep.subr.mxu0 0.0
    %339 = vmatpush1.msra.mxu0 0.0
    %340 = vmatprep.subr.mxu0 0.0
    %341 = vmatpush1.msra.mxu0 0.0
    %342 = vmatprep.subr.mxu0 0.0
    %343 = vmatpush1.msra.mxu0 0.0
    %344 = vmatprep.subr.mxu0 0.0
    %345 = vmatpush1.msra.mxu0 0.0
    %346 = vmatprep.subr.mxu0 0.0
    %347 = vmatpush1.msra.mxu0 0.0
    %348 = vmatprep.subr.mxu0 0.0
    %349 = vmatpush1.msra.mxu0 0.0
    %350 = vmatprep.subr.mxu0 0.0
    %351 = vmatpush1.msra.mxu0 0.0
    %352 = vmatprep.subr.mxu0 0.0
    %353 = vmatpush1.msra.mxu0 0.0
    %354 = vmatprep.subr.mxu0 0.0
    %355 = vmatpush1.msra.mxu0 0.0
    %356 = vmatprep.subr.mxu0 0.0
    %357 = vmatpush1.msra.mxu0 0.0
    %358 = vmatprep.subr.mxu0 0.0
    %359 = vmatpush1.msra.mxu0 0.0
    %360 = vmatprep.subr.mxu0 0.0
    %361 = vmatpush1.msra.mxu0 0.0
    %362 = vmatprep.subr.mxu0 0.0
    %363 = vmatpush1.msra.mxu0 0.0
    %364 = vmatprep.subr.mxu0 0.0
    %365 = vmatpush1.msra.mxu0 0.0
    %366 = vmatprep.subr.mxu0 0.0
    %367 = vmatpush1.msra.mxu0 0.0
    %368 = vmatprep.subr.mxu0 0.0
    %369 = vmatpush1.msra.mxu0 0.0
    %370 = vmatprep.subr.mxu0 0.0
    %371 = vmatpush1.msra.mxu0 0.0
    %372 = vmatprep.subr.mxu0 0.0
    %373 = vmatpush1.msra.mxu0 0.0
    %374 = vmatprep.subr.mxu0 0.0
    %375 = vmatpush1.msra.mxu0 0.0
    %376 = vmatprep.subr.mxu0 0.0
    %377 = vmatpush1.msra.mxu0 0.0
    %378 = vmatprep.subr.mxu0 0.0
    %379 = vmatpush1.msra.mxu0 0.0
    %380 = vmatprep.mubr.f32.mxu0 0.0
    %381 = vmatmul.mubr.f32.gmra.mrb[0].mxu0 %v314
    %v382 = vpop.f32.mrb[0].mxu0
    %v383 = vadd.f32 %v195, %v382
    %v384 = vpop.f32.mrb[0].mxu0
    %385 = vdwg.mxu0
    %v387 = vsel %vm312, %v25, 0
    %389 = vmatprep.subr.mxu0 0.0
    %390 = vmatpush1.msra.mxu0 %v52
    %391 = vmatprep.subr.mxu0 0.0
    %392 = vmatpush1.msra.mxu0 %v53
    %393 = vmatprep.subr.mxu0 0.0
    %394 = vmatpush1.msra.mxu0 %v54
    %395 = vmatprep.subr.mxu0 0.0
    %396 = vmatpush1.msra.mxu0 %v55
    %397 = vmatprep.subr.mxu0 0.0
    %398 = vmatpush1.msra.mxu0 0.0
    %399 = vmatprep.subr.mxu0 0.0
    %400 = vmatpush1.msra.mxu0 0.0
    %401 = vmatprep.subr.mxu0 0.0
    %402 = vmatpush1.msra.mxu0 0.0
    %403 = vmatprep.subr.mxu0 0.0
    %404 = vmatpush1.msra.mxu0 0.0
    %405 = vmatprep.subr.mxu0 0.0
    %406 = vmatpush1.msra.mxu0 0.0
    %407 = vmatprep.subr.mxu0 0.0
    %408 = vmatpush1.msra.mxu0 0.0
    %409 = vmatprep.subr.mxu0 0.0
    %410 = vmatpush1.msra.mxu0 0.0
    %411 = vmatprep.subr.mxu0 0.0
    %412 = vmatpush1.msra.mxu0 0.0
    %413 = vmatprep.subr.mxu0 0.0
    %414 = vmatpush1.msra.mxu0 0.0
    %415 = vmatprep.subr.mxu0 0.0
    %416 = vmatpush1.msra.mxu0 0.0
    %417 = vmatprep.subr.mxu0 0.0
    %418 = vmatpush1.msra.mxu0 0.0
    %419 = vmatprep.subr.mxu0 0.0
    %420 = vmatpush1.msra.mxu0 0.0
    %421 = vmatprep.subr.mxu0 0.0
    %422 = vmatpush1.msra.mxu0 0.0
    %423 = vmatprep.subr.mxu0 0.0
    %424 = vmatpush1.msra.mxu0 0.0
    %425 = vmatprep.subr.mxu0 0.0
    %426 = vmatpush1.msra.mxu0 0.0
    %427 = vmatprep.subr.mxu0 0.0
    %428 = vmatpush1.msra.mxu0 0.0
    %429 = vmatprep.subr.mxu0 0.0
    %430 = vmatpush1.msra.mxu0 0.0
    %431 = vmatprep.subr.mxu0 0.0
    %432 = vmatpush1.msra.mxu0 0.0
    %433 = vmatprep.subr.mxu0 0.0
    %434 = vmatpush1.msra.mxu0 0.0
    %435 = vmatprep.subr.mxu0 0.0
    %436 = vmatpush1.msra.mxu0 0.0
    %437 = vmatprep.subr.mxu0 0.0
    %438 = vmatpush1.msra.mxu0 0.0
    %439 = vmatprep.subr.mxu0 0.0
    %440 = vmatpush1.msra.mxu0 0.0
    %441 = vmatprep.subr.mxu0 0.0
    %442 = vmatpush1.msra.mxu0 0.0
    %443 = vmatprep.subr.mxu0 0.0
    %444 = vmatpush1.msra.mxu0 0.0
    %445 = vmatprep.subr.mxu0 0.0
    %446 = vmatpush1.msra.mxu0 0.0
    %447 = vmatprep.subr.mxu0 0.0
    %448 = vmatpush1.msra.mxu0 0.0
    %449 = vmatprep.subr.mxu0 0.0
    %450 = vmatpush1.msra.mxu0 0.0
    %451 = vmatprep.subr.mxu0 0.0
    %452 = vmatpush1.msra.mxu0 0.0
    %453 = vmatprep.mubr.f32.mxu0 0.0
    %454 = vmatmul.mubr.f32.gmra.mrb[0].mxu0 %v387
    %v455 = vpop.f32.mrb[0].mxu0
    %v456 = vadd.f32 %v199, %v455
    %v457 = vpop.f32.mrb[0].mxu0
    %458 = vdwg.mxu0
    %v460 = vsel %vm312, %v26, 0
    %462 = vmatprep.subr.mxu0 0.0
    %463 = vmatpush1.msra.mxu0 %v56
    %464 = vmatprep.subr.mxu0 0.0
    %465 = vmatpush1.msra.mxu0 %v57
    %466 = vmatprep.subr.mxu0 0.0
    %467 = vmatpush1.msra.mxu0 %v58
    %468 = vmatprep.subr.mxu0 0.0
    %469 = vmatpush1.msra.mxu0 %v59
    %470 = vmatprep.subr.mxu0 0.0
    %471 = vmatpush1.msra.mxu0 0.0
    %472 = vmatprep.subr.mxu0 0.0
    %473 = vmatpush1.msra.mxu0 0.0
    %474 = vmatprep.subr.mxu0 0.0
    %475 = vmatpush1.msra.mxu0 0.0
    %476 = vmatprep.subr.mxu0 0.0
    %477 = vmatpush1.msra.mxu0 0.0
    %478 = vmatprep.subr.mxu0 0.0
    %479 = vmatpush1.msra.mxu0 0.0
    %480 = vmatprep.subr.mxu0 0.0
    %481 = vmatpush1.msra.mxu0 0.0
    %482 = vmatprep.subr.mxu0 0.0
    %483 = vmatpush1.msra.mxu0 0.0
    %484 = vmatprep.subr.mxu0 0.0
    %485 = vmatpush1.msra.mxu0 0.0
    %486 = vmatprep.subr.mxu0 0.0
    %487 = vmatpush1.msra.mxu0 0.0
    %488 = vmatprep.subr.mxu0 0.0
    %489 = vmatpush1.msra.mxu0 0.0
    %490 = vmatprep.subr.mxu0 0.0
    %491 = vmatpush1.msra.mxu0 0.0
    %492 = vmatprep.subr.mxu0 0.0
    %493 = vmatpush1.msra.mxu0 0.0
    %494 = vmatprep.subr.mxu0 0.0
    %495 = vmatpush1.msra.mxu0 0.0
    %496 = vmatprep.subr.mxu0 0.0
    %497 = vmatpush1.msra.mxu0 0.0
    %498 = vmatprep.subr.mxu0 0.0
    %499 = vmatpush1.msra.mxu0 0.0
    %500 = vmatprep.subr.mxu0 0.0
    %501 = vmatpush1.msra.mxu0 0.0
    %502 = vmatprep.subr.mxu0 0.0
    %503 = vmatpush1.msra.mxu0 0.0
    %504 = vmatprep.subr.mxu0 0.0
    %505 = vmatpush1.msra.mxu0 0.0
    %506 = vmatprep.subr.mxu0 0.0
    %507 = vmatpush1.msra.mxu0 0.0
    %508 = vmatprep.subr.mxu0 0.0
    %509 = vmatpush1.msra.mxu0 0.0
    %510 = vmatprep.subr.mxu0 0.0
    %511 = vmatpush1.msra.mxu0 0.0
    %512 = vmatprep.subr.mxu0 0.0
    %513 = vmatpush1.msra.mxu0 0.0
    %514 = vmatprep.subr.mxu0 0.0
    %515 = vmatpush1.msra.mxu0 0.0
    %516 = vmatprep.subr.mxu0 0.0
    %517 = vmatpush1.msra.mxu0 0.0
    %518 = vmatprep.subr.mxu0 0.0
    %519 = vmatpush1.msra.mxu0 0.0
    %520 = vmatprep.subr.mxu0 0.0
    %521 = vmatpush1.msra.mxu0 0.0
    %522 = vmatprep.subr.mxu0 0.0
    %523 = vmatpush1.msra.mxu0 0.0
    %524 = vmatprep.subr.mxu0 0.0
    %525 = vmatpush1.msra.mxu0 0.0
    %526 = vmatprep.mubr.f32.mxu0 0.0
    %527 = vmatmul.mubr.f32.gmra.mrb[0].mxu0 %v460
    %v528 = vpop.f32.mrb[0].mxu0
    %v529 = vadd.f32 %v203, %v528
    %v530 = vpop.f32.mrb[0].mxu0
    %531 = vdwg.mxu0
    %v533 = vsel %vm312, %v27, 0
    %535 = vmatprep.subr.mxu0 0.0
    %536 = vmatpush1.msra.mxu0 %v60
    %537 = vmatprep.subr.mxu0 0.0
    %538 = vmatpush1.msra.mxu0 %v61
    %539 = vmatprep.subr.mxu0 0.0
    %540 = vmatpush1.msra.mxu0 %v62
    %541 = vmatprep.subr.mxu0 0.0
    %542 = vmatpush1.msra.mxu0 %v63
    %543 = vmatprep.subr.mxu0 0.0
    %544 = vmatpush1.msra.mxu0 0.0
    %545 = vmatprep.subr.mxu0 0.0
    %546 = vmatpush1.msra.mxu0 0.0
    %547 = vmatprep.subr.mxu0 0.0
    %548 = vmatpush1.msra.mxu0 0.0
    %549 = vmatprep.subr.mxu0 0.0
    %550 = vmatpush1.msra.mxu0 0.0
    %551 = vmatprep.subr.mxu0 0.0
    %552 = vmatpush1.msra.mxu0 0.0
    %553 = vmatprep.subr.mxu0 0.0
    %554 = vmatpush1.msra.mxu0 0.0
    %555 = vmatprep.subr.mxu0 0.0
    %556 = vmatpush1.msra.mxu0 0.0
    %557 = vmatprep.subr.mxu0 0.0
    %558 = vmatpush1.msra.mxu0 0.0
    %559 = vmatprep.subr.mxu0 0.0
    %560 = vmatpush1.msra.mxu0 0.0
    %561 = vmatprep.subr.mxu0 0.0
    %562 = vmatpush1.msra.mxu0 0.0
    %563 = vmatprep.subr.mxu0 0.0
    %564 = vmatpush1.msra.mxu0 0.0
    %565 = vmatprep.subr.mxu0 0.0
    %566 = vmatpush1.msra.mxu0 0.0
    %567 = vmatprep.subr.mxu0 0.0
    %568 = vmatpush1.msra.mxu0 0.0
    %569 = vmatprep.subr.mxu0 0.0
    %570 = vmatpush1.msra.mxu0 0.0
    %571 = vmatprep.subr.mxu0 0.0
    %572 = vmatpush1.msra.mxu0 0.0
    %573 = vmatprep.subr.mxu0 0.0
    %574 = vmatpush1.msra.mxu0 0.0
    %575 = vmatprep.subr.mxu0 0.0
    %576 = vmatpush1.msra.mxu0 0.0
    %577 = vmatprep.subr.mxu0 0.0
    %578 = vmatpush1.msra.mxu0 0.0
    %579 = vmatprep.subr.mxu0 0.0
    %580 = vmatpush1.msra.mxu0 0.0
    %581 = vmatprep.subr.mxu0 0.0
    %582 = vmatpush1.msra.mxu0 0.0
    %583 = vmatprep.subr.mxu0 0.0
    %584 = vmatpush1.msra.mxu0 0.0
    %585 = vmatprep.subr.mxu0 0.0
    %586 = vmatpush1.msra.mxu0 0.0
    %587 = vmatprep.subr.mxu0 0.0
    %588 = vmatpush1.msra.mxu0 0.0
    %589 = vmatprep.subr.mxu0 0.0
    %590 = vmatpush1.msra.mxu0 0.0
    %591 = vmatprep.subr.mxu0 0.0
    %592 = vmatpush1.msra.mxu0 0.0
    %593 = vmatprep.subr.mxu0 0.0
    %594 = vmatpush1.msra.mxu0 0.0
    %595 = vmatprep.subr.mxu0 0.0
    %596 = vmatpush1.msra.mxu0 0.0
    %597 = vmatprep.subr.mxu0 0.0
    %598 = vmatpush1.msra.mxu0 0.0
    %599 = vmatprep.mubr.f32.mxu0 0.0
    %600 = vmatmul.mubr.f32.gmra.mrb[0].mxu0 %v533
    %v601 = vpop.f32.mrb[0].mxu0
    %v602 = vadd.f32 %v207, %v601
    %v603 = vpop.f32.mrb[0].mxu0
    %604 = vdwg.mxu0
    %v606 = vsel %vm312, %v28, 0
    %608 = vmatprep.subr.mxu0 0.0
    %609 = vmatpush1.msra.mxu0 %v64
    %610 = vmatprep.subr.mxu0 0.0
    %611 = vmatpush1.msra.mxu0 %v65
    %612 = vmatprep.subr.mxu0 0.0
    %613 = vmatpush1.msra.mxu0 %v66
    %614 = vmatprep.subr.mxu0 0.0
    %615 = vmatpush1.msra.mxu0 %v67
    %616 = vmatprep.subr.mxu0 0.0
    %617 = vmatpush1.msra.mxu0 0.0
    %618 = vmatprep.subr.mxu0 0.0
    %619 = vmatpush1.msra.mxu0 0.0
    %620 = vmatprep.subr.mxu0 0.0
    %621 = vmatpush1.msra.mxu0 0.0
    %622 = vmatprep.subr.mxu0 0.0
    %623 = vmatpush1.msra.mxu0 0.0
    %624 = vmatprep.subr.mxu0 0.0
    %625 = vmatpush1.msra.mxu0 0.0
    %626 = vmatprep.subr.mxu0 0.0
    %627 = vmatpush1.msra.mxu0 0.0
    %628 = vmatprep.subr.mxu0 0.0
    %629 = vmatpush1.msra.mxu0 0.0
    %630 = vmatprep.subr.mxu0 0.0
    %631 = vmatpush1.msra.mxu0 0.0
    %632 = vmatprep.subr.mxu0 0.0
    %633 = vmatpush1.msra.mxu0 0.0
    %634 = vmatprep.subr.mxu0 0.0
    %635 = vmatpush1.msra.mxu0 0.0
    %636 = vmatprep.subr.mxu0 0.0
    %637 = vmatpush1.msra.mxu0 0.0
    %638 = vmatprep.subr.mxu0 0.0
    %639 = vmatpush1.msra.mxu0 0.0
    %640 = vmatprep.subr.mxu0 0.0
    %641 = vmatpush1.msra.mxu0 0.0
    %642 = vmatprep.subr.mxu0 0.0
    %643 = vmatpush1.msra.mxu0 0.0
    %644 = vmatprep.subr.mxu0 0.0
    %645 = vmatpush1.msra.mxu0 0.0
    %646 = vmatprep.subr.mxu0 0.0
    %647 = vmatpush1.msra.mxu0 0.0
    %648 = vmatprep.subr.mxu0 0.0
    %649 = vmatpush1.msra.mxu0 0.0
    %650 = vmatprep.subr.mxu0 0.0
    %651 = vmatpush1.msra.mxu0 0.0
    %652 = vmatprep.subr.mxu0 0.0
    %653 = vmatpush1.msra.mxu0 0.0
    %654 = vmatprep.subr.mxu0 0.0
    %655 = vmatpush1.msra.mxu0 0.0
    %656 = vmatprep.subr.mxu0 0.0
    %657 = vmatpush1.msra.mxu0 0.0
    %658 = vmatprep.subr.mxu0 0.0
    %659 = vmatpush1.msra.mxu0 0.0
    %660 = vmatprep.subr.mxu0 0.0
    %661 = vmatpush1.msra.mxu0 0.0
    %662 = vmatprep.subr.mxu0 0.0
    %663 = vmatpush1.msra.mxu0 0.0
    %664 = vmatprep.subr.mxu0 0.0
    %665 = vmatpush1.msra.mxu0 0.0
    %666 = vmatprep.subr.mxu0 0.0
    %667 = vmatpush1.msra.mxu0 0.0
    %668 = vmatprep.subr.mxu0 0.0
    %669 = vmatpush1.msra.mxu0 0.0
    %670 = vmatprep.subr.mxu0 0.0
    %671 = vmatpush1.msra.mxu0 0.0
    %672 = vmatprep.mubr.f32.mxu0 0.0
    %673 = vmatmul.mubr.f32.gmra.mrb[0].mxu0 %v606
    %v674 = vpop.f32.mrb[0].mxu0
    %v675 = vadd.f32 %v211, %v674
    %v676 = vpop.f32.mrb[0].mxu0
    %677 = vdwg.mxu0
    %v679 = vsel %vm312, %v29, 0
    %681 = vmatprep.subr.mxu0 0.0
    %682 = vmatpush1.msra.mxu0 %v68
    %683 = vmatprep.subr.mxu0 0.0
    %684 = vmatpush1.msra.mxu0 %v69
    %685 = vmatprep.subr.mxu0 0.0
    %686 = vmatpush1.msra.mxu0 %v70
    %687 = vmatprep.subr.mxu0 0.0
    %688 = vmatpush1.msra.mxu0 %v71
    %689 = vmatprep.subr.mxu0 0.0
    %690 = vmatpush1.msra.mxu0 0.0
    %691 = vmatprep.subr.mxu0 0.0
    %692 = vmatpush1.msra.mxu0 0.0
    %693 = vmatprep.subr.mxu0 0.0
    %694 = vmatpush1.msra.mxu0 0.0
    %695 = vmatprep.subr.mxu0 0.0
    %696 = vmatpush1.msra.mxu0 0.0
    %697 = vmatprep.subr.mxu0 0.0
    %698 = vmatpush1.msra.mxu0 0.0
    %699 = vmatprep.subr.mxu0 0.0
    %700 = vmatpush1.msra.mxu0 0.0
    %701 = vmatprep.subr.mxu0 0.0
    %702 = vmatpush1.msra.mxu0 0.0
    %703 = vmatprep.subr.mxu0 0.0
    %704 = vmatpush1.msra.mxu0 0.0
    %705 = vmatprep.subr.mxu0 0.0
    %706 = vmatpush1.msra.mxu0 0.0
    %707 = vmatprep.subr.mxu0 0.0
    %708 = vmatpush1.msra.mxu0 0.0
    %709 = vmatprep.subr.mxu0 0.0
    %710 = vmatpush1.msra.mxu0 0.0
    %711 = vmatprep.subr.mxu0 0.0
    %712 = vmatpush1.msra.mxu0 0.0
    %713 = vmatprep.subr.mxu0 0.0
    %714 = vmatpush1.msra.mxu0 0.0
    %715 = vmatprep.subr.mxu0 0.0
    %716 = vmatpush1.msra.mxu0 0.0
    %717 = vmatprep.subr.mxu0 0.0
    %718 = vmatpush1.msra.mxu0 0.0
    %719 = vmatprep.subr.mxu0 0.0
    %720 = vmatpush1.msra.mxu0 0.0
    %721 = vmatprep.subr.mxu0 0.0
    %722 = vmatpush1.msra.mxu0 0.0
    %723 = vmatprep.subr.mxu0 0.0
    %724 = vmatpush1.msra.mxu0 0.0
    %725 = vmatprep.subr.mxu0 0.0
    %726 = vmatpush1.msra.mxu0 0.0
    %727 = vmatprep.subr.mxu0 0.0
    %728 = vmatpush1.msra.mxu0 0.0
    %729 = vmatprep.subr.mxu0 0.0
    %730 = vmatpush1.msra.mxu0 0.0
    %731 = vmatprep.subr.mxu0 0.0
    %732 = vmatpush1.msra.mxu0 0.0
    %733 = vmatprep.subr.mxu0 0.0
    %734 = vmatpush1.msra.mxu0 0.0
    %735 = vmatprep.subr.mxu0 0.0
    %736 = vmatpush1.msra.mxu0 0.0
    %737 = vmatprep.subr.mxu0 0.0
    %738 = vmatpush1.msra.mxu0 0.0
    %739 = vmatprep.subr.mxu0 0.0
    %740 = vmatpush1.msra.mxu0 0.0
    %741 = vmatprep.subr.mxu0 0.0
    %742 = vmatpush1.msra.mxu0 0.0
    %743 = vmatprep.subr.mxu0 0.0
    %744 = vmatpush1.msra.mxu0 0.0
    %745 = vmatprep.mubr.f32.mxu0 0.0
    %746 = vmatmul.mubr.f32.gmra.mrb[0].mxu0 %v679
    %v747 = vpop.f32.mrb[0].mxu0
    %v748 = vadd.f32 %v215, %v747
    %v749 = vpop.f32.mrb[0].mxu0
    %750 = vdwg.mxu0
    %v752 = vsel %vm312, %v30, 0
    %754 = vmatprep.subr.mxu0 0.0
    %755 = vmatpush1.msra.mxu0 %v72
    %756 = vmatprep.subr.mxu0 0.0
    %757 = vmatpush1.msra.mxu0 %v73
    %758 = vmatprep.subr.mxu0 0.0
    %759 = vmatpush1.msra.mxu0 %v74
    %760 = vmatprep.subr.mxu0 0.0
    %761 = vmatpush1.msra.mxu0 %v75
    %762 = vmatprep.subr.mxu0 0.0
    %763 = vmatpush1.msra.mxu0 0.0
    %764 = vmatprep.subr.mxu0 0.0
    %765 = vmatpush1.msra.mxu0 0.0
    %766 = vmatprep.subr.mxu0 0.0
    %767 = vmatpush1.msra.mxu0 0.0
    %768 = vmatprep.subr.mxu0 0.0
    %769 = vmatpush1.msra.mxu0 0.0
    %770 = vmatprep.subr.mxu0 0.0
    %771 = vmatpush1.msra.mxu0 0.0
    %772 = vmatprep.subr.mxu0 0.0
    %773 = vmatpush1.msra.mxu0 0.0
    %774 = vmatprep.subr.mxu0 0.0
    %775 = vmatpush1.msra.mxu0 0.0
    %776 = vmatprep.subr.mxu0 0.0
    %777 = vmatpush1.msra.mxu0 0.0
    %778 = vmatprep.subr.mxu0 0.0
    %779 = vmatpush1.msra.mxu0 0.0
    %780 = vmatprep.subr.mxu0 0.0
    %781 = vmatpush1.msra.mxu0 0.0
    %782 = vmatprep.subr.mxu0 0.0
    %783 = vmatpush1.msra.mxu0 0.0
    %784 = vmatprep.subr.mxu0 0.0
    %785 = vmatpush1.msra.mxu0 0.0
    %786 = vmatprep.subr.mxu0 0.0
    %787 = vmatpush1.msra.mxu0 0.0
    %788 = vmatprep.subr.mxu0 0.0
    %789 = vmatpush1.msra.mxu0 0.0
    %790 = vmatprep.subr.mxu0 0.0
    %791 = vmatpush1.msra.mxu0 0.0
    %792 = vmatprep.subr.mxu0 0.0
    %793 = vmatpush1.msra.mxu0 0.0
    %794 = vmatprep.subr.mxu0 0.0
    %795 = vmatpush1.msra.mxu0 0.0
    %796 = vmatprep.subr.mxu0 0.0
    %797 = vmatpush1.msra.mxu0 0.0
    %798 = vmatprep.subr.mxu0 0.0
    %799 = vmatpush1.msra.mxu0 0.0
    %800 = vmatprep.subr.mxu0 0.0
    %801 = vmatpush1.msra.mxu0 0.0
    %802 = vmatprep.subr.mxu0 0.0
    %803 = vmatpush1.msra.mxu0 0.0
    %804 = vmatprep.subr.mxu0 0.0
    %805 = vmatpush1.msra.mxu0 0.0
    %806 = vmatprep.subr.mxu0 0.0
    %807 = vmatpush1.msra.mxu0 0.0
    %808 = vmatprep.subr.mxu0 0.0
    %809 = vmatpush1.msra.mxu0 0.0
    %810 = vmatprep.subr.mxu0 0.0
    %811 = vmatpush1.msra.mxu0 0.0
    %812 = vmatprep.subr.mxu0 0.0
    %813 = vmatpush1.msra.mxu0 0.0
    %814 = vmatprep.subr.mxu0 0.0
    %815 = vmatpush1.msra.mxu0 0.0
    %816 = vmatprep.subr.mxu0 0.0
    %817 = vmatpush1.msra.mxu0 0.0
    %818 = vmatprep.mubr.f32.mxu0 0.0
    %819 = vmatmul.mubr.f32.gmra.mrb[0].mxu0 %v752
    %v820 = vpop.f32.mrb[0].mxu0
    %v821 = vadd.f32 %v219, %v820
    %v822 = vpop.f32.mrb[0].mxu0
    %823 = vdwg.mxu0
    %v825 = vsel %vm312, %v31, 0
    %827 = vmatprep.subr.mxu0 0.0
    %828 = vmatpush1.msra.mxu0 %v76
    %829 = vmatprep.subr.mxu0 0.0
    %830 = vmatpush1.msra.mxu0 %v77
    %831 = vmatprep.subr.mxu0 0.0
    %832 = vmatpush1.msra.mxu0 %v78
    %833 = vmatprep.subr.mxu0 0.0
    %834 = vmatpush1.msra.mxu0 %v79
    %835 = vmatprep.subr.mxu0 0.0
    %836 = vmatpush1.msra.mxu0 0.0
    %837 = vmatprep.subr.mxu0 0.0
    %838 = vmatpush1.msra.mxu0 0.0
    %839 = vmatprep.subr.mxu0 0.0
    %840 = vmatpush1.msra.mxu0 0.0
    %841 = vmatprep.subr.mxu0 0.0
    %842 = vmatpush1.msra.mxu0 0.0
    %843 = vmatprep.subr.mxu0 0.0
    %844 = vmatpush1.msra.mxu0 0.0
    %845 = vmatprep.subr.mxu0 0.0
    %846 = vmatpush1.msra.mxu0 0.0
    %847 = vmatprep.subr.mxu0 0.0
    %848 = vmatpush1.msra.mxu0 0.0
    %849 = vmatprep.subr.mxu0 0.0
    %850 = vmatpush1.msra.mxu0 0.0
    %851 = vmatprep.subr.mxu0 0.0
    %852 = vmatpush1.msra.mxu0 0.0
    %853 = vmatprep.subr.mxu0 0.0
    %854 = vmatpush1.msra.mxu0 0.0
    %855 = vmatprep.subr.mxu0 0.0
    %856 = vmatpush1.msra.mxu0 0.0
    %857 = vmatprep.subr.mxu0 0.0
    %858 = vmatpush1.msra.mxu0 0.0
    %859 = vmatprep.subr.mxu0 0.0
    %860 = vmatpush1.msra.mxu0 0.0
    %861 = vmatprep.subr.mxu0 0.0
    %862 = vmatpush1.msra.mxu0 0.0
    %863 = vmatprep.subr.mxu0 0.0
    %864 = vmatpush1.msra.mxu0 0.0
    %865 = vmatprep.subr.mxu0 0.0
    %866 = vmatpush1.msra.mxu0 0.0
    %867 = vmatprep.subr.mxu0 0.0
    %868 = vmatpush1.msra.mxu0 0.0
    %869 = vmatprep.subr.mxu0 0.0
    %870 = vmatpush1.msra.mxu0 0.0
    %871 = vmatprep.subr.mxu0 0.0
    %872 = vmatpush1.msra.mxu0 0.0
    %873 = vmatprep.subr.mxu0 0.0
    %874 = vmatpush1.msra.mxu0 0.0
    %875 = vmatprep.subr.mxu0 0.0
    %876 = vmatpush1.msra.mxu0 0.0
    %877 = vmatprep.subr.mxu0 0.0
    %878 = vmatpush1.msra.mxu0 0.0
    %879 = vmatprep.subr.mxu0 0.0
    %880 = vmatpush1.msra.mxu0 0.0
    %881 = vmatprep.subr.mxu0 0.0
    %882 = vmatpush1.msra.mxu0 0.0
    %883 = vmatprep.subr.mxu0 0.0
    %884 = vmatpush1.msra.mxu0 0.0
    %885 = vmatprep.subr.mxu0 0.0
    %886 = vmatpush1.msra.mxu0 0.0
    %887 = vmatprep.subr.mxu0 0.0
    %888 = vmatpush1.msra.mxu0 0.0
    %889 = vmatprep.subr.mxu0 0.0
    %890 = vmatpush1.msra.mxu0 0.0
    %891 = vmatprep.mubr.f32.mxu0 0.0
    %892 = vmatmul.mubr.f32.gmra.mrb[0].mxu0 %v825
    %v893 = vpop.f32.mrb[0].mxu0
    %v894 = vadd.f32 %v223, %v893
    %v895 = vpop.f32.mrb[0].mxu0
    %896 = vdwg.mxu0
    %v898 = vsel %vm312, %v32, 0
    %900 = vmatprep.subr.mxu0 0.0
    %901 = vmatpush1.msra.mxu0 %v80
    %902 = vmatprep.subr.mxu0 0.0
    %903 = vmatpush1.msra.mxu0 %v81
    %904 = vmatprep.subr.mxu0 0.0
    %905 = vmatpush1.msra.mxu0 %v82
    %906 = vmatprep.subr.mxu0 0.0
    %907 = vmatpush1.msra.mxu0 %v83
    %908 = vmatprep.subr.mxu0 0.0
    %909 = vmatpush1.msra.mxu0 0.0
    %910 = vmatprep.subr.mxu0 0.0
    %911 = vmatpush1.msra.mxu0 0.0
    %912 = vmatprep.subr.mxu0 0.0
    %913 = vmatpush1.msra.mxu0 0.0
    %914 = vmatprep.subr.mxu0 0.0
    %915 = vmatpush1.msra.mxu0 0.0
    %916 = vmatprep.subr.mxu0 0.0
    %917 = vmatpush1.msra.mxu0 0.0
    %918 = vmatprep.subr.mxu0 0.0
    %919 = vmatpush1.msra.mxu0 0.0
    %920 = vmatprep.subr.mxu0 0.0
    %921 = vmatpush1.msra.mxu0 0.0
    %922 = vmatprep.subr.mxu0 0.0
    %923 = vmatpush1.msra.mxu0 0.0
    %924 = vmatprep.subr.mxu0 0.0
    %925 = vmatpush1.msra.mxu0 0.0
    %926 = vmatprep.subr.mxu0 0.0
    %927 = vmatpush1.msra.mxu0 0.0
    %928 = vmatprep.subr.mxu0 0.0
    %929 = vmatpush1.msra.mxu0 0.0
    %930 = vmatprep.subr.mxu0 0.0
    %931 = vmatpush1.msra.mxu0 0.0
    %932 = vmatprep.subr.mxu0 0.0
    %933 = vmatpush1.msra.mxu0 0.0
    %934 = vmatprep.subr.mxu0 0.0
    %935 = vmatpush1.msra.mxu0 0.0
    %936 = vmatprep.subr.mxu0 0.0
    %937 = vmatpush1.msra.mxu0 0.0
    %938 = vmatprep.subr.mxu0 0.0
    %939 = vmatpush1.msra.mxu0 0.0
    %940 = vmatprep.subr.mxu0 0.0
    %941 = vmatpush1.msra.mxu0 0.0
    %942 = vmatprep.subr.mxu0 0.0
    %943 = vmatpush1.msra.mxu0 0.0
    %944 = vmatprep.subr.mxu0 0.0
    %945 = vmatpush1.msra.mxu0 0.0
    %946 = vmatprep.subr.mxu0 0.0
    %947 = vmatpush1.msra.mxu0 0.0
    %948 = vmatprep.subr.mxu0 0.0
    %949 = vmatpush1.msra.mxu0 0.0
    %950 = vmatprep.subr.mxu0 0.0
    %951 = vmatpush1.msra.mxu0 0.0
    %952 = vmatprep.subr.mxu0 0.0
    %953 = vmatpush1.msra.mxu0 0.0
    %954 = vmatprep.subr.mxu0 0.0
    %955 = vmatpush1.msra.mxu0 0.0
    %956 = vmatprep.subr.mxu0 0.0
    %957 = vmatpush1.msra.mxu0 0.0
    %958 = vmatprep.subr.mxu0 0.0
    %959 = vmatpush1.msra.mxu0 0.0
    %960 = vmatprep.subr.mxu0 0.0
    %961 = vmatpush1.msra.mxu0 0.0
    %962 = vmatprep.subr.mxu0 0.0
    %963 = vmatpush1.msra.mxu0 0.0
    %964 = vmatprep.mubr.f32.mxu0 0.0
    %965 = vmatmul.mubr.f32.gmra.mrb[0].mxu0 %v898
    %v966 = vpop.f32.mrb[0].mxu0
    %v967 = vadd.f32 %v227, %v966
    %v968 = vpop.f32.mrb[0].mxu0
    %969 = vdwg.mxu0
    %v971 = vsel %vm312, %v33, 0
    %973 = vmatprep.subr.mxu0 0.0
    %974 = vmatpush1.msra.mxu0 %v84
    %975 = vmatprep.subr.mxu0 0.0
    %976 = vmatpush1.msra.mxu0 %v85
    %977 = vmatprep.subr.mxu0 0.0
    %978 = vmatpush1.msra.mxu0 %v86
    %979 = vmatprep.subr.mxu0 0.0
    %980 = vmatpush1.msra.mxu0 %v87
    %981 = vmatprep.subr.mxu0 0.0
    %982 = vmatpush1.msra.mxu0 0.0
    %983 = vmatprep.subr.mxu0 0.0
    %984 = vmatpush1.msra.mxu0 0.0
    %985 = vmatprep.subr.mxu0 0.0
    %986 = vmatpush1.msra.mxu0 0.0
    %987 = vmatprep.subr.mxu0 0.0
    %988 = vmatpush1.msra.mxu0 0.0
    %989 = vmatprep.subr.mxu0 0.0
    %990 = vmatpush1.msra.mxu0 0.0
    %991 = vmatprep.subr.mxu0 0.0
    %992 = vmatpush1.msra.mxu0 0.0
    %993 = vmatprep.subr.mxu0 0.0
    %994 = vmatpush1.msra.mxu0 0.0
    %995 = vmatprep.subr.mxu0 0.0
    %996 = vmatpush1.msra.mxu0 0.0
    %997 = vmatprep.subr.mxu0 0.0
    %998 = vmatpush1.msra.mxu0 0.0
    %999 = vmatprep.subr.mxu0 0.0
    %1000 = vmatpush1.msra.mxu0 0.0
    %1001 = vmatprep.subr.mxu0 0.0
    %1002 = vmatpush1.msra.mxu0 0.0
    %1003 = vmatprep.subr.mxu0 0.0
    %1004 = vmatpush1.msra.mxu0 0.0
    %1005 = vmatprep.subr.mxu0 0.0
    %1006 = vmatpush1.msra.mxu0 0.0
    %1007 = vmatprep.subr.mxu0 0.0
    %1008 = vmatpush1.msra.mxu0 0.0
    %1009 = vmatprep.subr.mxu0 0.0
    %1010 = vmatpush1.msra.mxu0 0.0
    %1011 = vmatprep.subr.mxu0 0.0
    %1012 = vmatpush1.msra.mxu0 0.0
    %1013 = vmatprep.subr.mxu0 0.0
    %1014 = vmatpush1.msra.mxu0 0.0
    %1015 = vmatprep.subr.mxu0 0.0
    %1016 = vmatpush1.msra.mxu0 0.0
    %1017 = vmatprep.subr.mxu0 0.0
    %1018 = vmatpush1.msra.mxu0 0.0
    %1019 = vmatprep.subr.mxu0 0.0
    %1020 = vmatpush1.msra.mxu0 0.0
    %1021 = vmatprep.subr.mxu0 0.0
    %1022 = vmatpush1.msra.mxu0 0.0
    %1023 = vmatprep.subr.mxu0 0.0
    %1024 = vmatpush1.msra.mxu0 0.0
    %1025 = vmatprep.subr.mxu0 0.0
    %1026 = vmatpush1.msra.mxu0 0.0
    %1027 = vmatprep.subr.mxu0 0.0
    %1028 = vmatpush1.msra.mxu0 0.0
    %1029 = vmatprep.subr.mxu0 0.0
    %1030 = vmatpush1.msra.mxu0 0.0
    %1031 = vmatprep.subr.mxu0 0.0
    %1032 = vmatpush1.msra.mxu0 0.0
    %1033 = vmatprep.subr.mxu0 0.0
    %1034 = vmatpush1.msra.mxu0 0.0
    %1035 = vmatprep.subr.mxu0 0.0
    %1036 = vmatpush1.msra.mxu0 0.0
    %1037 = vmatprep.mubr.f32.mxu0 0.0
    %1038 = vmatmul.mubr.f32.gmra.mrb[0].mxu0 %v971
    %v1039 = vpop.f32.mrb[0].mxu0
    %v1040 = vadd.f32 %v231, %v1039
    %v1041 = vpop.f32.mrb[0].mxu0
    %1042 = vdwg.mxu0
    %v1044 = vsel %vm312, %v34, 0
    %1046 = vmatprep.subr.mxu0 0.0
    %1047 = vmatpush1.msra.mxu0 %v88
    %1048 = vmatprep.subr.mxu0 0.0
    %1049 = vmatpush1.msra.mxu0 %v89
    %1050 = vmatprep.subr.mxu0 0.0
    %1051 = vmatpush1.msra.mxu0 %v90
    %1052 = vmatprep.subr.mxu0 0.0
    %1053 = vmatpush1.msra.mxu0 %v91
    %1054 = vmatprep.subr.mxu0 0.0
    %1055 = vmatpush1.msra.mxu0 0.0
    %1056 = vmatprep.subr.mxu0 0.0
    %1057 = vmatpush1.msra.mxu0 0.0
    %1058 = vmatprep.subr.mxu0 0.0
    %1059 = vmatpush1.msra.mxu0 0.0
    %1060 = vmatprep.subr.mxu0 0.0
    %1061 = vmatpush1.msra.mxu0 0.0
    %1062 = vmatprep.subr.mxu0 0.0
    %1063 = vmatpush1.msra.mxu0 0.0
    %1064 = vmatprep.subr.mxu0 0.0
    %1065 = vmatpush1.msra.mxu0 0.0
    %1066 = vmatprep.subr.mxu0 0.0
    %1067 = vmatpush1.msra.mxu0 0.0
    %1068 = vmatprep.subr.mxu0 0.0
    %1069 = vmatpush1.msra.mxu0 0.0
    %1070 = vmatprep.subr.mxu0 0.0
    %1071 = vmatpush1.msra.mxu0 0.0
    %1072 = vmatprep.subr.mxu0 0.0
    %1073 = vmatpush1.msra.mxu0 0.0
    %1074 = vmatprep.subr.mxu0 0.0
    %1075 = vmatpush1.msra.mxu0 0.0
    %1076 = vmatprep.subr.mxu0 0.0
    %1077 = vmatpush1.msra.mxu0 0.0
    %1078 = vmatprep.subr.mxu0 0.0
    %1079 = vmatpush1.msra.mxu0 0.0
    %1080 = vmatprep.subr.mxu0 0.0
    %1081 = vmatpush1.msra.mxu0 0.0
    %1082 = vmatprep.subr.mxu0 0.0
    %1083 = vmatpush1.msra.mxu0 0.0
    %1084 = vmatprep.subr.mxu0 0.0
    %1085 = vmatpush1.msra.mxu0 0.0
    %1086 = vmatprep.subr.mxu0 0.0
    %1087 = vmatpush1.msra.mxu0 0.0
    %1088 = vmatprep.subr.mxu0 0.0
    %1089 = vmatpush1.msra.mxu0 0.0
    %1090 = vmatprep.subr.mxu0 0.0
    %1091 = vmatpush1.msra.mxu0 0.0
    %1092 = vmatprep.subr.mxu0 0.0
    %1093 = vmatpush1.msra.mxu0 0.0
    %1094 = vmatprep.subr.mxu0 0.0
    %1095 = vmatpush1.msra.mxu0 0.0
    %1096 = vmatprep.subr.mxu0 0.0
    %1097 = vmatpush1.msra.mxu0 0.0
    %1098 = vmatprep.subr.mxu0 0.0
    %1099 = vmatpush1.msra.mxu0 0.0
    %1100 = vmatprep.subr.mxu0 0.0
    %1101 = vmatpush1.msra.mxu0 0.0
    %1102 = vmatprep.subr.mxu0 0.0
    %1103 = vmatpush1.msra.mxu0 0.0
    %1104 = vmatprep.subr.mxu0 0.0
    %1105 = vmatpush1.msra.mxu0 0.0
    %1106 = vmatprep.subr.mxu0 0.0
    %1107 = vmatpush1.msra.mxu0 0.0
    %1108 = vmatprep.subr.mxu0 0.0
    %1109 = vmatpush1.msra.mxu0 0.0
    %1110 = vmatprep.mubr.f32.mxu0 0.0
    %1111 = vmatmul.mubr.f32.gmra.mrb[0].mxu0 %v1044
    %v1112 = vpop.f32.mrb[0].mxu0
    %v1113 = vadd.f32 %v235, %v1112
    %v1114 = vpop.f32.mrb[0].mxu0
    %1115 = vdwg.mxu0
    %v1117 = vsel %vm312, %v35, 0
    %1119 = vmatprep.subr.mxu0 0.0
    %1120 = vmatpush1.msra.mxu0 %v92
    %1121 = vmatprep.subr.mxu0 0.0
    %1122 = vmatpush1.msra.mxu0 %v93
    %1123 = vmatprep.subr.mxu0 0.0
    %1124 = vmatpush1.msra.mxu0 %v94
    %1125 = vmatprep.subr.mxu0 0.0
    %1126 = vmatpush1.msra.mxu0 %v95
    %1127 = vmatprep.subr.mxu0 0.0
    %1128 = vmatpush1.msra.mxu0 0.0
    %1129 = vmatprep.subr.mxu0 0.0
    %1130 = vmatpush1.msra.mxu0 0.0
    %1131 = vmatprep.subr.mxu0 0.0
    %1132 = vmatpush1.msra.mxu0 0.0
    %1133 = vmatprep.subr.mxu0 0.0
    %1134 = vmatpush1.msra.mxu0 0.0
    %1135 = vmatprep.subr.mxu0 0.0
    %1136 = vmatpush1.msra.mxu0 0.0
    %1137 = vmatprep.subr.mxu0 0.0
    %1138 = vmatpush1.msra.mxu0 0.0
    %1139 = vmatprep.subr.mxu0 0.0
    %1140 = vmatpush1.msra.mxu0 0.0
    %1141 = vmatprep.subr.mxu0 0.0
    %1142 = vmatpush1.msra.mxu0 0.0
    %1143 = vmatprep.subr.mxu0 0.0
    %1144 = vmatpush1.msra.mxu0 0.0
    %1145 = vmatprep.subr.mxu0 0.0
    %1146 = vmatpush1.msra.mxu0 0.0
    %1147 = vmatprep.subr.mxu0 0.0
    %1148 = vmatpush1.msra.mxu0 0.0
    %1149 = vmatprep.subr.mxu0 0.0
    %1150 = vmatpush1.msra.mxu0 0.0
    %1151 = vmatprep.subr.mxu0 0.0
    %1152 = vmatpush1.msra.mxu0 0.0
    %1153 = vmatprep.subr.mxu0 0.0
    %1154 = vmatpush1.msra.mxu0 0.0
    %1155 = vmatprep.subr.mxu0 0.0
    %1156 = vmatpush1.msra.mxu0 0.0
    %1157 = vmatprep.subr.mxu0 0.0
    %1158 = vmatpush1.msra.mxu0 0.0
    %1159 = vmatprep.subr.mxu0 0.0
    %1160 = vmatpush1.msra.mxu0 0.0
    %1161 = vmatprep.subr.mxu0 0.0
    %1162 = vmatpush1.msra.mxu0 0.0
    %1163 = vmatprep.subr.mxu0 0.0
    %1164 = vmatpush1.msra.mxu0 0.0
    %1165 = vmatprep.subr.mxu0 0.0
    %1166 = vmatpush1.msra.mxu0 0.0
    %1167 = vmatprep.subr.mxu0 0.0
    %1168 = vmatpush1.msra.mxu0 0.0
    %1169 = vmatprep.subr.mxu0 0.0
    %1170 = vmatpush1.msra.mxu0 0.0
    %1171 = vmatprep.subr.mxu0 0.0
    %1172 = vmatpush1.msra.mxu0 0.0
    %1173 = vmatprep.subr.mxu0 0.0
    %1174 = vmatpush1.msra.mxu0 0.0
    %1175 = vmatprep.subr.mxu0 0.0
    %1176 = vmatpush1.msra.mxu0 0.0
    %1177 = vmatprep.subr.mxu0 0.0
    %1178 = vmatpush1.msra.mxu0 0.0
    %1179 = vmatprep.subr.mxu0 0.0
    %1180 = vmatpush1.msra.mxu0 0.0
    %1181 = vmatprep.subr.mxu0 0.0
    %1182 = vmatpush1.msra.mxu0 0.0
    %1183 = vmatprep.mubr.f32.mxu0 0.0
    %1184 = vmatmul.mubr.f32.gmra.mrb[0].mxu0 %v1117
    %v1185 = vpop.f32.mrb[0].mxu0
    %v1186 = vadd.f32 %v239, %v1185
    %v1187 = vpop.f32.mrb[0].mxu0
    %1188 = vdwg.mxu0
    %v1190 = vsel %vm312, %v36, 0
    %1192 = vmatprep.subr.mxu0 0.0
    %1193 = vmatpush1.msra.mxu0 %v96
    %1194 = vmatprep.subr.mxu0 0.0
    %1195 = vmatpush1.msra.mxu0 %v97
    %1196 = vmatprep.subr.mxu0 0.0
    %1197 = vmatpush1.msra.mxu0 %v98
    %1198 = vmatprep.subr.mxu0 0.0
    %1199 = vmatpush1.msra.mxu0 %v99
    %1200 = vmatprep.subr.mxu0 0.0
    %1201 = vmatpush1.msra.mxu0 0.0
    %1202 = vmatprep.subr.mxu0 0.0
    %1203 = vmatpush1.msra.mxu0 0.0
    %1204 = vmatprep.subr.mxu0 0.0
    %1205 = vmatpush1.msra.mxu0 0.0
    %1206 = vmatprep.subr.mxu0 0.0
    %1207 = vmatpush1.msra.mxu0 0.0
    %1208 = vmatprep.subr.mxu0 0.0
    %1209 = vmatpush1.msra.mxu0 0.0
    %1210 = vmatprep.subr.mxu0 0.0
    %1211 = vmatpush1.msra.mxu0 0.0
    %1212 = vmatprep.subr.mxu0 0.0
    %1213 = vmatpush1.msra.mxu0 0.0
    %1214 = vmatprep.subr.mxu0 0.0
    %1215 = vmatpush1.msra.mxu0 0.0
    %1216 = vmatprep.subr.mxu0 0.0
    %1217 = vmatpush1.msra.mxu0 0.0
    %1218 = vmatprep.subr.mxu0 0.0
    %1219 = vmatpush1.msra.mxu0 0.0
    %1220 = vmatprep.subr.mxu0 0.0
    %1221 = vmatpush1.msra.mxu0 0.0
    %1222 = vmatprep.subr.mxu0 0.0
    %1223 = vmatpush1.msra.mxu0 0.0
    %1224 = vmatprep.subr.mxu0 0.0
    %1225 = vmatpush1.msra.mxu0 0.0
    %1226 = vmatprep.subr.mxu0 0.0
    %1227 = vmatpush1.msra.mxu0 0.0
    %1228 = vmatprep.subr.mxu0 0.0
    %1229 = vmatpush1.msra.mxu0 0.0
    %1230 = vmatprep.subr.mxu0 0.0
    %1231 = vmatpush1.msra.mxu0 0.0
    %1232 = vmatprep.subr.mxu0 0.0
    %1233 = vmatpush1.msra.mxu0 0.0
    %1234 = vmatprep.subr.mxu0 0.0
    %1235 = vmatpush1.msra.mxu0 0.0
    %1236 = vmatprep.subr.mxu0 0.0
    %1237 = vmatpush1.msra.mxu0 0.0
    %1238 = vmatprep.subr.mxu0 0.0
    %1239 = vmatpush1.msra.mxu0 0.0
    %1240 = vmatprep.subr.mxu0 0.0
    %1241 = vmatpush1.msra.mxu0 0.0
    %1242 = vmatprep.subr.mxu0 0.0
    %1243 = vmatpush1.msra.mxu0 0.0
    %1244 = vmatprep.subr.mxu0 0.0
    %1245 = vmatpush1.msra.mxu0 0.0
    %1246 = vmatprep.subr.mxu0 0.0
    %1247 = vmatpush1.msra.mxu0 0.0
    %1248 = vmatprep.subr.mxu0 0.0
    %1249 = vmatpush1.msra.mxu0 0.0
    %1250 = vmatprep.subr.mxu0 0.0
    %1251 = vmatpush1.msra.mxu0 0.0
    %1252 = vmatprep.subr.mxu0 0.0
    %1253 = vmatpush1.msra.mxu0 0.0
    %1254 = vmatprep.subr.mxu0 0.0
    %1255 = vmatpush1.msra.mxu0 0.0
    %1256 = vmatprep.mubr.f32.mxu0 0.0
    %1257 = vmatmul.mubr.f32.gmra.mrb[0].mxu0 %v1190
    %v1258 = vpop.f32.mrb[0].mxu0
    %v1259 = vadd.f32 %v243, %v1258
    %v1260 = vpop.f32.mrb[0].mxu0
    %1261 = vdwg.mxu0
    %v1263 = vsel %vm312, %v37, 0
    %1265 = vmatprep.subr.mxu0 0.0
    %1266 = vmatpush1.msra.mxu0 %v100
    %1267 = vmatprep.subr.mxu0 0.0
    %1268 = vmatpush1.msra.mxu0 %v101
    %1269 = vmatprep.subr.mxu0 0.0
    %1270 = vmatpush1.msra.mxu0 %v102
    %1271 = vmatprep.subr.mxu0 0.0
    %1272 = vmatpush1.msra.mxu0 %v103
    %1273 = vmatprep.subr.mxu0 0.0
    %1274 = vmatpush1.msra.mxu0 0.0
    %1275 = vmatprep.subr.mxu0 0.0
    %1276 = vmatpush1.msra.mxu0 0.0
    %1277 = vmatprep.subr.mxu0 0.0
    %1278 = vmatpush1.msra.mxu0 0.0
    %1279 = vmatprep.subr.mxu0 0.0
    %1280 = vmatpush1.msra.mxu0 0.0
    %1281 = vmatprep.subr.mxu0 0.0
    %1282 = vmatpush1.msra.mxu0 0.0
    %1283 = vmatprep.subr.mxu0 0.0
    %1284 = vmatpush1.msra.mxu0 0.0
    %1285 = vmatprep.subr.mxu0 0.0
    %1286 = vmatpush1.msra.mxu0 0.0
    %1287 = vmatprep.subr.mxu0 0.0
    %1288 = vmatpush1.msra.mxu0 0.0
    %1289 = vmatprep.subr.mxu0 0.0
    %1290 = vmatpush1.msra.mxu0 0.0
    %1291 = vmatprep.subr.mxu0 0.0
    %1292 = vmatpush1.msra.mxu0 0.0
    %1293 = vmatprep.subr.mxu0 0.0
    %1294 = vmatpush1.msra.mxu0 0.0
    %1295 = vmatprep.subr.mxu0 0.0
    %1296 = vmatpush1.msra.mxu0 0.0
    %1297 = vmatprep.subr.mxu0 0.0
    %1298 = vmatpush1.msra.mxu0 0.0
    %1299 = vmatprep.subr.mxu0 0.0
    %1300 = vmatpush1.msra.mxu0 0.0
    %1301 = vmatprep.subr.mxu0 0.0
    %1302 = vmatpush1.msra.mxu0 0.0
    %1303 = vmatprep.subr.mxu0 0.0
    %1304 = vmatpush1.msra.mxu0 0.0
    %1305 = vmatprep.subr.mxu0 0.0
    %1306 = vmatpush1.msra.mxu0 0.0
    %1307 = vmatprep.subr.mxu0 0.0
    %1308 = vmatpush1.msra.mxu0 0.0
    %1309 = vmatprep.subr.mxu0 0.0
    %1310 = vmatpush1.msra.mxu0 0.0
    %1311 = vmatprep.subr.mxu0 0.0
    %1312 = vmatpush1.msra.mxu0 0.0
    %1313 = vmatprep.subr.mxu0 0.0
    %1314 = vmatpush1.msra.mxu0 0.0
    %1315 = vmatprep.subr.mxu0 0.0
    %1316 = vmatpush1.msra.mxu0 0.0
    %1317 = vmatprep.subr.mxu0 0.0
    %1318 = vmatpush1.msra.mxu0 0.0
    %1319 = vmatprep.subr.mxu0 0.0
    %1320 = vmatpush1.msra.mxu0 0.0
    %1321 = vmatprep.subr.mxu0 0.0
    %1322 = vmatpush1.msra.mxu0 0.0
    %1323 = vmatprep.subr.mxu0 0.0
    %1324 = vmatpush1.msra.mxu0 0.0
    %1325 = vmatprep.subr.mxu0 0.0
    %1326 = vmatpush1.msra.mxu0 0.0
    %1327 = vmatprep.subr.mxu0 0.0
    %1328 = vmatpush1.msra.mxu0 0.0
    %1329 = vmatprep.mubr.f32.mxu0 0.0
    %1330 = vmatmul.mubr.f32.gmra.mrb[0].mxu0 %v1263
    %v1331 = vpop.f32.mrb[0].mxu0
    %v1332 = vadd.f32 %v247, %v1331
    %v1333 = vpop.f32.mrb[0].mxu0
    %1334 = vdwg.mxu0
    %v1336 = vsel %vm312, %v38, 0
    %1338 = vmatprep.subr.mxu0 0.0
    %1339 = vmatpush1.msra.mxu0 %v104
    %1340 = vmatprep.subr.mxu0 0.0
    %1341 = vmatpush1.msra.mxu0 %v105
    %1342 = vmatprep.subr.mxu0 0.0
    %1343 = vmatpush1.msra.mxu0 %v106
    %1344 = vmatprep.subr.mxu0 0.0
    %1345 = vmatpush1.msra.mxu0 %v107
    %1346 = vmatprep.subr.mxu0 0.0
    %1347 = vmatpush1.msra.mxu0 0.0
    %1348 = vmatprep.subr.mxu0 0.0
    %1349 = vmatpush1.msra.mxu0 0.0
    %1350 = vmatprep.subr.mxu0 0.0
    %1351 = vmatpush1.msra.mxu0 0.0
    %1352 = vmatprep.subr.mxu0 0.0
    %1353 = vmatpush1.msra.mxu0 0.0
    %1354 = vmatprep.subr.mxu0 0.0
    %1355 = vmatpush1.msra.mxu0 0.0
    %1356 = vmatprep.subr.mxu0 0.0
    %1357 = vmatpush1.msra.mxu0 0.0
    %1358 = vmatprep.subr.mxu0 0.0
    %1359 = vmatpush1.msra.mxu0 0.0
    %1360 = vmatprep.subr.mxu0 0.0
    %1361 = vmatpush1.msra.mxu0 0.0
    %1362 = vmatprep.subr.mxu0 0.0
    %1363 = vmatpush1.msra.mxu0 0.0
    %1364 = vmatprep.subr.mxu0 0.0
    %1365 = vmatpush1.msra.mxu0 0.0
    %1366 = vmatprep.subr.mxu0 0.0
    %1367 = vmatpush1.msra.mxu0 0.0
    %1368 = vmatprep.subr.mxu0 0.0
    %1369 = vmatpush1.msra.mxu0 0.0
    %1370 = vmatprep.subr.mxu0 0.0
    %1371 = vmatpush1.msra.mxu0 0.0
    %1372 = vmatprep.subr.mxu0 0.0
    %1373 = vmatpush1.msra.mxu0 0.0
    %1374 = vmatprep.subr.mxu0 0.0
    %1375 = vmatpush1.msra.mxu0 0.0
    %1376 = vmatprep.subr.mxu0 0.0
    %1377 = vmatpush1.msra.mxu0 0.0
    %1378 = vmatprep.subr.mxu0 0.0
    %1379 = vmatpush1.msra.mxu0 0.0
    %1380 = vmatprep.subr.mxu0 0.0
    %1381 = vmatpush1.msra.mxu0 0.0
    %1382 = vmatprep.subr.mxu0 0.0
    %1383 = vmatpush1.msra.mxu0 0.0
    %1384 = vmatprep.subr.mxu0 0.0
    %1385 = vmatpush1.msra.mxu0 0.0
    %1386 = vmatprep.subr.mxu0 0.0
    %1387 = vmatpush1.msra.mxu0 0.0
    %1388 = vmatprep.subr.mxu0 0.0
    %1389 = vmatpush1.msra.mxu0 0.0
    %1390 = vmatprep.subr.mxu0 0.0
    %1391 = vmatpush1.msra.mxu0 0.0
    %1392 = vmatprep.subr.mxu0 0.0
    %1393 = vmatpush1.msra.mxu0 0.0
    %1394 = vmatprep.subr.mxu0 0.0
    %1395 = vmatpush1.msra.mxu0 0.0
    %1396 = vmatprep.subr.mxu0 0.0
    %1397 = vmatpush1.msra.mxu0 0.0
    %1398 = vmatprep.subr.mxu0 0.0
    %1399 = vmatpush1.msra.mxu0 0.0
    %1400 = vmatprep.subr.mxu0 0.0
    %1401 = vmatpush1.msra.mxu0 0.0
    %1402 = vmatprep.mubr.f32.mxu0 0.0
    %1403 = vmatmul.mubr.f32.gmra.mrb[0].mxu0 %v1336
    %v1404 = vpop.f32.mrb[0].mxu0
    %v1405 = vadd.f32 %v251, %v1404
    %v1406 = vpop.f32.mrb[0].mxu0
    %1407 = vdwg.mxu0
    %v1409 = vsel %vm312, %v39, 0
    %1411 = vmatprep.subr.mxu0 0.0
    %1412 = vmatpush1.msra.mxu0 %v108
    %1413 = vmatprep.subr.mxu0 0.0
    %1414 = vmatpush1.msra.mxu0 %v109
    %1415 = vmatprep.subr.mxu0 0.0
    %1416 = vmatpush1.msra.mxu0 %v110
    %1417 = vmatprep.subr.mxu0 0.0
    %1418 = vmatpush1.msra.mxu0 %v111
    %1419 = vmatprep.subr.mxu0 0.0
    %1420 = vmatpush1.msra.mxu0 0.0
    %1421 = vmatprep.subr.mxu0 0.0
    %1422 = vmatpush1.msra.mxu0 0.0
    %1423 = vmatprep.subr.mxu0 0.0
    %1424 = vmatpush1.msra.mxu0 0.0
    %1425 = vmatprep.subr.mxu0 0.0
    %1426 = vmatpush1.msra.mxu0 0.0
    %1427 = vmatprep.subr.mxu0 0.0
    %1428 = vmatpush1.msra.mxu0 0.0
    %1429 = vmatprep.subr.mxu0 0.0
    %1430 = vmatpush1.msra.mxu0 0.0
    %1431 = vmatprep.subr.mxu0 0.0
    %1432 = vmatpush1.msra.mxu0 0.0
    %1433 = vmatprep.subr.mxu0 0.0
    %1434 = vmatpush1.msra.mxu0 0.0
    %1435 = vmatprep.subr.mxu0 0.0
    %1436 = vmatpush1.msra.mxu0 0.0
    %1437 = vmatprep.subr.mxu0 0.0
    %1438 = vmatpush1.msra.mxu0 0.0
    %1439 = vmatprep.subr.mxu0 0.0
    %1440 = vmatpush1.msra.mxu0 0.0
    %1441 = vmatprep.subr.mxu0 0.0
    %1442 = vmatpush1.msra.mxu0 0.0
    %1443 = vmatprep.subr.mxu0 0.0
    %1444 = vmatpush1.msra.mxu0 0.0
    %1445 = vmatprep.subr.mxu0 0.0
    %1446 = vmatpush1.msra.mxu0 0.0
    %1447 = vmatprep.subr.mxu0 0.0
    %1448 = vmatpush1.msra.mxu0 0.0
    %1449 = vmatprep.subr.mxu0 0.0
    %1450 = vmatpush1.msra.mxu0 0.0
    %1451 = vmatprep.subr.mxu0 0.0
    %1452 = vmatpush1.msra.mxu0 0.0
    %1453 = vmatprep.subr.mxu0 0.0
    %1454 = vmatpush1.msra.mxu0 0.0
    %1455 = vmatprep.subr.mxu0 0.0
    %1456 = vmatpush1.msra.mxu0 0.0
    %1457 = vmatprep.subr.mxu0 0.0
    %1458 = vmatpush1.msra.mxu0 0.0
    %1459 = vmatprep.subr.mxu0 0.0
    %1460 = vmatpush1.msra.mxu0 0.0
    %1461 = vmatprep.subr.mxu0 0.0
    %1462 = vmatpush1.msra.mxu0 0.0
    %1463 = vmatprep.subr.mxu0 0.0
    %1464 = vmatpush1.msra.mxu0 0.0
    %1465 = vmatprep.subr.mxu0 0.0
    %1466 = vmatpush1.msra.mxu0 0.0
    %1467 = vmatprep.subr.mxu0 0.0
    %1468 = vmatpush1.msra.mxu0 0.0
    %1469 = vmatprep.subr.mxu0 0.0
    %1470 = vmatpush1.msra.mxu0 0.0
    %1471 = vmatprep.subr.mxu0 0.0
    %1472 = vmatpush1.msra.mxu0 0.0
    %1473 = vmatprep.subr.mxu0 0.0
    %1474 = vmatpush1.msra.mxu0 0.0
    %1475 = vmatprep.mubr.f32.mxu0 0.0
    %1476 = vmatmul.mubr.f32.gmra.mrb[0].mxu0 %v1409
    %v1477 = vpop.f32.mrb[0].mxu0
    %v1478 = vadd.f32 %v255, %v1477
    %v1479 = vpop.f32.mrb[0].mxu0
    %1480 = vdwg.mxu0
    %v1482 = vsel %vm312, %v40, 0
    %1484 = vmatprep.subr.mxu0 0.0
    %1485 = vmatpush1.msra.mxu0 %v112
    %1486 = vmatprep.subr.mxu0 0.0
    %1487 = vmatpush1.msra.mxu0 %v113
    %1488 = vmatprep.subr.mxu0 0.0
    %1489 = vmatpush1.msra.mxu0 %v114
    %1490 = vmatprep.subr.mxu0 0.0
    %1491 = vmatpush1.msra.mxu0 %v115
    %1492 = vmatprep.subr.mxu0 0.0
    %1493 = vmatpush1.msra.mxu0 0.0
    %1494 = vmatprep.subr.mxu0 0.0
    %1495 = vmatpush1.msra.mxu0 0.0
    %1496 = vmatprep.subr.mxu0 0.0
    %1497 = vmatpush1.msra.mxu0 0.0
    %1498 = vmatprep.subr.mxu0 0.0
    %1499 = vmatpush1.msra.mxu0 0.0
    %1500 = vmatprep.subr.mxu0 0.0
    %1501 = vmatpush1.msra.mxu0 0.0
    %1502 = vmatprep.subr.mxu0 0.0
    %1503 = vmatpush1.msra.mxu0 0.0
    %1504 = vmatprep.subr.mxu0 0.0
    %1505 = vmatpush1.msra.mxu0 0.0
    %1506 = vmatprep.subr.mxu0 0.0
    %1507 = vmatpush1.msra.mxu0 0.0
    %1508 = vmatprep.subr.mxu0 0.0
    %1509 = vmatpush1.msra.mxu0 0.0
    %1510 = vmatprep.subr.mxu0 0.0
    %1511 = vmatpush1.msra.mxu0 0.0
    %1512 = vmatprep.subr.mxu0 0.0
    %1513 = vmatpush1.msra.mxu0 0.0
    %1514 = vmatprep.subr.mxu0 0.0
    %1515 = vmatpush1.msra.mxu0 0.0
    %1516 = vmatprep.subr.mxu0 0.0
    %1517 = vmatpush1.msra.mxu0 0.0
    %1518 = vmatprep.subr.mxu0 0.0
    %1519 = vmatpush1.msra.mxu0 0.0
    %1520 = vmatprep.subr.mxu0 0.0
    %1521 = vmatpush1.msra.mxu0 0.0
    %1522 = vmatprep.subr.mxu0 0.0
    %1523 = vmatpush1.msra.mxu0 0.0
    %1524 = vmatprep.subr.mxu0 0.0
    %1525 = vmatpush1.msra.mxu0 0.0
    %1526 = vmatprep.subr.mxu0 0.0
    %1527 = vmatpush1.msra.mxu0 0.0
    %1528 = vmatprep.subr.mxu0 0.0
    %1529 = vmatpush1.msra.mxu0 0.0
    %1530 = vmatprep.subr.mxu0 0.0
    %1531 = vmatpush1.msra.mxu0 0.0
    %1532 = vmatprep.subr.mxu0 0.0
    %1533 = vmatpush1.msra.mxu0 0.0
    %1534 = vmatprep.subr.mxu0 0.0
    %1535 = vmatpush1.msra.mxu0 0.0
    %1536 = vmatprep.subr.mxu0 0.0
    %1537 = vmatpush1.msra.mxu0 0.0
    %1538 = vmatprep.subr.mxu0 0.0
    %1539 = vmatpush1.msra.mxu0 0.0
    %1540 = vmatprep.subr.mxu0 0.0
    %1541 = vmatpush1.msra.mxu0 0.0
    %1542 = vmatprep.subr.mxu0 0.0
    %1543 = vmatpush1.msra.mxu0 0.0
    %1544 = vmatprep.subr.mxu0 0.0
    %1545 = vmatpush1.msra.mxu0 0.0
    %1546 = vmatprep.subr.mxu0 0.0
    %1547 = vmatpush1.msra.mxu0 0.0
    %1548 = vmatprep.mubr.f32.mxu0 0.0
    %1549 = vmatmul.mubr.f32.gmra.mrb[0].mxu0 %v1482
    %v1550 = vpop.f32.mrb[0].mxu0
    %v1551 = vadd.f32 %v259, %v1550
    %v1552 = vpop.f32.mrb[0].mxu0
    %1553 = vdwg.mxu0
    %v1555 = vsel %vm312, %v41, 0
    %1557 = vmatprep.subr.mxu0 0.0
    %1558 = vmatpush1.msra.mxu0 %v116
    %1559 = vmatprep.subr.mxu0 0.0
    %1560 = vmatpush1.msra.mxu0 %v117
    %1561 = vmatprep.subr.mxu0 0.0
    %1562 = vmatpush1.msra.mxu0 %v118
    %1563 = vmatprep.subr.mxu0 0.0
    %1564 = vmatpush1.msra.mxu0 %v119
    %1565 = vmatprep.subr.mxu0 0.0
    %1566 = vmatpush1.msra.mxu0 0.0
    %1567 = vmatprep.subr.mxu0 0.0
    %1568 = vmatpush1.msra.mxu0 0.0
    %1569 = vmatprep.subr.mxu0 0.0
    %1570 = vmatpush1.msra.mxu0 0.0
    %1571 = vmatprep.subr.mxu0 0.0
    %1572 = vmatpush1.msra.mxu0 0.0
    %1573 = vmatprep.subr.mxu0 0.0
    %1574 = vmatpush1.msra.mxu0 0.0
    %1575 = vmatprep.subr.mxu0 0.0
    %1576 = vmatpush1.msra.mxu0 0.0
    %1577 = vmatprep.subr.mxu0 0.0
    %1578 = vmatpush1.msra.mxu0 0.0
    %1579 = vmatprep.subr.mxu0 0.0
    %1580 = vmatpush1.msra.mxu0 0.0
    %1581 = vmatprep.subr.mxu0 0.0
    %1582 = vmatpush1.msra.mxu0 0.0
    %1583 = vmatprep.subr.mxu0 0.0
    %1584 = vmatpush1.msra.mxu0 0.0
    %1585 = vmatprep.subr.mxu0 0.0
    %1586 = vmatpush1.msra.mxu0 0.0
    %1587 = vmatprep.subr.mxu0 0.0
    %1588 = vmatpush1.msra.mxu0 0.0
    %1589 = vmatprep.subr.mxu0 0.0
    %1590 = vmatpush1.msra.mxu0 0.0
    %1591 = vmatprep.subr.mxu0 0.0
    %1592 = vmatpush1.msra.mxu0 0.0
    %1593 = vmatprep.subr.mxu0 0.0
    %1594 = vmatpush1.msra.mxu0 0.0
    %1595 = vmatprep.subr.mxu0 0.0
    %1596 = vmatpush1.msra.mxu0 0.0
    %1597 = vmatprep.subr.mxu0 0.0
    %1598 = vmatpush1.msra.mxu0 0.0
    %1599 = vmatprep.subr.mxu0 0.0
    %1600 = vmatpush1.msra.mxu0 0.0
    %1601 = vmatprep.subr.mxu0 0.0
    %1602 = vmatpush1.msra.mxu0 0.0
    %1603 = vmatprep.subr.mxu0 0.0
    %1604 = vmatpush1.msra.mxu0 0.0
    %1605 = vmatprep.subr.mxu0 0.0
    %1606 = vmatpush1.msra.mxu0 0.0
    %1607 = vmatprep.subr.mxu0 0.0
    %1608 = vmatpush1.msra.mxu0 0.0
    %1609 = vmatprep.subr.mxu0 0.0
    %1610 = vmatpush1.msra.mxu0 0.0
    %1611 = vmatprep.subr.mxu0 0.0
    %1612 = vmatpush1.msra.mxu0 0.0
    %1613 = vmatprep.subr.mxu0 0.0
    %1614 = vmatpush1.msra.mxu0 0.0
    %1615 = vmatprep.subr.mxu0 0.0
    %1616 = vmatpush1.msra.mxu0 0.0
    %1617 = vmatprep.subr.mxu0 0.0
    %1618 = vmatpush1.msra.mxu0 0.0
    %1619 = vmatprep.subr.mxu0 0.0
    %1620 = vmatpush1.msra.mxu0 0.0
    %1621 = vmatprep.mubr.f32.mxu0 0.0
    %1622 = vmatmul.mubr.f32.gmra.mrb[0].mxu0 %v1555
    %v1623 = vpop.f32.mrb[0].mxu0
    %v1624 = vadd.f32 %v263, %v1623
    %v1625 = vpop.f32.mrb[0].mxu0
    %1626 = vdwg.mxu0
    %v1628 = vsel %vm312, %v42, 0
    %1630 = vmatprep.subr.mxu0 0.0
    %1631 = vmatpush1.msra.mxu0 %v120
    %1632 = vmatprep.subr.mxu0 0.0
    %1633 = vmatpush1.msra.mxu0 %v121
    %1634 = vmatprep.subr.mxu0 0.0
    %1635 = vmatpush1.msra.mxu0 %v122
    %1636 = vmatprep.subr.mxu0 0.0
    %1637 = vmatpush1.msra.mxu0 %v123
    %1638 = vmatprep.subr.mxu0 0.0
    %1639 = vmatpush1.msra.mxu0 0.0
    %1640 = vmatprep.subr.mxu0 0.0
    %1641 = vmatpush1.msra.mxu0 0.0
    %1642 = vmatprep.subr.mxu0 0.0
    %1643 = vmatpush1.msra.mxu0 0.0
    %1644 = vmatprep.subr.mxu0 0.0
    %1645 = vmatpush1.msra.mxu0 0.0
    %1646 = vmatprep.subr.mxu0 0.0
    %1647 = vmatpush1.msra.mxu0 0.0
    %1648 = vmatprep.subr.mxu0 0.0
    %1649 = vmatpush1.msra.mxu0 0.0
    %1650 = vmatprep.subr.mxu0 0.0
    %1651 = vmatpush1.msra.mxu0 0.0
    %1652 = vmatprep.subr.mxu0 0.0
    %1653 = vmatpush1.msra.mxu0 0.0
    %1654 = vmatprep.subr.mxu0 0.0
    %1655 = vmatpush1.msra.mxu0 0.0
    %1656 = vmatprep.subr.mxu0 0.0
    %1657 = vmatpush1.msra.mxu0 0.0
    %1658 = vmatprep.subr.mxu0 0.0
    %1659 = vmatpush1.msra.mxu0 0.0
    %1660 = vmatprep.subr.mxu0 0.0
    %1661 = vmatpush1.msra.mxu0 0.0
    %1662 = vmatprep.subr.mxu0 0.0
    %1663 = vmatpush1.msra.mxu0 0.0
    %1664 = vmatprep.subr.mxu0 0.0
    %1665 = vmatpush1.msra.mxu0 0.0
    %1666 = vmatprep.subr.mxu0 0.0
    %1667 = vmatpush1.msra.mxu0 0.0
    %1668 = vmatprep.subr.mxu0 0.0
    %1669 = vmatpush1.msra.mxu0 0.0
    %1670 = vmatprep.subr.mxu0 0.0
    %1671 = vmatpush1.msra.mxu0 0.0
    %1672 = vmatprep.subr.mxu0 0.0
    %1673 = vmatpush1.msra.mxu0 0.0
    %1674 = vmatprep.subr.mxu0 0.0
    %1675 = vmatpush1.msra.mxu0 0.0
    %1676 = vmatprep.subr.mxu0 0.0
    %1677 = vmatpush1.msra.mxu0 0.0
    %1678 = vmatprep.subr.mxu0 0.0
    %1679 = vmatpush1.msra.mxu0 0.0
    %1680 = vmatprep.subr.mxu0 0.0
    %1681 = vmatpush1.msra.mxu0 0.0
    %1682 = vmatprep.subr.mxu0 0.0
    %1683 = vmatpush1.msra.mxu0 0.0
    %1684 = vmatprep.subr.mxu0 0.0
    %1685 = vmatpush1.msra.mxu0 0.0
    %1686 = vmatprep.subr.mxu0 0.0
    %1687 = vmatpush1.msra.mxu0 0.0
    %1688 = vmatprep.subr.mxu0 0.0
    %1689 = vmatpush1.msra.mxu0 0.0
    %1690 = vmatprep.subr.mxu0 0.0
    %1691 = vmatpush1.msra.mxu0 0.0
    %1692 = vmatprep.subr.mxu0 0.0
    %1693 = vmatpush1.msra.mxu0 0.0
    %1694 = vmatprep.mubr.f32.mxu0 0.0
    %1695 = vmatmul.mubr.f32.gmra.mrb[0].mxu0 %v1628
    %v1696 = vpop.f32.mrb[0].mxu0
    %v1697 = vadd.f32 %v267, %v1696
    %v1698 = vpop.f32.mrb[0].mxu0
    %1699 = vdwg.mxu0
    %v1701 = vsel %vm312, %v43, 0
    %1703 = vmatprep.subr.mxu0 0.0
    %1704 = vmatpush1.msra.mxu0 %v124
    %1705 = vmatprep.subr.mxu0 0.0
    %1706 = vmatpush1.msra.mxu0 %v125
    %1707 = vmatprep.subr.mxu0 0.0
    %1708 = vmatpush1.msra.mxu0 %v126
    %1709 = vmatprep.subr.mxu0 0.0
    %1710 = vmatpush1.msra.mxu0 %v127
    %1711 = vmatprep.subr.mxu0 0.0
    %1712 = vmatpush1.msra.mxu0 0.0
    %1713 = vmatprep.subr.mxu0 0.0
    %1714 = vmatpush1.msra.mxu0 0.0
    %1715 = vmatprep.subr.mxu0 0.0
    %1716 = vmatpush1.msra.mxu0 0.0
    %1717 = vmatprep.subr.mxu0 0.0
    %1718 = vmatpush1.msra.mxu0 0.0
    %1719 = vmatprep.subr.mxu0 0.0
    %1720 = vmatpush1.msra.mxu0 0.0
    %1721 = vmatprep.subr.mxu0 0.0
    %1722 = vmatpush1.msra.mxu0 0.0
    %1723 = vmatprep.subr.mxu0 0.0
    %1724 = vmatpush1.msra.mxu0 0.0
    %1725 = vmatprep.subr.mxu0 0.0
    %1726 = vmatpush1.msra.mxu0 0.0
    %1727 = vmatprep.subr.mxu0 0.0
    %1728 = vmatpush1.msra.mxu0 0.0
    %1729 = vmatprep.subr.mxu0 0.0
    %1730 = vmatpush1.msra.mxu0 0.0
    %1731 = vmatprep.subr.mxu0 0.0
    %1732 = vmatpush1.msra.mxu0 0.0
    %1733 = vmatprep.subr.mxu0 0.0
    %1734 = vmatpush1.msra.mxu0 0.0
    %1735 = vmatprep.subr.mxu0 0.0
    %1736 = vmatpush1.msra.mxu0 0.0
    %1737 = vmatprep.subr.mxu0 0.0
    %1738 = vmatpush1.msra.mxu0 0.0
    %1739 = vmatprep.subr.mxu0 0.0
    %1740 = vmatpush1.msra.mxu0 0.0
    %1741 = vmatprep.subr.mxu0 0.0
    %1742 = vmatpush1.msra.mxu0 0.0
    %1743 = vmatprep.subr.mxu0 0.0
    %1744 = vmatpush1.msra.mxu0 0.0
    %1745 = vmatprep.subr.mxu0 0.0
    %1746 = vmatpush1.msra.mxu0 0.0
    %1747 = vmatprep.subr.mxu0 0.0
    %1748 = vmatpush1.msra.mxu0 0.0
    %1749 = vmatprep.subr.mxu0 0.0
    %1750 = vmatpush1.msra.mxu0 0.0
    %1751 = vmatprep.subr.mxu0 0.0
    %1752 = vmatpush1.msra.mxu0 0.0
    %1753 = vmatprep.subr.mxu0 0.0
    %1754 = vmatpush1.msra.mxu0 0.0
    %1755 = vmatprep.subr.mxu0 0.0
    %1756 = vmatpush1.msra.mxu0 0.0
    %1757 = vmatprep.subr.mxu0 0.0
    %1758 = vmatpush1.msra.mxu0 0.0
    %1759 = vmatprep.subr.mxu0 0.0
    %1760 = vmatpush1.msra.mxu0 0.0
    %1761 = vmatprep.subr.mxu0 0.0
    %1762 = vmatpush1.msra.mxu0 0.0
    %1763 = vmatprep.subr.mxu0 0.0
    %1764 = vmatpush1.msra.mxu0 0.0
    %1765 = vmatprep.subr.mxu0 0.0
    %1766 = vmatpush1.msra.mxu0 0.0
    %1767 = vmatprep.mubr.f32.mxu0 0.0
    %1768 = vmatmul.mubr.f32.gmra.mrb[0].mxu0 %v1701
    %v1769 = vpop.f32.mrb[0].mxu0
    %v1770 = vadd.f32 %v271, %v1769
    %v1771 = vpop.f32.mrb[0].mxu0
    %1772 = vdwg.mxu0
    %v1774 = vsel %vm312, %v44, 0
    %1776 = vmatprep.subr.mxu0 0.0
    %1777 = vmatpush1.msra.mxu0 %v128
    %1778 = vmatprep.subr.mxu0 0.0
    %1779 = vmatpush1.msra.mxu0 %v129
    %1780 = vmatprep.subr.mxu0 0.0
    %1781 = vmatpush1.msra.mxu0 %v130
    %1782 = vmatprep.subr.mxu0 0.0
    %1783 = vmatpush1.msra.mxu0 %v131
    %1784 = vmatprep.subr.mxu0 0.0
    %1785 = vmatpush1.msra.mxu0 0.0
    %1786 = vmatprep.subr.mxu0 0.0
    %1787 = vmatpush1.msra.mxu0 0.0
    %1788 = vmatprep.subr.mxu0 0.0
    %1789 = vmatpush1.msra.mxu0 0.0
    %1790 = vmatprep.subr.mxu0 0.0
    %1791 = vmatpush1.msra.mxu0 0.0
    %1792 = vmatprep.subr.mxu0 0.0
    %1793 = vmatpush1.msra.mxu0 0.0
    %1794 = vmatprep.subr.mxu0 0.0
    %1795 = vmatpush1.msra.mxu0 0.0
    %1796 = vmatprep.subr.mxu0 0.0
    %1797 = vmatpush1.msra.mxu0 0.0
    %1798 = vmatprep.subr.mxu0 0.0
    %1799 = vmatpush1.msra.mxu0 0.0
    %1800 = vmatprep.subr.mxu0 0.0
    %1801 = vmatpush1.msra.mxu0 0.0
    %1802 = vmatprep.subr.mxu0 0.0
    %1803 = vmatpush1.msra.mxu0 0.0
    %1804 = vmatprep.subr.mxu0 0.0
    %1805 = vmatpush1.msra.mxu0 0.0
    %1806 = vmatprep.subr.mxu0 0.0
    %1807 = vmatpush1.msra.mxu0 0.0
    %1808 = vmatprep.subr.mxu0 0.0
    %1809 = vmatpush1.msra.mxu0 0.0
    %1810 = vmatprep.subr.mxu0 0.0
    %1811 = vmatpush1.msra.mxu0 0.0
    %1812 = vmatprep.subr.mxu0 0.0
    %1813 = vmatpush1.msra.mxu0 0.0
    %1814 = vmatprep.subr.mxu0 0.0
    %1815 = vmatpush1.msra.mxu0 0.0
    %1816 = vmatprep.subr.mxu0 0.0
    %1817 = vmatpush1.msra.mxu0 0.0
    %1818 = vmatprep.subr.mxu0 0.0
    %1819 = vmatpush1.msra.mxu0 0.0
    %1820 = vmatprep.subr.mxu0 0.0
    %1821 = vmatpush1.msra.mxu0 0.0
    %1822 = vmatprep.subr.mxu0 0.0
    %1823 = vmatpush1.msra.mxu0 0.0
    %1824 = vmatprep.subr.mxu0 0.0
    %1825 = vmatpush1.msra.mxu0 0.0
    %1826 = vmatprep.subr.mxu0 0.0
    %1827 = vmatpush1.msra.mxu0 0.0
    %1828 = vmatprep.subr.mxu0 0.0
    %1829 = vmatpush1.msra.mxu0 0.0
    %1830 = vmatprep.subr.mxu0 0.0
    %1831 = vmatpush1.msra.mxu0 0.0
    %1832 = vmatprep.subr.mxu0 0.0
    %1833 = vmatpush1.msra.mxu0 0.0
    %1834 = vmatprep.subr.mxu0 0.0
    %1835 = vmatpush1.msra.mxu0 0.0
    %1836 = vmatprep.subr.mxu0 0.0
    %1837 = vmatpush1.msra.mxu0 0.0
    %1838 = vmatprep.subr.mxu0 0.0
    %1839 = vmatpush1.msra.mxu0 0.0
    %1840 = vmatprep.mubr.f32.mxu0 0.0
    %1841 = vmatmul.mubr.f32.gmra.mrb[0].mxu0 %v1774
    %v1842 = vpop.f32.mrb[0].mxu0
    %v1843 = vadd.f32 %v275, %v1842
    %v1844 = vpop.f32.mrb[0].mxu0
    %1845 = vdwg.mxu0
    %v1847 = vsel %vm312, %v45, 0
    %1849 = vmatprep.subr.mxu0 0.0
    %1850 = vmatpush1.msra.mxu0 %v132
    %1851 = vmatprep.subr.mxu0 0.0
    %1852 = vmatpush1.msra.mxu0 %v133
    %1853 = vmatprep.subr.mxu0 0.0
    %1854 = vmatpush1.msra.mxu0 %v134
    %1855 = vmatprep.subr.mxu0 0.0
    %1856 = vmatpush1.msra.mxu0 %v135
    %1857 = vmatprep.subr.mxu0 0.0
    %1858 = vmatpush1.msra.mxu0 0.0
    %1859 = vmatprep.subr.mxu0 0.0
    %1860 = vmatpush1.msra.mxu0 0.0
    %1861 = vmatprep.subr.mxu0 0.0
    %1862 = vmatpush1.msra.mxu0 0.0
    %1863 = vmatprep.subr.mxu0 0.0
    %1864 = vmatpush1.msra.mxu0 0.0
    %1865 = vmatprep.subr.mxu0 0.0
    %1866 = vmatpush1.msra.mxu0 0.0
    %1867 = vmatprep.subr.mxu0 0.0
    %1868 = vmatpush1.msra.mxu0 0.0
    %1869 = vmatprep.subr.mxu0 0.0
    %1870 = vmatpush1.msra.mxu0 0.0
    %1871 = vmatprep.subr.mxu0 0.0
    %1872 = vmatpush1.msra.mxu0 0.0
    %1873 = vmatprep.subr.mxu0 0.0
    %1874 = vmatpush1.msra.mxu0 0.0
    %1875 = vmatprep.subr.mxu0 0.0
    %1876 = vmatpush1.msra.mxu0 0.0
    %1877 = vmatprep.subr.mxu0 0.0
    %1878 = vmatpush1.msra.mxu0 0.0
    %1879 = vmatprep.subr.mxu0 0.0
    %1880 = vmatpush1.msra.mxu0 0.0
    %1881 = vmatprep.subr.mxu0 0.0
    %1882 = vmatpush1.msra.mxu0 0.0
    %1883 = vmatprep.subr.mxu0 0.0
    %1884 = vmatpush1.msra.mxu0 0.0
    %1885 = vmatprep.subr.mxu0 0.0
    %1886 = vmatpush1.msra.mxu0 0.0
    %1887 = vmatprep.subr.mxu0 0.0
    %1888 = vmatpush1.msra.mxu0 0.0
    %1889 = vmatprep.subr.mxu0 0.0
    %1890 = vmatpush1.msra.mxu0 0.0
    %1891 = vmatprep.subr.mxu0 0.0
    %1892 = vmatpush1.msra.mxu0 0.0
    %1893 = vmatprep.subr.mxu0 0.0
    %1894 = vmatpush1.msra.mxu0 0.0
    %1895 = vmatprep.subr.mxu0 0.0
    %1896 = vmatpush1.msra.mxu0 0.0
    %1897 = vmatprep.subr.mxu0 0.0
    %1898 = vmatpush1.msra.mxu0 0.0
    %1899 = vmatprep.subr.mxu0 0.0
    %1900 = vmatpush1.msra.mxu0 0.0
    %1901 = vmatprep.subr.mxu0 0.0
    %1902 = vmatpush1.msra.mxu0 0.0
    %1903 = vmatprep.subr.mxu0 0.0
    %1904 = vmatpush1.msra.mxu0 0.0
    %1905 = vmatprep.subr.mxu0 0.0
    %1906 = vmatpush1.msra.mxu0 0.0
    %1907 = vmatprep.subr.mxu0 0.0
    %1908 = vmatpush1.msra.mxu0 0.0
    %1909 = vmatprep.subr.mxu0 0.0
    %1910 = vmatpush1.msra.mxu0 0.0
    %1911 = vmatprep.subr.mxu0 0.0
    %1912 = vmatpush1.msra.mxu0 0.0
    %1913 = vmatprep.mubr.f32.mxu0 0.0
    %1914 = vmatmul.mubr.f32.gmra.mrb[0].mxu0 %v1847
    %v1915 = vpop.f32.mrb[0].mxu0
    %v1916 = vadd.f32 %v279, %v1915
    %v1917 = vpop.f32.mrb[0].mxu0
    %1918 = vdwg.mxu0
    %v1920 = vsel %vm312, %v46, 0
    %1922 = vmatprep.subr.mxu0 0.0
    %1923 = vmatpush1.msra.mxu0 %v136
    %1924 = vmatprep.subr.mxu0 0.0
    %1925 = vmatpush1.msra.mxu0 %v137
    %1926 = vmatprep.subr.mxu0 0.0
    %1927 = vmatpush1.msra.mxu0 %v138
    %1928 = vmatprep.subr.mxu0 0.0
    %1929 = vmatpush1.msra.mxu0 %v139
    %1930 = vmatprep.subr.mxu0 0.0
    %1931 = vmatpush1.msra.mxu0 0.0
    %1932 = vmatprep.subr.mxu0 0.0
    %1933 = vmatpush1.msra.mxu0 0.0
    %1934 = vmatprep.subr.mxu0 0.0
    %1935 = vmatpush1.msra.mxu0 0.0
    %1936 = vmatprep.subr.mxu0 0.0
    %1937 = vmatpush1.msra.mxu0 0.0
    %1938 = vmatprep.subr.mxu0 0.0
    %1939 = vmatpush1.msra.mxu0 0.0
    %1940 = vmatprep.subr.mxu0 0.0
    %1941 = vmatpush1.msra.mxu0 0.0
    %1942 = vmatprep.subr.mxu0 0.0
    %1943 = vmatpush1.msra.mxu0 0.0
    %1944 = vmatprep.subr.mxu0 0.0
    %1945 = vmatpush1.msra.mxu0 0.0
    %1946 = vmatprep.subr.mxu0 0.0
    %1947 = vmatpush1.msra.mxu0 0.0
    %1948 = vmatprep.subr.mxu0 0.0
    %1949 = vmatpush1.msra.mxu0 0.0
    %1950 = vmatprep.subr.mxu0 0.0
    %1951 = vmatpush1.msra.mxu0 0.0
    %1952 = vmatprep.subr.mxu0 0.0
    %1953 = vmatpush1.msra.mxu0 0.0
    %1954 = vmatprep.subr.mxu0 0.0
    %1955 = vmatpush1.msra.mxu0 0.0
    %1956 = vmatprep.subr.mxu0 0.0
    %1957 = vmatpush1.msra.mxu0 0.0
    %1958 = vmatprep.subr.mxu0 0.0
    %1959 = vmatpush1.msra.mxu0 0.0
    %1960 = vmatprep.subr.mxu0 0.0
    %1961 = vmatpush1.msra.mxu0 0.0
    %1962 = vmatprep.subr.mxu0 0.0
    %1963 = vmatpush1.msra.mxu0 0.0
    %1964 = vmatprep.subr.mxu0 0.0
    %1965 = vmatpush1.msra.mxu0 0.0
    %1966 = vmatprep.subr.mxu0 0.0
    %1967 = vmatpush1.msra.mxu0 0.0
    %1968 = vmatprep.subr.mxu0 0.0
    %1969 = vmatpush1.msra.mxu0 0.0
    %1970 = vmatprep.subr.mxu0 0.0
    %1971 = vmatpush1.msra.mxu0 0.0
    %1972 = vmatprep.subr.mxu0 0.0
    %1973 = vmatpush1.msra.mxu0 0.0
    %1974 = vmatprep.subr.mxu0 0.0
    %1975 = vmatpush1.msra.mxu0 0.0
    %1976 = vmatprep.subr.mxu0 0.0
    %1977 = vmatpush1.msra.mxu0 0.0
    %1978 = vmatprep.subr.mxu0 0.0
    %1979 = vmatpush1.msra.mxu0 0.0
    %1980 = vmatprep.subr.mxu0 0.0
    %1981 = vmatpush1.msra.mxu0 0.0
    %1982 = vmatprep.subr.mxu0 0.0
    %1983 = vmatpush1.msra.mxu0 0.0
    %1984 = vmatprep.subr.mxu0 0.0
    %1985 = vmatpush1.msra.mxu0 0.0
    %1986 = vmatprep.mubr.f32.mxu0 0.0
    %1987 = vmatmul.mubr.f32.gmra.mrb[0].mxu0 %v1920
    %v1988 = vpop.f32.mrb[0].mxu0
    %v1989 = vadd.f32 %v283, %v1988
    %v1990 = vpop.f32.mrb[0].mxu0
    %1991 = vdwg.mxu0
    %v1993 = vsel %vm312, %v47, 0
    %1995 = vmatprep.subr.mxu0 0.0
    %1996 = vmatpush1.msra.mxu0 %v140
    %1997 = vmatprep.subr.mxu0 0.0
    %1998 = vmatpush1.msra.mxu0 %v141
    %1999 = vmatprep.subr.mxu0 0.0
    %2000 = vmatpush1.msra.mxu0 %v142
    %2001 = vmatprep.subr.mxu0 0.0
    %2002 = vmatpush1.msra.mxu0 %v143
    %2003 = vmatprep.subr.mxu0 0.0
    %2004 = vmatpush1.msra.mxu0 0.0
    %2005 = vmatprep.subr.mxu0 0.0
    %2006 = vmatpush1.msra.mxu0 0.0
    %2007 = vmatprep.subr.mxu0 0.0
    %2008 = vmatpush1.msra.mxu0 0.0
    %2009 = vmatprep.subr.mxu0 0.0
    %2010 = vmatpush1.msra.mxu0 0.0
    %2011 = vmatprep.subr.mxu0 0.0
    %2012 = vmatpush1.msra.mxu0 0.0
    %2013 = vmatprep.subr.mxu0 0.0
    %2014 = vmatpush1.msra.mxu0 0.0
    %2015 = vmatprep.subr.mxu0 0.0
    %2016 = vmatpush1.msra.mxu0 0.0
    %2017 = vmatprep.subr.mxu0 0.0
    %2018 = vmatpush1.msra.mxu0 0.0
    %2019 = vmatprep.subr.mxu0 0.0
    %2020 = vmatpush1.msra.mxu0 0.0
    %2021 = vmatprep.subr.mxu0 0.0
    %2022 = vmatpush1.msra.mxu0 0.0
    %2023 = vmatprep.subr.mxu0 0.0
    %2024 = vmatpush1.msra.mxu0 0.0
    %2025 = vmatprep.subr.mxu0 0.0
    %2026 = vmatpush1.msra.mxu0 0.0
    %2027 = vmatprep.subr.mxu0 0.0
    %2028 = vmatpush1.msra.mxu0 0.0
    %2029 = vmatprep.subr.mxu0 0.0
    %2030 = vmatpush1.msra.mxu0 0.0
    %2031 = vmatprep.subr.mxu0 0.0
    %2032 = vmatpush1.msra.mxu0 0.0
    %2033 = vmatprep.subr.mxu0 0.0
    %2034 = vmatpush1.msra.mxu0 0.0
    %2035 = vmatprep.subr.mxu0 0.0
    %2036 = vmatpush1.msra.mxu0 0.0
    %2037 = vmatprep.subr.mxu0 0.0
    %2038 = vmatpush1.msra.mxu0 0.0
    %2039 = vmatprep.subr.mxu0 0.0
    %2040 = vmatpush1.msra.mxu0 0.0
    %2041 = vmatprep.subr.mxu0 0.0
    %2042 = vmatpush1.msra.mxu0 0.0
    %2043 = vmatprep.subr.mxu0 0.0
    %2044 = vmatpush1.msra.mxu0 0.0
    %2045 = vmatprep.subr.mxu0 0.0
    %2046 = vmatpush1.msra.mxu0 0.0
    %2047 = vmatprep.subr.mxu0 0.0
    %2048 = vmatpush1.msra.mxu0 0.0
    %2049 = vmatprep.subr.mxu0 0.0
    %2050 = vmatpush1.msra.mxu0 0.0
    %2051 = vmatprep.subr.mxu0 0.0
    %2052 = vmatpush1.msra.mxu0 0.0
    %2053 = vmatprep.subr.mxu0 0.0
    %2054 = vmatpush1.msra.mxu0 0.0
    %2055 = vmatprep.subr.mxu0 0.0
    %2056 = vmatpush1.msra.mxu0 0.0
    %2057 = vmatprep.subr.mxu0 0.0
    %2058 = vmatpush1.msra.mxu0 0.0
    %2059 = vmatprep.mubr.f32.mxu0 0.0
    %2060 = vmatmul.mubr.f32.gmra.mrb[0].mxu0 %v1993
    %v2061 = vpop.f32.mrb[0].mxu0
    %v2062 = vadd.f32 %v287, %v2061
    %v2063 = vpop.f32.mrb[0].mxu0
    %2064 = vdwg.mxu0
    %v2065 = vld [vmem:[%s1] sm:$0xff]
    %v2066 = vld [vmem:[%s1 + $0x8] sm:$0xff]
    %v2067 = vld [vmem:[%s1 + $0x10] sm:$0xff]
    %v2068 = vld [vmem:[%s1 + $0x18] sm:$0xff]
    %v2069 = vld [vmem:[%s1 + $0x20] sm:$0xff]
    %v2070 = vld [vmem:[%s1 + $0x28] sm:$0xff]
    %v2071 = vld [vmem:[%s1 + $0x30] sm:$0xff]
    %v2072 = vld [vmem:[%s1 + $0x38] sm:$0xff]
    %vm2073 = vcmask 64512
    %v2075 = vsel %vm2073, %v383, 0
    %v2078 = vsel %vm2073, %v967, 0
    %2080 = vmatprep.subr.mxu0 0.0
    %2081 = vmatpush1.xpose.msra.mxu0 %v2078
    %2082 = vmatprep.subr.mxu0 0.0
    %2083 = vmatpush1.xpose.msra.mxu0 0.0
    %2084 = vmatprep.subr.mxu0 0.0
    %2085 = vmatpush1.xpose.msra.mxu0 0.0
    %2086 = vmatprep.subr.mxu0 0.0
    %2087 = vmatpush1.xpose.msra.mxu0 0.0
    %2088 = vmatprep.subr.mxu0 0.0
    %2089 = vmatpush1.xpose.msra.mxu0 0.0
    %2090 = vmatprep.subr.mxu0 0.0
    %2091 = vmatpush1.xpose.msra.mxu0 0.0
    %2092 = vmatprep.subr.mxu0 0.0
    %2093 = vmatpush1.xpose.msra.mxu0 0.0
    %2094 = vmatprep.subr.mxu0 0.0
    %2095 = vmatpush1.xpose.msra.mxu0 0.0
    %2096 = vmatprep.subr.mxu0 0.0
    %2097 = vmatpush1.xpose.msra.mxu0 0.0
    %2098 = vmatprep.subr.mxu0 0.0
    %2099 = vmatpush1.xpose.msra.mxu0 0.0
    %2100 = vmatprep.subr.mxu0 0.0
    %2101 = vmatpush1.xpose.msra.mxu0 0.0
    %2102 = vmatprep.subr.mxu0 0.0
    %2103 = vmatpush1.xpose.msra.mxu0 0.0
    %2104 = vmatprep.subr.mxu0 0.0
    %2105 = vmatpush1.xpose.msra.mxu0 0.0
    %2106 = vmatprep.subr.mxu0 0.0
    %2107 = vmatpush1.xpose.msra.mxu0 0.0
    %2108 = vmatprep.subr.mxu0 0.0
    %2109 = vmatpush1.xpose.msra.mxu0 0.0
    %2110 = vmatprep.subr.mxu0 0.0
    %2111 = vmatpush1.xpose.msra.mxu0 0.0
    %2112 = vmatprep.subr.mxu0 0.0
    %2113 = vmatpush1.xpose.msra.mxu0 0.0
    %2114 = vmatprep.subr.mxu0 0.0
    %2115 = vmatpush1.xpose.msra.mxu0 0.0
    %2116 = vmatprep.subr.mxu0 0.0
    %2117 = vmatpush1.xpose.msra.mxu0 0.0
    %2118 = vmatprep.subr.mxu0 0.0
    %2119 = vmatpush1.xpose.msra.mxu0 0.0
    %2120 = vmatprep.subr.mxu0 0.0
    %2121 = vmatpush1.xpose.msra.mxu0 0.0
    %2122 = vmatprep.subr.mxu0 0.0
    %2123 = vmatpush1.xpose.msra.mxu0 0.0
    %2124 = vmatprep.subr.mxu0 0.0
    %2125 = vmatpush1.xpose.msra.mxu0 0.0
    %2126 = vmatprep.subr.mxu0 0.0
    %2127 = vmatpush1.xpose.msra.mxu0 0.0
    %2128 = vmatprep.subr.mxu0 0.0
    %2129 = vmatpush1.xpose.msra.mxu0 0.0
    %2130 = vmatprep.subr.mxu0 0.0
    %2131 = vmatpush1.xpose.msra.mxu0 0.0
    %2132 = vmatprep.subr.mxu0 0.0
    %2133 = vmatpush1.xpose.msra.mxu0 0.0
    %2134 = vmatprep.subr.mxu0 0.0
    %2135 = vmatpush1.xpose.msra.mxu0 0.0
    %2136 = vmatprep.subr.mxu0 0.0
    %2137 = vmatpush1.xpose.msra.mxu0 0.0
    %2138 = vmatprep.subr.mxu0 0.0
    %2139 = vmatpush1.xpose.msra.mxu0 0.0
    %2140 = vmatprep.subr.mxu0 0.0
    %2141 = vmatpush1.xpose.msra.mxu0 0.0
    %2142 = vmatprep.subr.mxu0 0.0
    %2143 = vmatpush1.xpose.msra.mxu0 0.0
    %2144 = vmatprep.mubr.f32.mxu0 0.0
    %2145 = vmatmul.mubr.f32.gmra.mrb[0].mxu0 %v2075
    %v2146 = vpop.f32.mrb[0].mxu0
    %v2147 = vadd.f32 %v2065, %v2146
    %v2148 = vpop.f32.mrb[0].mxu0
    %2149 = vdwg.mxu0
    %v2151 = vsel %vm2073, %v456, 0
    %v2154 = vsel %vm2073, %v1040, 0
    %2156 = vmatprep.subr.mxu0 0.0
    %2157 = vmatpush1.xpose.msra.mxu0 %v2154
    %2158 = vmatprep.subr.mxu0 0.0
    %2159 = vmatpush1.xpose.msra.mxu0 0.0
    %2160 = vmatprep.subr.mxu0 0.0
    %2161 = vmatpush1.xpose.msra.mxu0 0.0
    %2162 = vmatprep.subr.mxu0 0.0
    %2163 = vmatpush1.xpose.msra.mxu0 0.0
    %2164 = vmatprep.subr.mxu0 0.0
    %2165 = vmatpush1.xpose.msra.mxu0 0.0
    %2166 = vmatprep.subr.mxu0 0.0
    %2167 = vmatpush1.xpose.msra.mxu0 0.0
    %2168 = vmatprep.subr.mxu0 0.0
    %2169 = vmatpush1.xpose.msra.mxu0 0.0
    %2170 = vmatprep.subr.mxu0 0.0
    %2171 = vmatpush1.xpose.msra.mxu0 0.0
    %2172 = vmatprep.subr.mxu0 0.0
    %2173 = vmatpush1.xpose.msra.mxu0 0.0
    %2174 = vmatprep.subr.mxu0 0.0
    %2175 = vmatpush1.xpose.msra.mxu0 0.0
    %2176 = vmatprep.subr.mxu0 0.0
    %2177 = vmatpush1.xpose.msra.mxu0 0.0
    %2178 = vmatprep.subr.mxu0 0.0
    %2179 = vmatpush1.xpose.msra.mxu0 0.0
    %2180 = vmatprep.subr.mxu0 0.0
    %2181 = vmatpush1.xpose.msra.mxu0 0.0
    %2182 = vmatprep.subr.mxu0 0.0
    %2183 = vmatpush1.xpose.msra.mxu0 0.0
    %2184 = vmatprep.subr.mxu0 0.0
    %2185 = vmatpush1.xpose.msra.mxu0 0.0
    %2186 = vmatprep.subr.mxu0 0.0
    %2187 = vmatpush1.xpose.msra.mxu0 0.0
    %2188 = vmatprep.subr.mxu0 0.0
    %2189 = vmatpush1.xpose.msra.mxu0 0.0
    %2190 = vmatprep.subr.mxu0 0.0
    %2191 = vmatpush1.xpose.msra.mxu0 0.0
    %2192 = vmatprep.subr.mxu0 0.0
    %2193 = vmatpush1.xpose.msra.mxu0 0.0
    %2194 = vmatprep.subr.mxu0 0.0
    %2195 = vmatpush1.xpose.msra.mxu0 0.0
    %2196 = vmatprep.subr.mxu0 0.0
    %2197 = vmatpush1.xpose.msra.mxu0 0.0
    %2198 = vmatprep.subr.mxu0 0.0
    %2199 = vmatpush1.xpose.msra.mxu0 0.0
    %2200 = vmatprep.subr.mxu0 0.0
    %2201 = vmatpush1.xpose.msra.mxu0 0.0
    %2202 = vmatprep.subr.mxu0 0.0
    %2203 = vmatpush1.xpose.msra.mxu0 0.0
    %2204 = vmatprep.subr.mxu0 0.0
    %2205 = vmatpush1.xpose.msra.mxu0 0.0
    %2206 = vmatprep.subr.mxu0 0.0
    %2207 = vmatpush1.xpose.msra.mxu0 0.0
    %2208 = vmatprep.subr.mxu0 0.0
    %2209 = vmatpush1.xpose.msra.mxu0 0.0
    %2210 = vmatprep.subr.mxu0 0.0
    %2211 = vmatpush1.xpose.msra.mxu0 0.0
    %2212 = vmatprep.subr.mxu0 0.0
    %2213 = vmatpush1.xpose.msra.mxu0 0.0
    %2214 = vmatprep.subr.mxu0 0.0
    %2215 = vmatpush1.xpose.msra.mxu0 0.0
    %2216 = vmatprep.subr.mxu0 0.0
    %2217 = vmatpush1.xpose.msra.mxu0 0.0
    %2218 = vmatprep.subr.mxu0 0.0
    %2219 = vmatpush1.xpose.msra.mxu0 0.0
    %2220 = vmatprep.mubr.f32.mxu0 0.0
    %2221 = vmatmul.mubr.f32.gmra.mrb[0].mxu0 %v2151
    %v2222 = vpop.f32.mrb[0].mxu0
    %v2223 = vadd.f32 %v2066, %v2222
    %v2224 = vpop.f32.mrb[0].mxu0
    %2225 = vdwg.mxu0
    %v2227 = vsel %vm2073, %v529, 0
    %v2230 = vsel %vm2073, %v1113, 0
    %2232 = vmatprep.subr.mxu0 0.0
    %2233 = vmatpush1.xpose.msra.mxu0 %v2230
    %2234 = vmatprep.subr.mxu0 0.0
    %2235 = vmatpush1.xpose.msra.mxu0 0.0
    %2236 = vmatprep.subr.mxu0 0.0
    %2237 = vmatpush1.xpose.msra.mxu0 0.0
    %2238 = vmatprep.subr.mxu0 0.0
    %2239 = vmatpush1.xpose.msra.mxu0 0.0
    %2240 = vmatprep.subr.mxu0 0.0
    %2241 = vmatpush1.xpose.msra.mxu0 0.0
    %2242 = vmatprep.subr.mxu0 0.0
    %2243 = vmatpush1.xpose.msra.mxu0 0.0
    %2244 = vmatprep.subr.mxu0 0.0
    %2245 = vmatpush1.xpose.msra.mxu0 0.0
    %2246 = vmatprep.subr.mxu0 0.0
    %2247 = vmatpush1.xpose.msra.mxu0 0.0
    %2248 = vmatprep.subr.mxu0 0.0
    %2249 = vmatpush1.xpose.msra.mxu0 0.0
    %2250 = vmatprep.subr.mxu0 0.0
    %2251 = vmatpush1.xpose.msra.mxu0 0.0
    %2252 = vmatprep.subr.mxu0 0.0
    %2253 = vmatpush1.xpose.msra.mxu0 0.0
    %2254 = vmatprep.subr.mxu0 0.0
    %2255 = vmatpush1.xpose.msra.mxu0 0.0
    %2256 = vmatprep.subr.mxu0 0.0
    %2257 = vmatpush1.xpose.msra.mxu0 0.0
    %2258 = vmatprep.subr.mxu0 0.0
    %2259 = vmatpush1.xpose.msra.mxu0 0.0
    %2260 = vmatprep.subr.mxu0 0.0
    %2261 = vmatpush1.xpose.msra.mxu0 0.0
    %2262 = vmatprep.subr.mxu0 0.0
    %2263 = vmatpush1.xpose.msra.mxu0 0.0
    %2264 = vmatprep.subr.mxu0 0.0
    %2265 = vmatpush1.xpose.msra.mxu0 0.0
    %2266 = vmatprep.subr.mxu0 0.0
    %2267 = vmatpush1.xpose.msra.mxu0 0.0
    %2268 = vmatprep.subr.mxu0 0.0
    %2269 = vmatpush1.xpose.msra.mxu0 0.0
    %2270 = vmatprep.subr.mxu0 0.0
    %2271 = vmatpush1.xpose.msra.mxu0 0.0
    %2272 = vmatprep.subr.mxu0 0.0
    %2273 = vmatpush1.xpose.msra.mxu0 0.0
    %2274 = vmatprep.subr.mxu0 0.0
    %2275 = vmatpush1.xpose.msra.mxu0 0.0
    %2276 = vmatprep.subr.mxu0 0.0
    %2277 = vmatpush1.xpose.msra.mxu0 0.0
    %2278 = vmatprep.subr.mxu0 0.0
    %2279 = vmatpush1.xpose.msra.mxu0 0.0
    %2280 = vmatprep.subr.mxu0 0.0
    %2281 = vmatpush1.xpose.msra.mxu0 0.0
    %2282 = vmatprep.subr.mxu0 0.0
    %2283 = vmatpush1.xpose.msra.mxu0 0.0
    %2284 = vmatprep.subr.mxu0 0.0
    %2285 = vmatpush1.xpose.msra.mxu0 0.0
    %2286 = vmatprep.subr.mxu0 0.0
    %2287 = vmatpush1.xpose.msra.mxu0 0.0
    %2288 = vmatprep.subr.mxu0 0.0
    %2289 = vmatpush1.xpose.msra.mxu0 0.0
    %2290 = vmatprep.subr.mxu0 0.0
    %2291 = vmatpush1.xpose.msra.mxu0 0.0
    %2292 = vmatprep.subr.mxu0 0.0
    %2293 = vmatpush1.xpose.msra.mxu0 0.0
    %2294 = vmatprep.subr.mxu0 0.0
    %2295 = vmatpush1.xpose.msra.mxu0 0.0
    %2296 = vmatprep.mubr.f32.mxu0 0.0
    %2297 = vmatmul.mubr.f32.gmra.mrb[0].mxu0 %v2227
    %v2298 = vpop.f32.mrb[0].mxu0
    %v2299 = vadd.f32 %v2067, %v2298
    %v2300 = vpop.f32.mrb[0].mxu0
    %2301 = vdwg.mxu0
    %v2303 = vsel %vm2073, %v602, 0
    %v2306 = vsel %vm2073, %v1186, 0
    %2308 = vmatprep.subr.mxu0 0.0
    %2309 = vmatpush1.xpose.msra.mxu0 %v2306
    %2310 = vmatprep.subr.mxu0 0.0
    %2311 = vmatpush1.xpose.msra.mxu0 0.0
    %2312 = vmatprep.subr.mxu0 0.0
    %2313 = vmatpush1.xpose.msra.mxu0 0.0
    %2314 = vmatprep.subr.mxu0 0.0
    %2315 = vmatpush1.xpose.msra.mxu0 0.0
    %2316 = vmatprep.subr.mxu0 0.0
    %2317 = vmatpush1.xpose.msra.mxu0 0.0
    %2318 = vmatprep.subr.mxu0 0.0
    %2319 = vmatpush1.xpose.msra.mxu0 0.0
    %2320 = vmatprep.subr.mxu0 0.0
    %2321 = vmatpush1.xpose.msra.mxu0 0.0
    %2322 = vmatprep.subr.mxu0 0.0
    %2323 = vmatpush1.xpose.msra.mxu0 0.0
    %2324 = vmatprep.subr.mxu0 0.0
    %2325 = vmatpush1.xpose.msra.mxu0 0.0
    %2326 = vmatprep.subr.mxu0 0.0
    %2327 = vmatpush1.xpose.msra.mxu0 0.0
    %2328 = vmatprep.subr.mxu0 0.0
    %2329 = vmatpush1.xpose.msra.mxu0 0.0
    %2330 = vmatprep.subr.mxu0 0.0
    %2331 = vmatpush1.xpose.msra.mxu0 0.0
    %2332 = vmatprep.subr.mxu0 0.0
    %2333 = vmatpush1.xpose.msra.mxu0 0.0
    %2334 = vmatprep.subr.mxu0 0.0
    %2335 = vmatpush1.xpose.msra.mxu0 0.0
    %2336 = vmatprep.subr.mxu0 0.0
    %2337 = vmatpush1.xpose.msra.mxu0 0.0
    %2338 = vmatprep.subr.mxu0 0.0
    %2339 = vmatpush1.xpose.msra.mxu0 0.0
    %2340 = vmatprep.subr.mxu0 0.0
    %2341 = vmatpush1.xpose.msra.mxu0 0.0
    %2342 = vmatprep.subr.mxu0 0.0
    %2343 = vmatpush1.xpose.msra.mxu0 0.0
    %2344 = vmatprep.subr.mxu0 0.0
    %2345 = vmatpush1.xpose.msra.mxu0 0.0
    %2346 = vmatprep.subr.mxu0 0.0
    %2347 = vmatpush1.xpose.msra.mxu0 0.0
    %2348 = vmatprep.subr.mxu0 0.0
    %2349 = vmatpush1.xpose.msra.mxu0 0.0
    %2350 = vmatprep.subr.mxu0 0.0
    %2351 = vmatpush1.xpose.msra.mxu0 0.0
    %2352 = vmatprep.subr.mxu0 0.0
    %2353 = vmatpush1.xpose.msra.mxu0 0.0
    %2354 = vmatprep.subr.mxu0 0.0
    %2355 = vmatpush1.xpose.msra.mxu0 0.0
    %2356 = vmatprep.subr.mxu0 0.0
    %2357 = vmatpush1.xpose.msra.mxu0 0.0
    %2358 = vmatprep.subr.mxu0 0.0
    %2359 = vmatpush1.xpose.msra.mxu0 0.0
    %2360 = vmatprep.subr.mxu0 0.0
    %2361 = vmatpush1.xpose.msra.mxu0 0.0
    %2362 = vmatprep.subr.mxu0 0.0
    %2363 = vmatpush1.xpose.msra.mxu0 0.0
    %2364 = vmatprep.subr.mxu0 0.0
    %2365 = vmatpush1.xpose.msra.mxu0 0.0
    %2366 = vmatprep.subr.mxu0 0.0
    %2367 = vmatpush1.xpose.msra.mxu0 0.0
    %2368 = vmatprep.subr.mxu0 0.0
    %2369 = vmatpush1.xpose.msra.mxu0 0.0
    %2370 = vmatprep.subr.mxu0 0.0
    %2371 = vmatpush1.xpose.msra.mxu0 0.0
    %2372 = vmatprep.mubr.f32.mxu0 0.0
    %2373 = vmatmul.mubr.f32.gmra.mrb[0].mxu0 %v2303
    %v2374 = vpop.f32.mrb[0].mxu0
    %v2375 = vadd.f32 %v2068, %v2374
    %v2376 = vpop.f32.mrb[0].mxu0
    %2377 = vdwg.mxu0
    %v2379 = vsel %vm2073, %v675, 0
    %v2382 = vsel %vm2073, %v1259, 0
    %2384 = vmatprep.subr.mxu0 0.0
    %2385 = vmatpush1.xpose.msra.mxu0 %v2382
    %2386 = vmatprep.subr.mxu0 0.0
    %2387 = vmatpush1.xpose.msra.mxu0 0.0
    %2388 = vmatprep.subr.mxu0 0.0
    %2389 = vmatpush1.xpose.msra.mxu0 0.0
    %2390 = vmatprep.subr.mxu0 0.0
    %2391 = vmatpush1.xpose.msra.mxu0 0.0
    %2392 = vmatprep.subr.mxu0 0.0
    %2393 = vmatpush1.xpose.msra.mxu0 0.0
    %2394 = vmatprep.subr.mxu0 0.0
    %2395 = vmatpush1.xpose.msra.mxu0 0.0
    %2396 = vmatprep.subr.mxu0 0.0
    %2397 = vmatpush1.xpose.msra.mxu0 0.0
    %2398 = vmatprep.subr.mxu0 0.0
    %2399 = vmatpush1.xpose.msra.mxu0 0.0
    %2400 = vmatprep.subr.mxu0 0.0
    %2401 = vmatpush1.xpose.msra.mxu0 0.0
    %2402 = vmatprep.subr.mxu0 0.0
    %2403 = vmatpush1.xpose.msra.mxu0 0.0
    %2404 = vmatprep.subr.mxu0 0.0
    %2405 = vmatpush1.xpose.msra.mxu0 0.0
    %2406 = vmatprep.subr.mxu0 0.0
    %2407 = vmatpush1.xpose.msra.mxu0 0.0
    %2408 = vmatprep.subr.mxu0 0.0
    %2409 = vmatpush1.xpose.msra.mxu0 0.0
    %2410 = vmatprep.subr.mxu0 0.0
    %2411 = vmatpush1.xpose.msra.mxu0 0.0
    %2412 = vmatprep.subr.mxu0 0.0
    %2413 = vmatpush1.xpose.msra.mxu0 0.0
    %2414 = vmatprep.subr.mxu0 0.0
    %2415 = vmatpush1.xpose.msra.mxu0 0.0
    %2416 = vmatprep.subr.mxu0 0.0
    %2417 = vmatpush1.xpose.msra.mxu0 0.0
    %2418 = vmatprep.subr.mxu0 0.0
    %2419 = vmatpush1.xpose.msra.mxu0 0.0
    %2420 = vmatprep.subr.mxu0 0.0
    %2421 = vmatpush1.xpose.msra.mxu0 0.0
    %2422 = vmatprep.subr.mxu0 0.0
    %2423 = vmatpush1.xpose.msra.mxu0 0.0
    %2424 = vmatprep.subr.mxu0 0.0
    %2425 = vmatpush1.xpose.msra.mxu0 0.0
    %2426 = vmatprep.subr.mxu0 0.0
    %2427 = vmatpush1.xpose.msra.mxu0 0.0
    %2428 = vmatprep.subr.mxu0 0.0
    %2429 = vmatpush1.xpose.msra.mxu0 0.0
    %2430 = vmatprep.subr.mxu0 0.0
    %2431 = vmatpush1.xpose.msra.mxu0 0.0
    %2432 = vmatprep.subr.mxu0 0.0
    %2433 = vmatpush1.xpose.msra.mxu0 0.0
    %2434 = vmatprep.subr.mxu0 0.0
    %2435 = vmatpush1.xpose.msra.mxu0 0.0
    %2436 = vmatprep.subr.mxu0 0.0
    %2437 = vmatpush1.xpose.msra.mxu0 0.0
    %2438 = vmatprep.subr.mxu0 0.0
    %2439 = vmatpush1.xpose.msra.mxu0 0.0
    %2440 = vmatprep.subr.mxu0 0.0
    %2441 = vmatpush1.xpose.msra.mxu0 0.0
    %2442 = vmatprep.subr.mxu0 0.0
    %2443 = vmatpush1.xpose.msra.mxu0 0.0
    %2444 = vmatprep.subr.mxu0 0.0
    %2445 = vmatpush1.xpose.msra.mxu0 0.0
    %2446 = vmatprep.subr.mxu0 0.0
    %2447 = vmatpush1.xpose.msra.mxu0 0.0
    %2448 = vmatprep.mubr.f32.mxu0 0.0
    %2449 = vmatmul.mubr.f32.gmra.mrb[0].mxu0 %v2379
    %v2450 = vpop.f32.mrb[0].mxu0
    %v2451 = vadd.f32 %v2069, %v2450
    %v2452 = vpop.f32.mrb[0].mxu0
    %2453 = vdwg.mxu0
    %v2455 = vsel %vm2073, %v748, 0
    %v2458 = vsel %vm2073, %v1332, 0
    %2460 = vmatprep.subr.mxu0 0.0
    %2461 = vmatpush1.xpose.msra.mxu0 %v2458
    %2462 = vmatprep.subr.mxu0 0.0
    %2463 = vmatpush1.xpose.msra.mxu0 0.0
    %2464 = vmatprep.subr.mxu0 0.0
    %2465 = vmatpush1.xpose.msra.mxu0 0.0
    %2466 = vmatprep.subr.mxu0 0.0
    %2467 = vmatpush1.xpose.msra.mxu0 0.0
    %2468 = vmatprep.subr.mxu0 0.0
    %2469 = vmatpush1.xpose.msra.mxu0 0.0
    %2470 = vmatprep.subr.mxu0 0.0
    %2471 = vmatpush1.xpose.msra.mxu0 0.0
    %2472 = vmatprep.subr.mxu0 0.0
    %2473 = vmatpush1.xpose.msra.mxu0 0.0
    %2474 = vmatprep.subr.mxu0 0.0
    %2475 = vmatpush1.xpose.msra.mxu0 0.0
    %2476 = vmatprep.subr.mxu0 0.0
    %2477 = vmatpush1.xpose.msra.mxu0 0.0
    %2478 = vmatprep.subr.mxu0 0.0
    %2479 = vmatpush1.xpose.msra.mxu0 0.0
    %2480 = vmatprep.subr.mxu0 0.0
    %2481 = vmatpush1.xpose.msra.mxu0 0.0
    %2482 = vmatprep.subr.mxu0 0.0
    %2483 = vmatpush1.xpose.msra.mxu0 0.0
    %2484 = vmatprep.subr.mxu0 0.0
    %2485 = vmatpush1.xpose.msra.mxu0 0.0
    %2486 = vmatprep.subr.mxu0 0.0
    %2487 = vmatpush1.xpose.msra.mxu0 0.0
    %2488 = vmatprep.subr.mxu0 0.0
    %2489 = vmatpush1.xpose.msra.mxu0 0.0
    %2490 = vmatprep.subr.mxu0 0.0
    %2491 = vmatpush1.xpose.msra.mxu0 0.0
    %2492 = vmatprep.subr.mxu0 0.0
    %2493 = vmatpush1.xpose.msra.mxu0 0.0
    %2494 = vmatprep.subr.mxu0 0.0
    %2495 = vmatpush1.xpose.msra.mxu0 0.0
    %2496 = vmatprep.subr.mxu0 0.0
    %2497 = vmatpush1.xpose.msra.mxu0 0.0
    %2498 = vmatprep.subr.mxu0 0.0
    %2499 = vmatpush1.xpose.msra.mxu0 0.0
    %2500 = vmatprep.subr.mxu0 0.0
    %2501 = vmatpush1.xpose.msra.mxu0 0.0
    %2502 = vmatprep.subr.mxu0 0.0
    %2503 = vmatpush1.xpose.msra.mxu0 0.0
    %2504 = vmatprep.subr.mxu0 0.0
    %2505 = vmatpush1.xpose.msra.mxu0 0.0
    %2506 = vmatprep.subr.mxu0 0.0
    %2507 = vmatpush1.xpose.msra.mxu0 0.0
    %2508 = vmatprep.subr.mxu0 0.0
    %2509 = vmatpush1.xpose.msra.mxu0 0.0
    %2510 = vmatprep.subr.mxu0 0.0
    %2511 = vmatpush1.xpose.msra.mxu0 0.0
    %2512 = vmatprep.subr.mxu0 0.0
    %2513 = vmatpush1.xpose.msra.mxu0 0.0
    %2514 = vmatprep.subr.mxu0 0.0
    %2515 = vmatpush1.xpose.msra.mxu0 0.0
    %2516 = vmatprep.subr.mxu0 0.0
    %2517 = vmatpush1.xpose.msra.mxu0 0.0
    %2518 = vmatprep.subr.mxu0 0.0
    %2519 = vmatpush1.xpose.msra.mxu0 0.0
    %2520 = vmatprep.subr.mxu0 0.0
    %2521 = vmatpush1.xpose.msra.mxu0 0.0
    %2522 = vmatprep.subr.mxu0 0.0
    %2523 = vmatpush1.xpose.msra.mxu0 0.0
    %2524 = vmatprep.mubr.f32.mxu0 0.0
    %2525 = vmatmul.mubr.f32.gmra.mrb[0].mxu0 %v2455
    %v2526 = vpop.f32.mrb[0].mxu0
    %v2527 = vadd.f32 %v2070, %v2526
    %v2528 = vpop.f32.mrb[0].mxu0
    %2529 = vdwg.mxu0
    %v2531 = vsel %vm2073, %v821, 0
    %v2534 = vsel %vm2073, %v1405, 0
    %2536 = vmatprep.subr.mxu0 0.0
    %2537 = vmatpush1.xpose.msra.mxu0 %v2534
    %2538 = vmatprep.subr.mxu0 0.0
    %2539 = vmatpush1.xpose.msra.mxu0 0.0
    %2540 = vmatprep.subr.mxu0 0.0
    %2541 = vmatpush1.xpose.msra.mxu0 0.0
    %2542 = vmatprep.subr.mxu0 0.0
    %2543 = vmatpush1.xpose.msra.mxu0 0.0
    %2544 = vmatprep.subr.mxu0 0.0
    %2545 = vmatpush1.xpose.msra.mxu0 0.0
    %2546 = vmatprep.subr.mxu0 0.0
    %2547 = vmatpush1.xpose.msra.mxu0 0.0
    %2548 = vmatprep.subr.mxu0 0.0
    %2549 = vmatpush1.xpose.msra.mxu0 0.0
    %2550 = vmatprep.subr.mxu0 0.0
    %2551 = vmatpush1.xpose.msra.mxu0 0.0
    %2552 = vmatprep.subr.mxu0 0.0
    %2553 = vmatpush1.xpose.msra.mxu0 0.0
    %2554 = vmatprep.subr.mxu0 0.0
    %2555 = vmatpush1.xpose.msra.mxu0 0.0
    %2556 = vmatprep.subr.mxu0 0.0
    %2557 = vmatpush1.xpose.msra.mxu0 0.0
    %2558 = vmatprep.subr.mxu0 0.0
    %2559 = vmatpush1.xpose.msra.mxu0 0.0
    %2560 = vmatprep.subr.mxu0 0.0
    %2561 = vmatpush1.xpose.msra.mxu0 0.0
    %2562 = vmatprep.subr.mxu0 0.0
    %2563 = vmatpush1.xpose.msra.mxu0 0.0
    %2564 = vmatprep.subr.mxu0 0.0
    %2565 = vmatpush1.xpose.msra.mxu0 0.0
    %2566 = vmatprep.subr.mxu0 0.0
    %2567 = vmatpush1.xpose.msra.mxu0 0.0
    %2568 = vmatprep.subr.mxu0 0.0
    %2569 = vmatpush1.xpose.msra.mxu0 0.0
    %2570 = vmatprep.subr.mxu0 0.0
    %2571 = vmatpush1.xpose.msra.mxu0 0.0
    %2572 = vmatprep.subr.mxu0 0.0
    %2573 = vmatpush1.xpose.msra.mxu0 0.0
    %2574 = vmatprep.subr.mxu0 0.0
    %2575 = vmatpush1.xpose.msra.mxu0 0.0
    %2576 = vmatprep.subr.mxu0 0.0
    %2577 = vmatpush1.xpose.msra.mxu0 0.0
    %2578 = vmatprep.subr.mxu0 0.0
    %2579 = vmatpush1.xpose.msra.mxu0 0.0
    %2580 = vmatprep.subr.mxu0 0.0
    %2581 = vmatpush1.xpose.msra.mxu0 0.0
    %2582 = vmatprep.subr.mxu0 0.0
    %2583 = vmatpush1.xpose.msra.mxu0 0.0
    %2584 = vmatprep.subr.mxu0 0.0
    %2585 = vmatpush1.xpose.msra.mxu0 0.0
    %2586 = vmatprep.subr.mxu0 0.0
    %2587 = vmatpush1.xpose.msra.mxu0 0.0
    %2588 = vmatprep.subr.mxu0 0.0
    %2589 = vmatpush1.xpose.msra.mxu0 0.0
    %2590 = vmatprep.subr.mxu0 0.0
    %2591 = vmatpush1.xpose.msra.mxu0 0.0
    %2592 = vmatprep.subr.mxu0 0.0
    %2593 = vmatpush1.xpose.msra.mxu0 0.0
    %2594 = vmatprep.subr.mxu0 0.0
    %2595 = vmatpush1.xpose.msra.mxu0 0.0
    %2596 = vmatprep.subr.mxu0 0.0
    %2597 = vmatpush1.xpose.msra.mxu0 0.0
    %2598 = vmatprep.subr.mxu0 0.0
    %2599 = vmatpush1.xpose.msra.mxu0 0.0
    %2600 = vmatprep.mubr.f32.mxu0 0.0
    %2601 = vmatmul.mubr.f32.gmra.mrb[0].mxu0 %v2531
    %v2602 = vpop.f32.mrb[0].mxu0
    %v2603 = vadd.f32 %v2071, %v2602
    %v2604 = vpop.f32.mrb[0].mxu0
    %2605 = vdwg.mxu0
    %v2607 = vsel %vm2073, %v894, 0
    %v2610 = vsel %vm2073, %v1478, 0
    %2612 = vmatprep.subr.mxu0 0.0
    %2613 = vmatpush1.xpose.msra.mxu0 %v2610
    %2614 = vmatprep.subr.mxu0 0.0
    %2615 = vmatpush1.xpose.msra.mxu0 0.0
    %2616 = vmatprep.subr.mxu0 0.0
    %2617 = vmatpush1.xpose.msra.mxu0 0.0
    %2618 = vmatprep.subr.mxu0 0.0
    %2619 = vmatpush1.xpose.msra.mxu0 0.0
    %2620 = vmatprep.subr.mxu0 0.0
    %2621 = vmatpush1.xpose.msra.mxu0 0.0
    %2622 = vmatprep.subr.mxu0 0.0
    %2623 = vmatpush1.xpose.msra.mxu0 0.0
    %2624 = vmatprep.subr.mxu0 0.0
    %2625 = vmatpush1.xpose.msra.mxu0 0.0
    %2626 = vmatprep.subr.mxu0 0.0
    %2627 = vmatpush1.xpose.msra.mxu0 0.0
    %2628 = vmatprep.subr.mxu0 0.0
    %2629 = vmatpush1.xpose.msra.mxu0 0.0
    %2630 = vmatprep.subr.mxu0 0.0
    %2631 = vmatpush1.xpose.msra.mxu0 0.0
    %2632 = vmatprep.subr.mxu0 0.0
    %2633 = vmatpush1.xpose.msra.mxu0 0.0
    %2634 = vmatprep.subr.mxu0 0.0
    %2635 = vmatpush1.xpose.msra.mxu0 0.0
    %2636 = vmatprep.subr.mxu0 0.0
    %2637 = vmatpush1.xpose.msra.mxu0 0.0
    %2638 = vmatprep.subr.mxu0 0.0
    %2639 = vmatpush1.xpose.msra.mxu0 0.0
    %2640 = vmatprep.subr.mxu0 0.0
    %2641 = vmatpush1.xpose.msra.mxu0 0.0
    %2642 = vmatprep.subr.mxu0 0.0
    %2643 = vmatpush1.xpose.msra.mxu0 0.0
    %2644 = vmatprep.subr.mxu0 0.0
    %2645 = vmatpush1.xpose.msra.mxu0 0.0
    %2646 = vmatprep.subr.mxu0 0.0
    %2647 = vmatpush1.xpose.msra.mxu0 0.0
    %2648 = vmatprep.subr.mxu0 0.0
    %2649 = vmatpush1.xpose.msra.mxu0 0.0
    %2650 = vmatprep.subr.mxu0 0.0
    %2651 = vmatpush1.xpose.msra.mxu0 0.0
    %2652 = vmatprep.subr.mxu0 0.0
    %2653 = vmatpush1.xpose.msra.mxu0 0.0
    %2654 = vmatprep.subr.mxu0 0.0
    %2655 = vmatpush1.xpose.msra.mxu0 0.0
    %2656 = vmatprep.subr.mxu0 0.0
    %2657 = vmatpush1.xpose.msra.mxu0 0.0
    %2658 = vmatprep.subr.mxu0 0.0
    %2659 = vmatpush1.xpose.msra.mxu0 0.0
    %2660 = vmatprep.subr.mxu0 0.0
    %2661 = vmatpush1.xpose.msra.mxu0 0.0
    %2662 = vmatprep.subr.mxu0 0.0
    %2663 = vmatpush1.xpose.msra.mxu0 0.0
    %2664 = vmatprep.subr.mxu0 0.0
    %2665 = vmatpush1.xpose.msra.mxu0 0.0
    %2666 = vmatprep.subr.mxu0 0.0
    %2667 = vmatpush1.xpose.msra.mxu0 0.0
    %2668 = vmatprep.subr.mxu0 0.0
    %2669 = vmatpush1.xpose.msra.mxu0 0.0
    %2670 = vmatprep.subr.mxu0 0.0
    %2671 = vmatpush1.xpose.msra.mxu0 0.0
    %2672 = vmatprep.subr.mxu0 0.0
    %2673 = vmatpush1.xpose.msra.mxu0 0.0
    %2674 = vmatprep.subr.mxu0 0.0
    %2675 = vmatpush1.xpose.msra.mxu0 0.0
    %2676 = vmatprep.mubr.f32.mxu0 0.0
    %2677 = vmatmul.mubr.f32.gmra.mrb[0].mxu0 %v2607
    %v2678 = vpop.f32.mrb[0].mxu0
    %v2679 = vadd.f32 %v2072, %v2678
    %v2680 = vpop.f32.mrb[0].mxu0
    %2681 = vdwg.mxu0
    %v2682 = vsel %vm2073, %v2147, -inf
    %2683 = vmax.xlane.f32.xlu0 %v2682
    %v2684 = vpop.xlane.xlu0 %2683
    %v2685 = vsel %vm2073, %v2223, -inf
    %2686 = vmax.xlane.f32.xlu0 %v2685
    %v2687 = vpop.xlane.xlu0 %2686
    %v2688 = vsel %vm2073, %v2299, -inf
    %2689 = vmax.xlane.f32.xlu0 %v2688
    %v2690 = vpop.xlane.xlu0 %2689
    %v2691 = vsel %vm2073, %v2375, -inf
    %2692 = vmax.xlane.f32.xlu0 %v2691
    %v2693 = vpop.xlane.xlu0 %2692
    %v2694 = vsel %vm2073, %v2451, -inf
    %2695 = vmax.xlane.f32.xlu0 %v2694
    %v2696 = vpop.xlane.xlu0 %2695
    %v2697 = vsel %vm2073, %v2527, -inf
    %2698 = vmax.xlane.f32.xlu0 %v2697
    %v2699 = vpop.xlane.xlu0 %2698
    %v2700 = vsel %vm2073, %v2603, -inf
    %2701 = vmax.xlane.f32.xlu0 %v2700
    %v2702 = vpop.xlane.xlu0 %2701
    %v2703 = vsel %vm2073, %v2679, -inf
    %2704 = vmax.xlane.f32.xlu0 %v2703
    %v2705 = vpop.xlane.xlu0 %2704
    %v2706 = vsub.f32 %v2147, %v2684
    %v2707 = vsub.f32 %v2223, %v2687
    %v2708 = vsub.f32 %v2299, %v2690
    %v2709 = vsub.f32 %v2375, %v2693
    %v2710 = vsub.f32 %v2451, %v2696
    %v2711 = vsub.f32 %v2527, %v2699
    %v2712 = vsub.f32 %v2603, %v2702
    %v2713 = vsub.f32 %v2679, %v2705
    %v2714 = vmul.f32 %v2706, 1.442695
    %v2715 = vpow.pop %v2714
    %v2716 = vmul.f32 %v2707, 1.442695
    %v2717 = vpow.pop %v2716
    %v2718 = vmul.f32 %v2708, 1.442695
    %v2719 = vpow.pop %v2718
    %v2720 = vmul.f32 %v2709, 1.442695
    %v2721 = vpow.pop %v2720
    %v2722 = vmul.f32 %v2710, 1.442695
    %v2723 = vpow.pop %v2722
    %v2724 = vmul.f32 %v2711, 1.442695
    %v2725 = vpow.pop %v2724
    %v2726 = vmul.f32 %v2712, 1.442695
    %v2727 = vpow.pop %v2726
    %v2728 = vmul.f32 %v2713, 1.442695
    %v2729 = vpow.pop %v2728
    %v2730 = vsel %vm2073, %v2715, 0.0
    %2731 = vadd.xlane.f32.xlu0 %v2730
    %v2732 = vpop.xlane.xlu0 %2731
    %v2733 = vsel %vm2073, %v2717, 0.0
    %2734 = vadd.xlane.f32.xlu0 %v2733
    %v2735 = vpop.xlane.xlu0 %2734
    %v2736 = vsel %vm2073, %v2719, 0.0
    %2737 = vadd.xlane.f32.xlu0 %v2736
    %v2738 = vpop.xlane.xlu0 %2737
    %v2739 = vsel %vm2073, %v2721, 0.0
    %2740 = vadd.xlane.f32.xlu0 %v2739
    %v2741 = vpop.xlane.xlu0 %2740
    %v2742 = vsel %vm2073, %v2723, 0.0
    %2743 = vadd.xlane.f32.xlu0 %v2742
    %v2744 = vpop.xlane.xlu0 %2743
    %v2745 = vsel %vm2073, %v2725, 0.0
    %2746 = vadd.xlane.f32.xlu0 %v2745
    %v2747 = vpop.xlane.xlu0 %2746
    %v2748 = vsel %vm2073, %v2727, 0.0
    %2749 = vadd.xlane.f32.xlu0 %v2748
    %v2750 = vpop.xlane.xlu0 %2749
    %v2751 = vsel %vm2073, %v2729, 0.0
    %2752 = vadd.xlane.f32.xlu0 %v2751
    %v2753 = vpop.xlane.xlu0 %2752
    %v2754 = vrcp.pop %v2732
    %v2755 = vrcp.pop %v2735
    %v2756 = vrcp.pop %v2738
    %v2757 = vrcp.pop %v2741
    %v2758 = vrcp.pop %v2744
    %v2759 = vrcp.pop %v2747
    %v2760 = vrcp.pop %v2750
    %v2761 = vrcp.pop %v2753
    %v2762 = vmul.f32 %v2715, %v2754
    %v2763 = vmul.f32 %v2717, %v2755
    %v2764 = vmul.f32 %v2719, %v2756
    %v2765 = vmul.f32 %v2721, %v2757
    %v2766 = vmul.f32 %v2723, %v2758
    %v2767 = vmul.f32 %v2725, %v2759
    %v2768 = vmul.f32 %v2727, %v2760
    %v2769 = vmul.f32 %v2729, %v2761
    %v2771 = vsel %vm2073, %v2762, 0
    %2773 = vmatprep.subr.mxu0 0.0
    %2774 = vmatpush1.msra.mxu0 %v1551
    %2775 = vmatprep.subr.mxu0 0.0
    %2776 = vmatpush1.msra.mxu0 0.0
    %2777 = vmatprep.subr.mxu0 0.0
    %2778 = vmatpush1.msra.mxu0 0.0
    %2779 = vmatprep.subr.mxu0 0.0
    %2780 = vmatpush1.msra.mxu0 0.0
    %2781 = vmatprep.subr.mxu0 0.0
    %2782 = vmatpush1.msra.mxu0 0.0
    %2783 = vmatprep.subr.mxu0 0.0
    %2784 = vmatpush1.msra.mxu0 0.0
    %2785 = vmatprep.subr.mxu0 0.0
    %2786 = vmatpush1.msra.mxu0 0.0
    %2787 = vmatprep.subr.mxu0 0.0
    %2788 = vmatpush1.msra.mxu0 0.0
    %2789 = vmatprep.subr.mxu0 0.0
    %2790 = vmatpush1.msra.mxu0 0.0
    %2791 = vmatprep.subr.mxu0 0.0
    %2792 = vmatpush1.msra.mxu0 0.0
    %2793 = vmatprep.subr.mxu0 0.0
    %2794 = vmatpush1.msra.mxu0 0.0
    %2795 = vmatprep.subr.mxu0 0.0
    %2796 = vmatpush1.msra.mxu0 0.0
    %2797 = vmatprep.subr.mxu0 0.0
    %2798 = vmatpush1.msra.mxu0 0.0
    %2799 = vmatprep.subr.mxu0 0.0
    %2800 = vmatpush1.msra.mxu0 0.0
    %2801 = vmatprep.subr.mxu0 0.0
    %2802 = vmatpush1.msra.mxu0 0.0
    %2803 = vmatprep.subr.mxu0 0.0
    %2804 = vmatpush1.msra.mxu0 0.0
    %2805 = vmatprep.subr.mxu0 0.0
    %2806 = vmatpush1.msra.mxu0 0.0
    %2807 = vmatprep.subr.mxu0 0.0
    %2808 = vmatpush1.msra.mxu0 0.0
    %2809 = vmatprep.subr.mxu0 0.0
    %2810 = vmatpush1.msra.mxu0 0.0
    %2811 = vmatprep.subr.mxu0 0.0
    %2812 = vmatpush1.msra.mxu0 0.0
    %2813 = vmatprep.subr.mxu0 0.0
    %2814 = vmatpush1.msra.mxu0 0.0
    %2815 = vmatprep.subr.mxu0 0.0
    %2816 = vmatpush1.msra.mxu0 0.0
    %2817 = vmatprep.subr.mxu0 0.0
    %2818 = vmatpush1.msra.mxu0 0.0
    %2819 = vmatprep.subr.mxu0 0.0
    %2820 = vmatpush1.msra.mxu0 0.0
    %2821 = vmatprep.subr.mxu0 0.0
    %2822 = vmatpush1.msra.mxu0 0.0
    %2823 = vmatprep.subr.mxu0 0.0
    %2824 = vmatpush1.msra.mxu0 0.0
    %2825 = vmatprep.subr.mxu0 0.0
    %2826 = vmatpush1.msra.mxu0 0.0
    %2827 = vmatprep.subr.mxu0 0.0
    %2828 = vmatpush1.msra.mxu0 0.0
    %2829 = vmatprep.subr.mxu0 0.0
    %2830 = vmatpush1.msra.mxu0 0.0
    %2831 = vmatprep.subr.mxu0 0.0
    %2832 = vmatpush1.msra.mxu0 0.0
    %2833 = vmatprep.subr.mxu0 0.0
    %2834 = vmatpush1.msra.mxu0 0.0
    %2835 = vmatprep.subr.mxu0 0.0
    %2836 = vmatpush1.msra.mxu0 0.0
    %2837 = vmatprep.mubr.f32.mxu0 0.0
    %2838 = vmatmul.mubr.f32.gmra.mrb[0].mxu0 %v2771
    %v2839 = vpop.f32.mrb[0].mxu0
    %v2840 = vadd.f32 0.0, %v2839
    %v2841 = vpop.f32.mrb[0].mxu0
    %2842 = vdwg.mxu0
    %v2844 = vsel %vm2073, %v2763, 0
    %2846 = vmatprep.subr.mxu0 0.0
    %2847 = vmatpush1.msra.mxu0 %v1624
    %2848 = vmatprep.subr.mxu0 0.0
    %2849 = vmatpush1.msra.mxu0 0.0
    %2850 = vmatprep.subr.mxu0 0.0
    %2851 = vmatpush1.msra.mxu0 0.0
    %2852 = vmatprep.subr.mxu0 0.0
    %2853 = vmatpush1.msra.mxu0 0.0
    %2854 = vmatprep.subr.mxu0 0.0
    %2855 = vmatpush1.msra.mxu0 0.0
    %2856 = vmatprep.subr.mxu0 0.0
    %2857 = vmatpush1.msra.mxu0 0.0
    %2858 = vmatprep.subr.mxu0 0.0
    %2859 = vmatpush1.msra.mxu0 0.0
    %2860 = vmatprep.subr.mxu0 0.0
    %2861 = vmatpush1.msra.mxu0 0.0
    %2862 = vmatprep.subr.mxu0 0.0
    %2863 = vmatpush1.msra.mxu0 0.0
    %2864 = vmatprep.subr.mxu0 0.0
    %2865 = vmatpush1.msra.mxu0 0.0
    %2866 = vmatprep.subr.mxu0 0.0
    %2867 = vmatpush1.msra.mxu0 0.0
    %2868 = vmatprep.subr.mxu0 0.0
    %2869 = vmatpush1.msra.mxu0 0.0
    %2870 = vmatprep.subr.mxu0 0.0
    %2871 = vmatpush1.msra.mxu0 0.0
    %2872 = vmatprep.subr.mxu0 0.0
    %2873 = vmatpush1.msra.mxu0 0.0
    %2874 = vmatprep.subr.mxu0 0.0
    %2875 = vmatpush1.msra.mxu0 0.0
    %2876 = vmatprep.subr.mxu0 0.0
    %2877 = vmatpush1.msra.mxu0 0.0
    %2878 = vmatprep.subr.mxu0 0.0
    %2879 = vmatpush1.msra.mxu0 0.0
    %2880 = vmatprep.subr.mxu0 0.0
    %2881 = vmatpush1.msra.mxu0 0.0
    %2882 = vmatprep.subr.mxu0 0.0
    %2883 = vmatpush1.msra.mxu0 0.0
    %2884 = vmatprep.subr.mxu0 0.0
    %2885 = vmatpush1.msra.mxu0 0.0
    %2886 = vmatprep.subr.mxu0 0.0
    %2887 = vmatpush1.msra.mxu0 0.0
    %2888 = vmatprep.subr.mxu0 0.0
    %2889 = vmatpush1.msra.mxu0 0.0
    %2890 = vmatprep.subr.mxu0 0.0
    %2891 = vmatpush1.msra.mxu0 0.0
    %2892 = vmatprep.subr.mxu0 0.0
    %2893 = vmatpush1.msra.mxu0 0.0
    %2894 = vmatprep.subr.mxu0 0.0
    %2895 = vmatpush1.msra.mxu0 0.0
    %2896 = vmatprep.subr.mxu0 0.0
    %2897 = vmatpush1.msra.mxu0 0.0
    %2898 = vmatprep.subr.mxu0 0.0
    %2899 = vmatpush1.msra.mxu0 0.0
    %2900 = vmatprep.subr.mxu0 0.0
    %2901 = vmatpush1.msra.mxu0 0.0
    %2902 = vmatprep.subr.mxu0 0.0
    %2903 = vmatpush1.msra.mxu0 0.0
    %2904 = vmatprep.subr.mxu0 0.0
    %2905 = vmatpush1.msra.mxu0 0.0
    %2906 = vmatprep.subr.mxu0 0.0
    %2907 = vmatpush1.msra.mxu0 0.0
    %2908 = vmatprep.subr.mxu0 0.0
    %2909 = vmatpush1.msra.mxu0 0.0
    %2910 = vmatprep.mubr.f32.mxu0 0.0
    %2911 = vmatmul.mubr.f32.gmra.mrb[0].mxu0 %v2844
    %v2912 = vpop.f32.mrb[0].mxu0
    %v2913 = vadd.f32 0.0, %v2912
    %v2914 = vpop.f32.mrb[0].mxu0
    %2915 = vdwg.mxu0
    %v2917 = vsel %vm2073, %v2764, 0
    %2919 = vmatprep.subr.mxu0 0.0
    %2920 = vmatpush1.msra.mxu0 %v1697
    %2921 = vmatprep.subr.mxu0 0.0
    %2922 = vmatpush1.msra.mxu0 0.0
    %2923 = vmatprep.subr.mxu0 0.0
    %2924 = vmatpush1.msra.mxu0 0.0
    %2925 = vmatprep.subr.mxu0 0.0
    %2926 = vmatpush1.msra.mxu0 0.0
    %2927 = vmatprep.subr.mxu0 0.0
    %2928 = vmatpush1.msra.mxu0 0.0
    %2929 = vmatprep.subr.mxu0 0.0
    %2930 = vmatpush1.msra.mxu0 0.0
    %2931 = vmatprep.subr.mxu0 0.0
    %2932 = vmatpush1.msra.mxu0 0.0
    %2933 = vmatprep.subr.mxu0 0.0
    %2934 = vmatpush1.msra.mxu0 0.0
    %2935 = vmatprep.subr.mxu0 0.0
    %2936 = vmatpush1.msra.mxu0 0.0
    %2937 = vmatprep.subr.mxu0 0.0
    %2938 = vmatpush1.msra.mxu0 0.0
    %2939 = vmatprep.subr.mxu0 0.0
    %2940 = vmatpush1.msra.mxu0 0.0
    %2941 = vmatprep.subr.mxu0 0.0
    %2942 = vmatpush1.msra.mxu0 0.0
    %2943 = vmatprep.subr.mxu0 0.0
    %2944 = vmatpush1.msra.mxu0 0.0
    %2945 = vmatprep.subr.mxu0 0.0
    %2946 = vmatpush1.msra.mxu0 0.0
    %2947 = vmatprep.subr.mxu0 0.0
    %2948 = vmatpush1.msra.mxu0 0.0
    %2949 = vmatprep.subr.mxu0 0.0
    %2950 = vmatpush1.msra.mxu0 0.0
    %2951 = vmatprep.subr.mxu0 0.0
    %2952 = vmatpush1.msra.mxu0 0.0
    %2953 = vmatprep.subr.mxu0 0.0
    %2954 = vmatpush1.msra.mxu0 0.0
    %2955 = vmatprep.subr.mxu0 0.0
    %2956 = vmatpush1.msra.mxu0 0.0
    %2957 = vmatprep.subr.mxu0 0.0
    %2958 = vmatpush1.msra.mxu0 0.0
    %2959 = vmatprep.subr.mxu0 0.0
    %2960 = vmatpush1.msra.mxu0 0.0
    %2961 = vmatprep.subr.mxu0 0.0
    %2962 = vmatpush1.msra.mxu0 0.0
    %2963 = vmatprep.subr.mxu0 0.0
    %2964 = vmatpush1.msra.mxu0 0.0
    %2965 = vmatprep.subr.mxu0 0.0
    %2966 = vmatpush1.msra.mxu0 0.0
    %2967 = vmatprep.subr.mxu0 0.0
    %2968 = vmatpush1.msra.mxu0 0.0
    %2969 = vmatprep.subr.mxu0 0.0
    %2970 = vmatpush1.msra.mxu0 0.0
    %2971 = vmatprep.subr.mxu0 0.0
    %2972 = vmatpush1.msra.mxu0 0.0
    %2973 = vmatprep.subr.mxu0 0.0
    %2974 = vmatpush1.msra.mxu0 0.0
    %2975 = vmatprep.subr.mxu0 0.0
    %2976 = vmatpush1.msra.mxu0 0.0
    %2977 = vmatprep.subr.mxu0 0.0
    %2978 = vmatpush1.msra.mxu0 0.0
    %2979 = vmatprep.subr.mxu0 0.0
    %2980 = vmatpush1.msra.mxu0 0.0
    %2981 = vmatprep.subr.mxu0 0.0
    %2982 = vmatpush1.msra.mxu0 0.0
    %2983 = vmatprep.mubr.f32.mxu0 0.0
    %2984 = vmatmul.mubr.f32.gmra.mrb[0].mxu0 %v2917
    %v2985 = vpop.f32.mrb[0].mxu0
    %v2986 = vadd.f32 0.0, %v2985
    %v2987 = vpop.f32.mrb[0].mxu0
    %2988 = vdwg.mxu0
    %v2990 = vsel %vm2073, %v2765, 0
    %2992 = vmatprep.subr.mxu0 0.0
    %2993 = vmatpush1.msra.mxu0 %v1770
    %2994 = vmatprep.subr.mxu0 0.0
    %2995 = vmatpush1.msra.mxu0 0.0
    %2996 = vmatprep.subr.mxu0 0.0
    %2997 = vmatpush1.msra.mxu0 0.0
    %2998 = vmatprep.subr.mxu0 0.0
    %2999 = vmatpush1.msra.mxu0 0.0
    %3000 = vmatprep.subr.mxu0 0.0
    %3001 = vmatpush1.msra.mxu0 0.0
    %3002 = vmatprep.subr.mxu0 0.0
    %3003 = vmatpush1.msra.mxu0 0.0
    %3004 = vmatprep.subr.mxu0 0.0
    %3005 = vmatpush1.msra.mxu0 0.0
    %3006 = vmatprep.subr.mxu0 0.0
    %3007 = vmatpush1.msra.mxu0 0.0
    %3008 = vmatprep.subr.mxu0 0.0
    %3009 = vmatpush1.msra.mxu0 0.0
    %3010 = vmatprep.subr.mxu0 0.0
    %3011 = vmatpush1.msra.mxu0 0.0
    %3012 = vmatprep.subr.mxu0 0.0
    %3013 = vmatpush1.msra.mxu0 0.0
    %3014 = vmatprep.subr.mxu0 0.0
    %3015 = vmatpush1.msra.mxu0 0.0
    %3016 = vmatprep.subr.mxu0 0.0
    %3017 = vmatpush1.msra.mxu0 0.0
    %3018 = vmatprep.subr.mxu0 0.0
    %3019 = vmatpush1.msra.mxu0 0.0
    %3020 = vmatprep.subr.mxu0 0.0
    %3021 = vmatpush1.msra.mxu0 0.0
    %3022 = vmatprep.subr.mxu0 0.0
    %3023 = vmatpush1.msra.mxu0 0.0
    %3024 = vmatprep.subr.mxu0 0.0
    %3025 = vmatpush1.msra.mxu0 0.0
    %3026 = vmatprep.subr.mxu0 0.0
    %3027 = vmatpush1.msra.mxu0 0.0
    %3028 = vmatprep.subr.mxu0 0.0
    %3029 = vmatpush1.msra.mxu0 0.0
    %3030 = vmatprep.subr.mxu0 0.0
    %3031 = vmatpush1.msra.mxu0 0.0
    %3032 = vmatprep.subr.mxu0 0.0
    %3033 = vmatpush1.msra.mxu0 0.0
    %3034 = vmatprep.subr.mxu0 0.0
    %3035 = vmatpush1.msra.mxu0 0.0
    %3036 = vmatprep.subr.mxu0 0.0
    %3037 = vmatpush1.msra.mxu0 0.0
    %3038 = vmatprep.subr.mxu0 0.0
    %3039 = vmatpush1.msra.mxu0 0.0
    %3040 = vmatprep.subr.mxu0 0.0
    %3041 = vmatpush1.msra.mxu0 0.0
    %3042 = vmatprep.subr.mxu0 0.0
    %3043 = vmatpush1.msra.mxu0 0.0
    %3044 = vmatprep.subr.mxu0 0.0
    %3045 = vmatpush1.msra.mxu0 0.0
    %3046 = vmatprep.subr.mxu0 0.0
    %3047 = vmatpush1.msra.mxu0 0.0
    %3048 = vmatprep.subr.mxu0 0.0
    %3049 = vmatpush1.msra.mxu0 0.0
    %3050 = vmatprep.subr.mxu0 0.0
    %3051 = vmatpush1.msra.mxu0 0.0
    %3052 = vmatprep.subr.mxu0 0.0
    %3053 = vmatpush1.msra.mxu0 0.0
    %3054 = vmatprep.subr.mxu0 0.0
    %3055 = vmatpush1.msra.mxu0 0.0
    %3056 = vmatprep.mubr.f32.mxu0 0.0
    %3057 = vmatmul.mubr.f32.gmra.mrb[0].mxu0 %v2990
    %v3058 = vpop.f32.mrb[0].mxu0
    %v3059 = vadd.f32 0.0, %v3058
    %v3060 = vpop.f32.mrb[0].mxu0
    %3061 = vdwg.mxu0
    %v3063 = vsel %vm2073, %v2766, 0
    %3065 = vmatprep.subr.mxu0 0.0
    %3066 = vmatpush1.msra.mxu0 %v1843
    %3067 = vmatprep.subr.mxu0 0.0
    %3068 = vmatpush1.msra.mxu0 0.0
    %3069 = vmatprep.subr.mxu0 0.0
    %3070 = vmatpush1.msra.mxu0 0.0
    %3071 = vmatprep.subr.mxu0 0.0
    %3072 = vmatpush1.msra.mxu0 0.0
    %3073 = vmatprep.subr.mxu0 0.0
    %3074 = vmatpush1.msra.mxu0 0.0
    %3075 = vmatprep.subr.mxu0 0.0
    %3076 = vmatpush1.msra.mxu0 0.0
    %3077 = vmatprep.subr.mxu0 0.0
    %3078 = vmatpush1.msra.mxu0 0.0
    %3079 = vmatprep.subr.mxu0 0.0
    %3080 = vmatpush1.msra.mxu0 0.0
    %3081 = vmatprep.subr.mxu0 0.0
    %3082 = vmatpush1.msra.mxu0 0.0
    %3083 = vmatprep.subr.mxu0 0.0
    %3084 = vmatpush1.msra.mxu0 0.0
    %3085 = vmatprep.subr.mxu0 0.0
    %3086 = vmatpush1.msra.mxu0 0.0
    %3087 = vmatprep.subr.mxu0 0.0
    %3088 = vmatpush1.msra.mxu0 0.0
    %3089 = vmatprep.subr.mxu0 0.0
    %3090 = vmatpush1.msra.mxu0 0.0
    %3091 = vmatprep.subr.mxu0 0.0
    %3092 = vmatpush1.msra.mxu0 0.0
    %3093 = vmatprep.subr.mxu0 0.0
    %3094 = vmatpush1.msra.mxu0 0.0
    %3095 = vmatprep.subr.mxu0 0.0
    %3096 = vmatpush1.msra.mxu0 0.0
    %3097 = vmatprep.subr.mxu0 0.0
    %3098 = vmatpush1.msra.mxu0 0.0
    %3099 = vmatprep.subr.mxu0 0.0
    %3100 = vmatpush1.msra.mxu0 0.0
    %3101 = vmatprep.subr.mxu0 0.0
    %3102 = vmatpush1.msra.mxu0 0.0
    %3103 = vmatprep.subr.mxu0 0.0
    %3104 = vmatpush1.msra.mxu0 0.0
    %3105 = vmatprep.subr.mxu0 0.0
    %3106 = vmatpush1.msra.mxu0 0.0
    %3107 = vmatprep.subr.mxu0 0.0
    %3108 = vmatpush1.msra.mxu0 0.0
    %3109 = vmatprep.subr.mxu0 0.0
    %3110 = vmatpush1.msra.mxu0 0.0
    %3111 = vmatprep.subr.mxu0 0.0
    %3112 = vmatpush1.msra.mxu0 0.0
    %3113 = vmatprep.subr.mxu0 0.0
    %3114 = vmatpush1.msra.mxu0 0.0
    %3115 = vmatprep.subr.mxu0 0.0
    %3116 = vmatpush1.msra.mxu0 0.0
    %3117 = vmatprep.subr.mxu0 0.0
    %3118 = vmatpush1.msra.mxu0 0.0
    %3119 = vmatprep.subr.mxu0 0.0
    %3120 = vmatpush1.msra.mxu0 0.0
    %3121 = vmatprep.subr.mxu0 0.0
    %3122 = vmatpush1.msra.mxu0 0.0
    %3123 = vmatprep.subr.mxu0 0.0
    %3124 = vmatpush1.msra.mxu0 0.0
    %3125 = vmatprep.subr.mxu0 0.0
    %3126 = vmatpush1.msra.mxu0 0.0
    %3127 = vmatprep.subr.mxu0 0.0
    %3128 = vmatpush1.msra.mxu0 0.0
    %3129 = vmatprep.mubr.f32.mxu0 0.0
    %3130 = vmatmul.mubr.f32.gmra.mrb[0].mxu0 %v3063
    %v3131 = vpop.f32.mrb[0].mxu0
    %v3132 = vadd.f32 0.0, %v3131
    %v3133 = vpop.f32.mrb[0].mxu0
    %3134 = vdwg.mxu0
    %v3136 = vsel %vm2073, %v2767, 0
    %3138 = vmatprep.subr.mxu0 0.0
    %3139 = vmatpush1.msra.mxu0 %v1916
    %3140 = vmatprep.subr.mxu0 0.0
    %3141 = vmatpush1.msra.mxu0 0.0
    %3142 = vmatprep.subr.mxu0 0.0
    %3143 = vmatpush1.msra.mxu0 0.0
    %3144 = vmatprep.subr.mxu0 0.0
    %3145 = vmatpush1.msra.mxu0 0.0
    %3146 = vmatprep.subr.mxu0 0.0
    %3147 = vmatpush1.msra.mxu0 0.0
    %3148 = vmatprep.subr.mxu0 0.0
    %3149 = vmatpush1.msra.mxu0 0.0
    %3150 = vmatprep.subr.mxu0 0.0
    %3151 = vmatpush1.msra.mxu0 0.0
    %3152 = vmatprep.subr.mxu0 0.0
    %3153 = vmatpush1.msra.mxu0 0.0
    %3154 = vmatprep.subr.mxu0 0.0
    %3155 = vmatpush1.msra.mxu0 0.0
    %3156 = vmatprep.subr.mxu0 0.0
    %3157 = vmatpush1.msra.mxu0 0.0
    %3158 = vmatprep.subr.mxu0 0.0
    %3159 = vmatpush1.msra.mxu0 0.0
    %3160 = vmatprep.subr.mxu0 0.0
    %3161 = vmatpush1.msra.mxu0 0.0
    %3162 = vmatprep.subr.mxu0 0.0
    %3163 = vmatpush1.msra.mxu0 0.0
    %3164 = vmatprep.subr.mxu0 0.0
    %3165 = vmatpush1.msra.mxu0 0.0
    %3166 = vmatprep.subr.mxu0 0.0
    %3167 = vmatpush1.msra.mxu0 0.0
    %3168 = vmatprep.subr.mxu0 0.0
    %3169 = vmatpush1.msra.mxu0 0.0
    %3170 = vmatprep.subr.mxu0 0.0
    %3171 = vmatpush1.msra.mxu0 0.0
    %3172 = vmatprep.subr.mxu0 0.0
    %3173 = vmatpush1.msra.mxu0 0.0
    %3174 = vmatprep.subr.mxu0 0.0
    %3175 = vmatpush1.msra.mxu0 0.0
    %3176 = vmatprep.subr.mxu0 0.0
    %3177 = vmatpush1.msra.mxu0 0.0
    %3178 = vmatprep.subr.mxu0 0.0
    %3179 = vmatpush1.msra.mxu0 0.0
    %3180 = vmatprep.subr.mxu0 0.0
    %3181 = vmatpush1.msra.mxu0 0.0
    %3182 = vmatprep.subr.mxu0 0.0
    %3183 = vmatpush1.msra.mxu0 0.0
    %3184 = vmatprep.subr.mxu0 0.0
    %3185 = vmatpush1.msra.mxu0 0.0
    %3186 = vmatprep.subr.mxu0 0.0
    %3187 = vmatpush1.msra.mxu0 0.0
    %3188 = vmatprep.subr.mxu0 0.0
    %3189 = vmatpush1.msra.mxu0 0.0
    %3190 = vmatprep.subr.mxu0 0.0
    %3191 = vmatpush1.msra.mxu0 0.0
    %3192 = vmatprep.subr.mxu0 0.0
    %3193 = vmatpush1.msra.mxu0 0.0
    %3194 = vmatprep.subr.mxu0 0.0
    %3195 = vmatpush1.msra.mxu0 0.0
    %3196 = vmatprep.subr.mxu0 0.0
    %3197 = vmatpush1.msra.mxu0 0.0
    %3198 = vmatprep.subr.mxu0 0.0
    %3199 = vmatpush1.msra.mxu0 0.0
    %3200 = vmatprep.subr.mxu0 0.0
    %3201 = vmatpush1.msra.mxu0 0.0
    %3202 = vmatprep.mubr.f32.mxu0 0.0
    %3203 = vmatmul.mubr.f32.gmra.mrb[0].mxu0 %v3136
    %v3204 = vpop.f32.mrb[0].mxu0
    %v3205 = vadd.f32 0.0, %v3204
    %v3206 = vpop.f32.mrb[0].mxu0
    %3207 = vdwg.mxu0
    %v3209 = vsel %vm2073, %v2768, 0
    %3211 = vmatprep.subr.mxu0 0.0
    %3212 = vmatpush1.msra.mxu0 %v1989
    %3213 = vmatprep.subr.mxu0 0.0
    %3214 = vmatpush1.msra.mxu0 0.0
    %3215 = vmatprep.subr.mxu0 0.0
    %3216 = vmatpush1.msra.mxu0 0.0
    %3217 = vmatprep.subr.mxu0 0.0
    %3218 = vmatpush1.msra.mxu0 0.0
    %3219 = vmatprep.subr.mxu0 0.0
    %3220 = vmatpush1.msra.mxu0 0.0
    %3221 = vmatprep.subr.mxu0 0.0
    %3222 = vmatpush1.msra.mxu0 0.0
    %3223 = vmatprep.subr.mxu0 0.0
    %3224 = vmatpush1.msra.mxu0 0.0
    %3225 = vmatprep.subr.mxu0 0.0
    %3226 = vmatpush1.msra.mxu0 0.0
    %3227 = vmatprep.subr.mxu0 0.0
    %3228 = vmatpush1.msra.mxu0 0.0
    %3229 = vmatprep.subr.mxu0 0.0
    %3230 = vmatpush1.msra.mxu0 0.0
    %3231 = vmatprep.subr.mxu0 0.0
    %3232 = vmatpush1.msra.mxu0 0.0
    %3233 = vmatprep.subr.mxu0 0.0
    %3234 = vmatpush1.msra.mxu0 0.0
    %3235 = vmatprep.subr.mxu0 0.0
    %3236 = vmatpush1.msra.mxu0 0.0
    %3237 = vmatprep.subr.mxu0 0.0
    %3238 = vmatpush1.msra.mxu0 0.0
    %3239 = vmatprep.subr.mxu0 0.0
    %3240 = vmatpush1.msra.mxu0 0.0
    %3241 = vmatprep.subr.mxu0 0.0
    %3242 = vmatpush1.msra.mxu0 0.0
    %3243 = vmatprep.subr.mxu0 0.0
    %3244 = vmatpush1.msra.mxu0 0.0
    %3245 = vmatprep.subr.mxu0 0.0
    %3246 = vmatpush1.msra.mxu0 0.0
    %3247 = vmatprep.subr.mxu0 0.0
    %3248 = vmatpush1.msra.mxu0 0.0
    %3249 = vmatprep.subr.mxu0 0.0
    %3250 = vmatpush1.msra.mxu0 0.0
    %3251 = vmatprep.subr.mxu0 0.0
    %3252 = vmatpush1.msra.mxu0 0.0
    %3253 = vmatprep.subr.mxu0 0.0
    %3254 = vmatpush1.msra.mxu0 0.0
    %3255 = vmatprep.subr.mxu0 0.0
    %3256 = vmatpush1.msra.mxu0 0.0
    %3257 = vmatprep.subr.mxu0 0.0
    %3258 = vmatpush1.msra.mxu0 0.0
    %3259 = vmatprep.subr.mxu0 0.0
    %3260 = vmatpush1.msra.mxu0 0.0
    %3261 = vmatprep.subr.mxu0 0.0
    %3262 = vmatpush1.msra.mxu0 0.0
    %3263 = vmatprep.subr.mxu0 0.0
    %3264 = vmatpush1.msra.mxu0 0.0
    %3265 = vmatprep.subr.mxu0 0.0
    %3266 = vmatpush1.msra.mxu0 0.0
    %3267 = vmatprep.subr.mxu0 0.0
    %3268 = vmatpush1.msra.mxu0 0.0
    %3269 = vmatprep.subr.mxu0 0.0
    %3270 = vmatpush1.msra.mxu0 0.0
    %3271 = vmatprep.subr.mxu0 0.0
    %3272 = vmatpush1.msra.mxu0 0.0
    %3273 = vmatprep.subr.mxu0 0.0
    %3274 = vmatpush1.msra.mxu0 0.0
    %3275 = vmatprep.mubr.f32.mxu0 0.0
    %3276 = vmatmul.mubr.f32.gmra.mrb[0].mxu0 %v3209
    %v3277 = vpop.f32.mrb[0].mxu0
    %v3278 = vadd.f32 0.0, %v3277
    %v3279 = vpop.f32.mrb[0].mxu0
    %3280 = vdwg.mxu0
    %v3282 = vsel %vm2073, %v2769, 0
    %3284 = vmatprep.subr.mxu0 0.0
    %3285 = vmatpush1.msra.mxu0 %v2062
    %3286 = vmatprep.subr.mxu0 0.0
    %3287 = vmatpush1.msra.mxu0 0.0
    %3288 = vmatprep.subr.mxu0 0.0
    %3289 = vmatpush1.msra.mxu0 0.0
    %3290 = vmatprep.subr.mxu0 0.0
    %3291 = vmatpush1.msra.mxu0 0.0
    %3292 = vmatprep.subr.mxu0 0.0
    %3293 = vmatpush1.msra.mxu0 0.0
    %3294 = vmatprep.subr.mxu0 0.0
    %3295 = vmatpush1.msra.mxu0 0.0
    %3296 = vmatprep.subr.mxu0 0.0
    %3297 = vmatpush1.msra.mxu0 0.0
    %3298 = vmatprep.subr.mxu0 0.0
    %3299 = vmatpush1.msra.mxu0 0.0
    %3300 = vmatprep.subr.mxu0 0.0
    %3301 = vmatpush1.msra.mxu0 0.0
    %3302 = vmatprep.subr.mxu0 0.0
    %3303 = vmatpush1.msra.mxu0 0.0
    %3304 = vmatprep.subr.mxu0 0.0
    %3305 = vmatpush1.msra.mxu0 0.0
    %3306 = vmatprep.subr.mxu0 0.0
    %3307 = vmatpush1.msra.mxu0 0.0
    %3308 = vmatprep.subr.mxu0 0.0
    %3309 = vmatpush1.msra.mxu0 0.0
    %3310 = vmatprep.subr.mxu0 0.0
    %3311 = vmatpush1.msra.mxu0 0.0
    %3312 = vmatprep.subr.mxu0 0.0
    %3313 = vmatpush1.msra.mxu0 0.0
    %3314 = vmatprep.subr.mxu0 0.0
    %3315 = vmatpush1.msra.mxu0 0.0
    %3316 = vmatprep.subr.mxu0 0.0
    %3317 = vmatpush1.msra.mxu0 0.0
    %3318 = vmatprep.subr.mxu0 0.0
    %3319 = vmatpush1.msra.mxu0 0.0
    %3320 = vmatprep.subr.mxu0 0.0
    %3321 = vmatpush1.msra.mxu0 0.0
    %3322 = vmatprep.subr.mxu0 0.0
    %3323 = vmatpush1.msra.mxu0 0.0
    %3324 = vmatprep.subr.mxu0 0.0
    %3325 = vmatpush1.msra.mxu0 0.0
    %3326 = vmatprep.subr.mxu0 0.0
    %3327 = vmatpush1.msra.mxu0 0.0
    %3328 = vmatprep.subr.mxu0 0.0
    %3329 = vmatpush1.msra.mxu0 0.0
    %3330 = vmatprep.subr.mxu0 0.0
    %3331 = vmatpush1.msra.mxu0 0.0
    %3332 = vmatprep.subr.mxu0 0.0
    %3333 = vmatpush1.msra.mxu0 0.0
    %3334 = vmatprep.subr.mxu0 0.0
    %3335 = vmatpush1.msra.mxu0 0.0
    %3336 = vmatprep.subr.mxu0 0.0
    %3337 = vmatpush1.msra.mxu0 0.0
    %3338 = vmatprep.subr.mxu0 0.0
    %3339 = vmatpush1.msra.mxu0 0.0
    %3340 = vmatprep.subr.mxu0 0.0
    %3341 = vmatpush1.msra.mxu0 0.0
    %3342 = vmatprep.subr.mxu0 0.0
    %3343 = vmatpush1.msra.mxu0 0.0
    %3344 = vmatprep.subr.mxu0 0.0
    %3345 = vmatpush1.msra.mxu0 0.0
    %3346 = vmatprep.subr.mxu0 0.0
    %3347 = vmatpush1.msra.mxu0 0.0
    %3348 = vmatprep.mubr.f32.mxu0 0.0
    %3349 = vmatmul.mubr.f32.gmra.mrb[0].mxu0 %v3282
    %v3350 = vpop.f32.mrb[0].mxu0
    %v3351 = vadd.f32 0.0, %v3350
    %v3352 = vpop.f32.mrb[0].mxu0
    %3353 = vdwg.mxu0
    %v3354 = vld [vmem:[%s4] sm:$0xff]
    %v3355 = vld [vmem:[%s4 + $0x8] sm:$0xff]
    %v3356 = vld [vmem:[%s4 + $0x10] sm:$0xff]
    %v3357 = vld [vmem:[%s4 + $0x18] sm:$0xff]
    %v3358 = vld [vmem:[%s4 + $0x20] sm:$0xff]
    %v3359 = vld [vmem:[%s4 + $0x28] sm:$0xff]
    %v3360 = vld [vmem:[%s4 + $0x30] sm:$0xff]
    %v3361 = vld [vmem:[%s4 + $0x38] sm:$0xff]
    %v3363 = vsel %vm2073, %v2840, 0
    %3365 = vmatprep.subr.mxu0 0.0
    %3366 = vmatpush1.msra.mxu0 %v3354
    %3367 = vmatprep.subr.mxu0 0.0
    %3368 = vmatpush1.msra.mxu0 0.0
    %3369 = vmatprep.subr.mxu0 0.0
    %3370 = vmatpush1.msra.mxu0 0.0
    %3371 = vmatprep.subr.mxu0 0.0
    %3372 = vmatpush1.msra.mxu0 0.0
    %3373 = vmatprep.subr.mxu0 0.0
    %3374 = vmatpush1.msra.mxu0 0.0
    %3375 = vmatprep.subr.mxu0 0.0
    %3376 = vmatpush1.msra.mxu0 0.0
    %3377 = vmatprep.subr.mxu0 0.0
    %3378 = vmatpush1.msra.mxu0 0.0
    %3379 = vmatprep.subr.mxu0 0.0
    %3380 = vmatpush1.msra.mxu0 0.0
    %3381 = vmatprep.subr.mxu0 0.0
    %3382 = vmatpush1.msra.mxu0 0.0
    %3383 = vmatprep.subr.mxu0 0.0
    %3384 = vmatpush1.msra.mxu0 0.0
    %3385 = vmatprep.subr.mxu0 0.0
    %3386 = vmatpush1.msra.mxu0 0.0
    %3387 = vmatprep.subr.mxu0 0.0
    %3388 = vmatpush1.msra.mxu0 0.0
    %3389 = vmatprep.subr.mxu0 0.0
    %3390 = vmatpush1.msra.mxu0 0.0
    %3391 = vmatprep.subr.mxu0 0.0
    %3392 = vmatpush1.msra.mxu0 0.0
    %3393 = vmatprep.subr.mxu0 0.0
    %3394 = vmatpush1.msra.mxu0 0.0
    %3395 = vmatprep.subr.mxu0 0.0
    %3396 = vmatpush1.msra.mxu0 0.0
    %3397 = vmatprep.subr.mxu0 0.0
    %3398 = vmatpush1.msra.mxu0 0.0
    %3399 = vmatprep.subr.mxu0 0.0
    %3400 = vmatpush1.msra.mxu0 0.0
    %3401 = vmatprep.subr.mxu0 0.0
    %3402 = vmatpush1.msra.mxu0 0.0
    %3403 = vmatprep.subr.mxu0 0.0
    %3404 = vmatpush1.msra.mxu0 0.0
    %3405 = vmatprep.subr.mxu0 0.0
    %3406 = vmatpush1.msra.mxu0 0.0
    %3407 = vmatprep.subr.mxu0 0.0
    %3408 = vmatpush1.msra.mxu0 0.0
    %3409 = vmatprep.subr.mxu0 0.0
    %3410 = vmatpush1.msra.mxu0 0.0
    %3411 = vmatprep.subr.mxu0 0.0
    %3412 = vmatpush1.msra.mxu0 0.0
    %3413 = vmatprep.subr.mxu0 0.0
    %3414 = vmatpush1.msra.mxu0 0.0
    %3415 = vmatprep.subr.mxu0 0.0
    %3416 = vmatpush1.msra.mxu0 0.0
    %3417 = vmatprep.subr.mxu0 0.0
    %3418 = vmatpush1.msra.mxu0 0.0
    %3419 = vmatprep.subr.mxu0 0.0
    %3420 = vmatpush1.msra.mxu0 0.0
    %3421 = vmatprep.subr.mxu0 0.0
    %3422 = vmatpush1.msra.mxu0 0.0
    %3423 = vmatprep.subr.mxu0 0.0
    %3424 = vmatpush1.msra.mxu0 0.0
    %3425 = vmatprep.subr.mxu0 0.0
    %3426 = vmatpush1.msra.mxu0 0.0
    %3427 = vmatprep.subr.mxu0 0.0
    %3428 = vmatpush1.msra.mxu0 0.0
    %3429 = vmatprep.mubr.f32.mxu0 0.0
    %3430 = vmatmul.mubr.f32.gmra.mrb[0].mxu0 %v3363
    %v3431 = vpop.f32.mrb[0].mxu0
    %v3432 = vadd.f32 0.0, %v3431
    %v3433 = vpop.f32.mrb[0].mxu0
    %3434 = vdwg.mxu0
    %v3436 = vsel %vm2073, %v2913, 0
    %3438 = vmatprep.subr.mxu0 0.0
    %3439 = vmatpush1.msra.mxu0 %v3355
    %3440 = vmatprep.subr.mxu0 0.0
    %3441 = vmatpush1.msra.mxu0 0.0
    %3442 = vmatprep.subr.mxu0 0.0
    %3443 = vmatpush1.msra.mxu0 0.0
    %3444 = vmatprep.subr.mxu0 0.0
    %3445 = vmatpush1.msra.mxu0 0.0
    %3446 = vmatprep.subr.mxu0 0.0
    %3447 = vmatpush1.msra.mxu0 0.0
    %3448 = vmatprep.subr.mxu0 0.0
    %3449 = vmatpush1.msra.mxu0 0.0
    %3450 = vmatprep.subr.mxu0 0.0
    %3451 = vmatpush1.msra.mxu0 0.0
    %3452 = vmatprep.subr.mxu0 0.0
    %3453 = vmatpush1.msra.mxu0 0.0
    %3454 = vmatprep.subr.mxu0 0.0
    %3455 = vmatpush1.msra.mxu0 0.0
    %3456 = vmatprep.subr.mxu0 0.0
    %3457 = vmatpush1.msra.mxu0 0.0
    %3458 = vmatprep.subr.mxu0 0.0
    %3459 = vmatpush1.msra.mxu0 0.0
    %3460 = vmatprep.subr.mxu0 0.0
    %3461 = vmatpush1.msra.mxu0 0.0
    %3462 = vmatprep.subr.mxu0 0.0
    %3463 = vmatpush1.msra.mxu0 0.0
    %3464 = vmatprep.subr.mxu0 0.0
    %3465 = vmatpush1.msra.mxu0 0.0
    %3466 = vmatprep.subr.mxu0 0.0
    %3467 = vmatpush1.msra.mxu0 0.0
    %3468 = vmatprep.subr.mxu0 0.0
    %3469 = vmatpush1.msra.mxu0 0.0
    %3470 = vmatprep.subr.mxu0 0.0
    %3471 = vmatpush1.msra.mxu0 0.0
    %3472 = vmatprep.subr.mxu0 0.0
    %3473 = vmatpush1.msra.mxu0 0.0
    %3474 = vmatprep.subr.mxu0 0.0
    %3475 = vmatpush1.msra.mxu0 0.0
    %3476 = vmatprep.subr.mxu0 0.0
    %3477 = vmatpush1.msra.mxu0 0.0
    %3478 = vmatprep.subr.mxu0 0.0
    %3479 = vmatpush1.msra.mxu0 0.0
    %3480 = vmatprep.subr.mxu0 0.0
    %3481 = vmatpush1.msra.mxu0 0.0
    %3482 = vmatprep.subr.mxu0 0.0
    %3483 = vmatpush1.msra.mxu0 0.0
    %3484 = vmatprep.subr.mxu0 0.0
    %3485 = vmatpush1.msra.mxu0 0.0
    %3486 = vmatprep.subr.mxu0 0.0
    %3487 = vmatpush1.msra.mxu0 0.0
    %3488 = vmatprep.subr.mxu0 0.0
    %3489 = vmatpush1.msra.mxu0 0.0
    %3490 = vmatprep.subr.mxu0 0.0
    %3491 = vmatpush1.msra.mxu0 0.0
    %3492 = vmatprep.subr.mxu0 0.0
    %3493 = vmatpush1.msra.mxu0 0.0
    %3494 = vmatprep.subr.mxu0 0.0
    %3495 = vmatpush1.msra.mxu0 0.0
    %3496 = vmatprep.subr.mxu0 0.0
    %3497 = vmatpush1.msra.mxu0 0.0
    %3498 = vmatprep.subr.mxu0 0.0
    %3499 = vmatpush1.msra.mxu0 0.0
    %3500 = vmatprep.subr.mxu0 0.0
    %3501 = vmatpush1.msra.mxu0 0.0
    %3502 = vmatprep.mubr.f32.mxu0 0.0
    %3503 = vmatmul.mubr.f32.gmra.mrb[0].mxu0 %v3436
    %v3504 = vpop.f32.mrb[0].mxu0
    %v3505 = vadd.f32 0.0, %v3504
    %v3506 = vpop.f32.mrb[0].mxu0
    %3507 = vdwg.mxu0
    %v3509 = vsel %vm2073, %v2986, 0
    %3511 = vmatprep.subr.mxu0 0.0
    %3512 = vmatpush1.msra.mxu0 %v3356
    %3513 = vmatprep.subr.mxu0 0.0
    %3514 = vmatpush1.msra.mxu0 0.0
    %3515 = vmatprep.subr.mxu0 0.0
    %3516 = vmatpush1.msra.mxu0 0.0
    %3517 = vmatprep.subr.mxu0 0.0
    %3518 = vmatpush1.msra.mxu0 0.0
    %3519 = vmatprep.subr.mxu0 0.0
    %3520 = vmatpush1.msra.mxu0 0.0
    %3521 = vmatprep.subr.mxu0 0.0
    %3522 = vmatpush1.msra.mxu0 0.0
    %3523 = vmatprep.subr.mxu0 0.0
    %3524 = vmatpush1.msra.mxu0 0.0
    %3525 = vmatprep.subr.mxu0 0.0
    %3526 = vmatpush1.msra.mxu0 0.0
    %3527 = vmatprep.subr.mxu0 0.0
    %3528 = vmatpush1.msra.mxu0 0.0
    %3529 = vmatprep.subr.mxu0 0.0
    %3530 = vmatpush1.msra.mxu0 0.0
    %3531 = vmatprep.subr.mxu0 0.0
    %3532 = vmatpush1.msra.mxu0 0.0
    %3533 = vmatprep.subr.mxu0 0.0
    %3534 = vmatpush1.msra.mxu0 0.0
    %3535 = vmatprep.subr.mxu0 0.0
    %3536 = vmatpush1.msra.mxu0 0.0
    %3537 = vmatprep.subr.mxu0 0.0
    %3538 = vmatpush1.msra.mxu0 0.0
    %3539 = vmatprep.subr.mxu0 0.0
    %3540 = vmatpush1.msra.mxu0 0.0
    %3541 = vmatprep.subr.mxu0 0.0
    %3542 = vmatpush1.msra.mxu0 0.0
    %3543 = vmatprep.subr.mxu0 0.0
    %3544 = vmatpush1.msra.mxu0 0.0
    %3545 = vmatprep.subr.mxu0 0.0
    %3546 = vmatpush1.msra.mxu0 0.0
    %3547 = vmatprep.subr.mxu0 0.0
    %3548 = vmatpush1.msra.mxu0 0.0
    %3549 = vmatprep.subr.mxu0 0.0
    %3550 = vmatpush1.msra.mxu0 0.0
    %3551 = vmatprep.subr.mxu0 0.0
    %3552 = vmatpush1.msra.mxu0 0.0
    %3553 = vmatprep.subr.mxu0 0.0
    %3554 = vmatpush1.msra.mxu0 0.0
    %3555 = vmatprep.subr.mxu0 0.0
    %3556 = vmatpush1.msra.mxu0 0.0
    %3557 = vmatprep.subr.mxu0 0.0
    %3558 = vmatpush1.msra.mxu0 0.0
    %3559 = vmatprep.subr.mxu0 0.0
    %3560 = vmatpush1.msra.mxu0 0.0
    %3561 = vmatprep.subr.mxu0 0.0
    %3562 = vmatpush1.msra.mxu0 0.0
    %3563 = vmatprep.subr.mxu0 0.0
    %3564 = vmatpush1.msra.mxu0 0.0
    %3565 = vmatprep.subr.mxu0 0.0
    %3566 = vmatpush1.msra.mxu0 0.0
    %3567 = vmatprep.subr.mxu0 0.0
    %3568 = vmatpush1.msra.mxu0 0.0
    %3569 = vmatprep.subr.mxu0 0.0
    %3570 = vmatpush1.msra.mxu0 0.0
    %3571 = vmatprep.subr.mxu0 0.0
    %3572 = vmatpush1.msra.mxu0 0.0
    %3573 = vmatprep.subr.mxu0 0.0
    %3574 = vmatpush1.msra.mxu0 0.0
    %3575 = vmatprep.mubr.f32.mxu0 0.0
    %3576 = vmatmul.mubr.f32.gmra.mrb[0].mxu0 %v3509
    %v3577 = vpop.f32.mrb[0].mxu0
    %v3578 = vadd.f32 0.0, %v3577
    %v3579 = vpop.f32.mrb[0].mxu0
    %3580 = vdwg.mxu0
    %v3582 = vsel %vm2073, %v3059, 0
    %3584 = vmatprep.subr.mxu0 0.0
    %3585 = vmatpush1.msra.mxu0 %v3357
    %3586 = vmatprep.subr.mxu0 0.0
    %3587 = vmatpush1.msra.mxu0 0.0
    %3588 = vmatprep.subr.mxu0 0.0
    %3589 = vmatpush1.msra.mxu0 0.0
    %3590 = vmatprep.subr.mxu0 0.0
    %3591 = vmatpush1.msra.mxu0 0.0
    %3592 = vmatprep.subr.mxu0 0.0
    %3593 = vmatpush1.msra.mxu0 0.0
    %3594 = vmatprep.subr.mxu0 0.0
    %3595 = vmatpush1.msra.mxu0 0.0
    %3596 = vmatprep.subr.mxu0 0.0
    %3597 = vmatpush1.msra.mxu0 0.0
    %3598 = vmatprep.subr.mxu0 0.0
    %3599 = vmatpush1.msra.mxu0 0.0
    %3600 = vmatprep.subr.mxu0 0.0
    %3601 = vmatpush1.msra.mxu0 0.0
    %3602 = vmatprep.subr.mxu0 0.0
    %3603 = vmatpush1.msra.mxu0 0.0
    %3604 = vmatprep.subr.mxu0 0.0
    %3605 = vmatpush1.msra.mxu0 0.0
    %3606 = vmatprep.subr.mxu0 0.0
    %3607 = vmatpush1.msra.mxu0 0.0
    %3608 = vmatprep.subr.mxu0 0.0
    %3609 = vmatpush1.msra.mxu0 0.0
    %3610 = vmatprep.subr.mxu0 0.0
    %3611 = vmatpush1.msra.mxu0 0.0
    %3612 = vmatprep.subr.mxu0 0.0
    %3613 = vmatpush1.msra.mxu0 0.0
    %3614 = vmatprep.subr.mxu0 0.0
    %3615 = vmatpush1.msra.mxu0 0.0
    %3616 = vmatprep.subr.mxu0 0.0
    %3617 = vmatpush1.msra.mxu0 0.0
    %3618 = vmatprep.subr.mxu0 0.0
    %3619 = vmatpush1.msra.mxu0 0.0
    %3620 = vmatprep.subr.mxu0 0.0
    %3621 = vmatpush1.msra.mxu0 0.0
    %3622 = vmatprep.subr.mxu0 0.0
    %3623 = vmatpush1.msra.mxu0 0.0
    %3624 = vmatprep.subr.mxu0 0.0
    %3625 = vmatpush1.msra.mxu0 0.0
    %3626 = vmatprep.subr.mxu0 0.0
    %3627 = vmatpush1.msra.mxu0 0.0
    %3628 = vmatprep.subr.mxu0 0.0
    %3629 = vmatpush1.msra.mxu0 0.0
    %3630 = vmatprep.subr.mxu0 0.0
    %3631 = vmatpush1.msra.mxu0 0.0
    %3632 = vmatprep.subr.mxu0 0.0
    %3633 = vmatpush1.msra.mxu0 0.0
    %3634 = vmatprep.subr.mxu0 0.0
    %3635 = vmatpush1.msra.mxu0 0.0
    %3636 = vmatprep.subr.mxu0 0.0
    %3637 = vmatpush1.msra.mxu0 0.0
    %3638 = vmatprep.subr.mxu0 0.0
    %3639 = vmatpush1.msra.mxu0 0.0
    %3640 = vmatprep.subr.mxu0 0.0
    %3641 = vmatpush1.msra.mxu0 0.0
    %3642 = vmatprep.subr.mxu0 0.0
    %3643 = vmatpush1.msra.mxu0 0.0
    %3644 = vmatprep.subr.mxu0 0.0
    %3645 = vmatpush1.msra.mxu0 0.0
    %3646 = vmatprep.subr.mxu0 0.0
    %3647 = vmatpush1.msra.mxu0 0.0
    %3648 = vmatprep.mubr.f32.mxu0 0.0
    %3649 = vmatmul.mubr.f32.gmra.mrb[0].mxu0 %v3582
    %v3650 = vpop.f32.mrb[0].mxu0
    %v3651 = vadd.f32 0.0, %v3650
    %v3652 = vpop.f32.mrb[0].mxu0
    %3653 = vdwg.mxu0
    %v3655 = vsel %vm2073, %v3132, 0
    %3657 = vmatprep.subr.mxu0 0.0
    %3658 = vmatpush1.msra.mxu0 %v3358
    %3659 = vmatprep.subr.mxu0 0.0
    %3660 = vmatpush1.msra.mxu0 0.0
    %3661 = vmatprep.subr.mxu0 0.0
    %3662 = vmatpush1.msra.mxu0 0.0
    %3663 = vmatprep.subr.mxu0 0.0
    %3664 = vmatpush1.msra.mxu0 0.0
    %3665 = vmatprep.subr.mxu0 0.0
    %3666 = vmatpush1.msra.mxu0 0.0
    %3667 = vmatprep.subr.mxu0 0.0
    %3668 = vmatpush1.msra.mxu0 0.0
    %3669 = vmatprep.subr.mxu0 0.0
    %3670 = vmatpush1.msra.mxu0 0.0
    %3671 = vmatprep.subr.mxu0 0.0
    %3672 = vmatpush1.msra.mxu0 0.0
    %3673 = vmatprep.subr.mxu0 0.0
    %3674 = vmatpush1.msra.mxu0 0.0
    %3675 = vmatprep.subr.mxu0 0.0
    %3676 = vmatpush1.msra.mxu0 0.0
    %3677 = vmatprep.subr.mxu0 0.0
    %3678 = vmatpush1.msra.mxu0 0.0
    %3679 = vmatprep.subr.mxu0 0.0
    %3680 = vmatpush1.msra.mxu0 0.0
    %3681 = vmatprep.subr.mxu0 0.0
    %3682 = vmatpush1.msra.mxu0 0.0
    %3683 = vmatprep.subr.mxu0 0.0
    %3684 = vmatpush1.msra.mxu0 0.0
    %3685 = vmatprep.subr.mxu0 0.0
    %3686 = vmatpush1.msra.mxu0 0.0
    %3687 = vmatprep.subr.mxu0 0.0
    %3688 = vmatpush1.msra.mxu0 0.0
    %3689 = vmatprep.subr.mxu0 0.0
    %3690 = vmatpush1.msra.mxu0 0.0
    %3691 = vmatprep.subr.mxu0 0.0
    %3692 = vmatpush1.msra.mxu0 0.0
    %3693 = vmatprep.subr.mxu0 0.0
    %3694 = vmatpush1.msra.mxu0 0.0
    %3695 = vmatprep.subr.mxu0 0.0
    %3696 = vmatpush1.msra.mxu0 0.0
    %3697 = vmatprep.subr.mxu0 0.0
    %3698 = vmatpush1.msra.mxu0 0.0
    %3699 = vmatprep.subr.mxu0 0.0
    %3700 = vmatpush1.msra.mxu0 0.0
    %3701 = vmatprep.subr.mxu0 0.0
    %3702 = vmatpush1.msra.mxu0 0.0
    %3703 = vmatprep.subr.mxu0 0.0
    %3704 = vmatpush1.msra.mxu0 0.0
    %3705 = vmatprep.subr.mxu0 0.0
    %3706 = vmatpush1.msra.mxu0 0.0
    %3707 = vmatprep.subr.mxu0 0.0
    %3708 = vmatpush1.msra.mxu0 0.0
    %3709 = vmatprep.subr.mxu0 0.0
    %3710 = vmatpush1.msra.mxu0 0.0
    %3711 = vmatprep.subr.mxu0 0.0
    %3712 = vmatpush1.msra.mxu0 0.0
    %3713 = vmatprep.subr.mxu0 0.0
    %3714 = vmatpush1.msra.mxu0 0.0
    %3715 = vmatprep.subr.mxu0 0.0
    %3716 = vmatpush1.msra.mxu0 0.0
    %3717 = vmatprep.subr.mxu0 0.0
    %3718 = vmatpush1.msra.mxu0 0.0
    %3719 = vmatprep.subr.mxu0 0.0
    %3720 = vmatpush1.msra.mxu0 0.0
    %3721 = vmatprep.mubr.f32.mxu0 0.0
    %3722 = vmatmul.mubr.f32.gmra.mrb[0].mxu0 %v3655
    %v3723 = vpop.f32.mrb[0].mxu0
    %v3724 = vadd.f32 0.0, %v3723
    %v3725 = vpop.f32.mrb[0].mxu0
    %3726 = vdwg.mxu0
    %v3728 = vsel %vm2073, %v3205, 0
    %3730 = vmatprep.subr.mxu0 0.0
    %3731 = vmatpush1.msra.mxu0 %v3359
    %3732 = vmatprep.subr.mxu0 0.0
    %3733 = vmatpush1.msra.mxu0 0.0
    %3734 = vmatprep.subr.mxu0 0.0
    %3735 = vmatpush1.msra.mxu0 0.0
    %3736 = vmatprep.subr.mxu0 0.0
    %3737 = vmatpush1.msra.mxu0 0.0
    %3738 = vmatprep.subr.mxu0 0.0
    %3739 = vmatpush1.msra.mxu0 0.0
    %3740 = vmatprep.subr.mxu0 0.0
    %3741 = vmatpush1.msra.mxu0 0.0
    %3742 = vmatprep.subr.mxu0 0.0
    %3743 = vmatpush1.msra.mxu0 0.0
    %3744 = vmatprep.subr.mxu0 0.0
    %3745 = vmatpush1.msra.mxu0 0.0
    %3746 = vmatprep.subr.mxu0 0.0
    %3747 = vmatpush1.msra.mxu0 0.0
    %3748 = vmatprep.subr.mxu0 0.0
    %3749 = vmatpush1.msra.mxu0 0.0
    %3750 = vmatprep.subr.mxu0 0.0
    %3751 = vmatpush1.msra.mxu0 0.0
    %3752 = vmatprep.subr.mxu0 0.0
    %3753 = vmatpush1.msra.mxu0 0.0
    %3754 = vmatprep.subr.mxu0 0.0
    %3755 = vmatpush1.msra.mxu0 0.0
    %3756 = vmatprep.subr.mxu0 0.0
    %3757 = vmatpush1.msra.mxu0 0.0
    %3758 = vmatprep.subr.mxu0 0.0
    %3759 = vmatpush1.msra.mxu0 0.0
    %3760 = vmatprep.subr.mxu0 0.0
    %3761 = vmatpush1.msra.mxu0 0.0
    %3762 = vmatprep.subr.mxu0 0.0
    %3763 = vmatpush1.msra.mxu0 0.0
    %3764 = vmatprep.subr.mxu0 0.0
    %3765 = vmatpush1.msra.mxu0 0.0
    %3766 = vmatprep.subr.mxu0 0.0
    %3767 = vmatpush1.msra.mxu0 0.0
    %3768 = vmatprep.subr.mxu0 0.0
    %3769 = vmatpush1.msra.mxu0 0.0
    %3770 = vmatprep.subr.mxu0 0.0
    %3771 = vmatpush1.msra.mxu0 0.0
    %3772 = vmatprep.subr.mxu0 0.0
    %3773 = vmatpush1.msra.mxu0 0.0
    %3774 = vmatprep.subr.mxu0 0.0
    %3775 = vmatpush1.msra.mxu0 0.0
    %3776 = vmatprep.subr.mxu0 0.0
    %3777 = vmatpush1.msra.mxu0 0.0
    %3778 = vmatprep.subr.mxu0 0.0
    %3779 = vmatpush1.msra.mxu0 0.0
    %3780 = vmatprep.subr.mxu0 0.0
    %3781 = vmatpush1.msra.mxu0 0.0
    %3782 = vmatprep.subr.mxu0 0.0
    %3783 = vmatpush1.msra.mxu0 0.0
    %3784 = vmatprep.subr.mxu0 0.0
    %3785 = vmatpush1.msra.mxu0 0.0
    %3786 = vmatprep.subr.mxu0 0.0
    %3787 = vmatpush1.msra.mxu0 0.0
    %3788 = vmatprep.subr.mxu0 0.0
    %3789 = vmatpush1.msra.mxu0 0.0
    %3790 = vmatprep.subr.mxu0 0.0
    %3791 = vmatpush1.msra.mxu0 0.0
    %3792 = vmatprep.subr.mxu0 0.0
    %3793 = vmatpush1.msra.mxu0 0.0
    %3794 = vmatprep.mubr.f32.mxu0 0.0
    %3795 = vmatmul.mubr.f32.gmra.mrb[0].mxu0 %v3728
    %v3796 = vpop.f32.mrb[0].mxu0
    %v3797 = vadd.f32 0.0, %v3796
    %v3798 = vpop.f32.mrb[0].mxu0
    %3799 = vdwg.mxu0
    %v3801 = vsel %vm2073, %v3278, 0
    %3803 = vmatprep.subr.mxu0 0.0
    %3804 = vmatpush1.msra.mxu0 %v3360
    %3805 = vmatprep.subr.mxu0 0.0
    %3806 = vmatpush1.msra.mxu0 0.0
    %3807 = vmatprep.subr.mxu0 0.0
    %3808 = vmatpush1.msra.mxu0 0.0
    %3809 = vmatprep.subr.mxu0 0.0
    %3810 = vmatpush1.msra.mxu0 0.0
    %3811 = vmatprep.subr.mxu0 0.0
    %3812 = vmatpush1.msra.mxu0 0.0
    %3813 = vmatprep.subr.mxu0 0.0
    %3814 = vmatpush1.msra.mxu0 0.0
    %3815 = vmatprep.subr.mxu0 0.0
    %3816 = vmatpush1.msra.mxu0 0.0
    %3817 = vmatprep.subr.mxu0 0.0
    %3818 = vmatpush1.msra.mxu0 0.0
    %3819 = vmatprep.subr.mxu0 0.0
    %3820 = vmatpush1.msra.mxu0 0.0
    %3821 = vmatprep.subr.mxu0 0.0
    %3822 = vmatpush1.msra.mxu0 0.0
    %3823 = vmatprep.subr.mxu0 0.0
    %3824 = vmatpush1.msra.mxu0 0.0
    %3825 = vmatprep.subr.mxu0 0.0
    %3826 = vmatpush1.msra.mxu0 0.0
    %3827 = vmatprep.subr.mxu0 0.0
    %3828 = vmatpush1.msra.mxu0 0.0
    %3829 = vmatprep.subr.mxu0 0.0
    %3830 = vmatpush1.msra.mxu0 0.0
    %3831 = vmatprep.subr.mxu0 0.0
    %3832 = vmatpush1.msra.mxu0 0.0
    %3833 = vmatprep.subr.mxu0 0.0
    %3834 = vmatpush1.msra.mxu0 0.0
    %3835 = vmatprep.subr.mxu0 0.0
    %3836 = vmatpush1.msra.mxu0 0.0
    %3837 = vmatprep.subr.mxu0 0.0
    %3838 = vmatpush1.msra.mxu0 0.0
    %3839 = vmatprep.subr.mxu0 0.0
    %3840 = vmatpush1.msra.mxu0 0.0
    %3841 = vmatprep.subr.mxu0 0.0
    %3842 = vmatpush1.msra.mxu0 0.0
    %3843 = vmatprep.subr.mxu0 0.0
    %3844 = vmatpush1.msra.mxu0 0.0
    %3845 = vmatprep.subr.mxu0 0.0
    %3846 = vmatpush1.msra.mxu0 0.0
    %3847 = vmatprep.subr.mxu0 0.0
    %3848 = vmatpush1.msra.mxu0 0.0
    %3849 = vmatprep.subr.mxu0 0.0
    %3850 = vmatpush1.msra.mxu0 0.0
    %3851 = vmatprep.subr.mxu0 0.0
    %3852 = vmatpush1.msra.mxu0 0.0
    %3853 = vmatprep.subr.mxu0 0.0
    %3854 = vmatpush1.msra.mxu0 0.0
    %3855 = vmatprep.subr.mxu0 0.0
    %3856 = vmatpush1.msra.mxu0 0.0
    %3857 = vmatprep.subr.mxu0 0.0
    %3858 = vmatpush1.msra.mxu0 0.0
    %3859 = vmatprep.subr.mxu0 0.0
    %3860 = vmatpush1.msra.mxu0 0.0
    %3861 = vmatprep.subr.mxu0 0.0
    %3862 = vmatpush1.msra.mxu0 0.0
    %3863 = vmatprep.subr.mxu0 0.0
    %3864 = vmatpush1.msra.mxu0 0.0
    %3865 = vmatprep.subr.mxu0 0.0
    %3866 = vmatpush1.msra.mxu0 0.0
    %3867 = vmatprep.mubr.f32.mxu0 0.0
    %3868 = vmatmul.mubr.f32.gmra.mrb[0].mxu0 %v3801
    %v3869 = vpop.f32.mrb[0].mxu0
    %v3870 = vadd.f32 0.0, %v3869
    %v3871 = vpop.f32.mrb[0].mxu0
    %3872 = vdwg.mxu0
    %v3874 = vsel %vm2073, %v3351, 0
    %3876 = vmatprep.subr.mxu0 0.0
    %3877 = vmatpush1.msra.mxu0 %v3361
    %3878 = vmatprep.subr.mxu0 0.0
    %3879 = vmatpush1.msra.mxu0 0.0
    %3880 = vmatprep.subr.mxu0 0.0
    %3881 = vmatpush1.msra.mxu0 0.0
    %3882 = vmatprep.subr.mxu0 0.0
    %3883 = vmatpush1.msra.mxu0 0.0
    %3884 = vmatprep.subr.mxu0 0.0
    %3885 = vmatpush1.msra.mxu0 0.0
    %3886 = vmatprep.subr.mxu0 0.0
    %3887 = vmatpush1.msra.mxu0 0.0
    %3888 = vmatprep.subr.mxu0 0.0
    %3889 = vmatpush1.msra.mxu0 0.0
    %3890 = vmatprep.subr.mxu0 0.0
    %3891 = vmatpush1.msra.mxu0 0.0
    %3892 = vmatprep.subr.mxu0 0.0
    %3893 = vmatpush1.msra.mxu0 0.0
    %3894 = vmatprep.subr.mxu0 0.0
    %3895 = vmatpush1.msra.mxu0 0.0
    %3896 = vmatprep.subr.mxu0 0.0
    %3897 = vmatpush1.msra.mxu0 0.0
    %3898 = vmatprep.subr.mxu0 0.0
    %3899 = vmatpush1.msra.mxu0 0.0
    %3900 = vmatprep.subr.mxu0 0.0
    %3901 = vmatpush1.msra.mxu0 0.0
    %3902 = vmatprep.subr.mxu0 0.0
    %3903 = vmatpush1.msra.mxu0 0.0
    %3904 = vmatprep.subr.mxu0 0.0
    %3905 = vmatpush1.msra.mxu0 0.0
    %3906 = vmatprep.subr.mxu0 0.0
    %3907 = vmatpush1.msra.mxu0 0.0
    %3908 = vmatprep.subr.mxu0 0.0
    %3909 = vmatpush1.msra.mxu0 0.0
    %3910 = vmatprep.subr.mxu0 0.0
    %3911 = vmatpush1.msra.mxu0 0.0
    %3912 = vmatprep.subr.mxu0 0.0
    %3913 = vmatpush1.msra.mxu0 0.0
    %3914 = vmatprep.subr.mxu0 0.0
    %3915 = vmatpush1.msra.mxu0 0.0
    %3916 = vmatprep.subr.mxu0 0.0
    %3917 = vmatpush1.msra.mxu0 0.0
    %3918 = vmatprep.subr.mxu0 0.0
    %3919 = vmatpush1.msra.mxu0 0.0
    %3920 = vmatprep.subr.mxu0 0.0
    %3921 = vmatpush1.msra.mxu0 0.0
    %3922 = vmatprep.subr.mxu0 0.0
    %3923 = vmatpush1.msra.mxu0 0.0
    %3924 = vmatprep.subr.mxu0 0.0
    %3925 = vmatpush1.msra.mxu0 0.0
    %3926 = vmatprep.subr.mxu0 0.0
    %3927 = vmatpush1.msra.mxu0 0.0
    %3928 = vmatprep.subr.mxu0 0.0
    %3929 = vmatpush1.msra.mxu0 0.0
    %3930 = vmatprep.subr.mxu0 0.0
    %3931 = vmatpush1.msra.mxu0 0.0
    %3932 = vmatprep.subr.mxu0 0.0
    %3933 = vmatpush1.msra.mxu0 0.0
    %3934 = vmatprep.subr.mxu0 0.0
    %3935 = vmatpush1.msra.mxu0 0.0
    %3936 = vmatprep.subr.mxu0 0.0
    %3937 = vmatpush1.msra.mxu0 0.0
    %3938 = vmatprep.subr.mxu0 0.0
    %3939 = vmatpush1.msra.mxu0 0.0
    %3940 = vmatprep.mubr.f32.mxu0 0.0
    %3941 = vmatmul.mubr.f32.gmra.mrb[0].mxu0 %v3874
    %v3942 = vpop.f32.mrb[0].mxu0
    %v3943 = vadd.f32 0.0, %v3942
    %v3944 = vpop.f32.mrb[0].mxu0
    %3945 = vdwg.mxu0
    %v3946 = vadd.f32 %v3432, %v3578
    %v3947 = vadd.f32 %v3505, %v3651
    %v3948 = vadd.f32 %v3946, %v3724
    %v3949 = vadd.f32 %v3947, %v3797
    %v3950 = vadd.f32 %v3948, %v3870
    %v3951 = vadd.f32 %v3949, %v3943
    %v3952 = vld [vmem:[%s5] sm:$0x1]
    %v3954 = vlaneseq
    %v3955 = vshrl.u32 %v3954, 7
    %v3956 = vsub.s32 0, %v3955
    %v3957 = vrot.slane %v3952, %v3956
    %v3959 = vadd.f32 %v3950, %v3957
    %v3960 = vadd.f32 %v3951, %v3957
    %3961 = vst.msk [vmem:[#allocation2] sm:$0xff] %vm312, %v3959
    %3962 = vst.msk [vmem:[#allocation2 + $0x8] sm:$0xff] %vm312, %v3960
    // Predicated region
    $region26: #{multi_headed_attention.1} parent=1 // pred_check
      _
    $region27: #{multi_headed_attention.1} parent=1 // pred_check_branch
      %3964 = sbr.rel (0) target = $region29
    $region28: #{multi_headed_attention.1} parent=1 // pred_region
      %s3966 = ssub.s32 256, 256
      %3967 = vsyncadd [#allocation3], %s3966
      %s3968 = sshll.u32 [#allocation2], 4
      %s3969 = int_to_ptr.vmem [resolvable:$true] %s3968
      %3974 = dma.vmem_to_hbm [thread:$0]  %s3969, 256, %s6, [#allocation3], 128, 128, 8
    $region29: #{multi_headed_attention.1} parent=1 // pred_fallthru
      _
    // Predicated region
    $region30: #{multi_headed_attention.1} parent=1 // pred_check
      _
    $region31: #{multi_headed_attention.1} parent=1 // pred_check_branch
      %3976 = sbr.rel (0) target = $region33
    $region32: #{multi_headed_attention.1} parent=1 // pred_region
      %3977 = dma.done [#allocation3], 256
    $region33: #{multi_headed_attention.1} parent=1 // pred_fallthru
      _
    %3978 = vsyncpa [#allocation3], 1

</llo_original>
